<compile_context>
chip_gen: v5e
topology: v5e:2x2
jax: 0.10.0
libtpu: 0.0.40
codegen_flags: <defaults>
</compile_context>

<pallas_src>
import functools

import jax
import jax.numpy as jnp
from jax.experimental import pallas as pl
from jax.experimental.pallas import tpu as pltpu


HID = 16          # em_node_mlp[-1] == em_edge_mlp[-1] == node_mlp[i] == edge_mlp[i]
NUM_FINE = 3      # number of GNBlock message-passing rounds
ENC_OUT = 32      # encoder_out_dim


def _vae_encoder_kernel(xT_ref, eT_ref, rowsR_ref, colsR_ref, colsC_ref, nvalid_ref,
                        w_em_ref, w_gn_ref, b_ref, woutT_ref, bout_ref,
                        out_ref, *, nmax, mxu_dtype):
    f32 = jnp.float32
    dn, gbN = xT_ref.shape          # node features are feature-major: [Dn, gb*NMAX]
    de, gbE = eT_ref.shape          # edge features: [De, gb*EMAX]
    H = b_ref.shape[0]
    gb, out2 = out_ref.shape        # gb graphs per tile, out2 = 2*encoder_out_dim
    num_fine = woutT_ref.shape[1] // H

    def mm(a, b):
        # MXU matmul, f32 accumulation; operands optionally narrowed to bf16 (v6e/v7x).
        return jnp.dot(a.astype(mxu_dtype), b.astype(mxu_dtype),
                       preferred_element_type=f32)

    def relu(t):
        return jnp.maximum(t, 0.0)

    # ---- Parameters: few consolidated, lane-dense slabs; constant index -> one DMA ----
    w_em = w_em_ref[...]                      # [H, Dn+De]   (embed node | embed edge)
    wg = w_gn_ref[...]                        # [H, 9H]      (we1 | we2 | we3 | wn1 | wn2 | wn3)
    bsl = b_ref[...]                          # [H, 8]
    woutT = woutT_ref[...]                    # [2*out, 3H]  fused (mu || logvar) readout
    bout = bout_ref[...]                      # [1, 2*out]

    wn_em, we_em = w_em[:, :dn], w_em[:, dn:dn + de]
    we1a, we1b, we1c = wg[:, 0:H], wg[:, H:2 * H], wg[:, 2 * H:3 * H]
    we2, we3 = wg[:, 3 * H:4 * H], wg[:, 4 * H:5 * H]
    wn1a, wn1b = wg[:, 5 * H:6 * H], wg[:, 6 * H:7 * H]
    wn2, wn3 = wg[:, 7 * H:8 * H], wg[:, 8 * H:9 * H]
    bn_em, be_em = bsl[:, 0:1], bsl[:, 1:2]
    be1, be2, be3 = bsl[:, 2:3], bsl[:, 3:4], bsl[:, 4:5]
    bn1, bn2, bn3 = bsl[:, 5:6], bsl[:, 6:7], bsl[:, 7:8]

    # ---- Build gather / scatter-add / pooling selects in-kernel from int32 indices ----
    # Index arrays hold tile-global node ids (g_in_tile*NMAX + node); padded edges hold a
    # large negative sentinel so they never match the iota -> zero select column/row.
    rows_r = rowsR_ref[...]                                   # [1, gbE]
    cols_r = colsR_ref[...]                                   # [1, gbE]
    cols_c = colsC_ref[...]                                   # [gbE, 1]
    nid_r = jax.lax.broadcasted_iota(jnp.int32, (gbN, gbE), 0)
    s_src = (nid_r == rows_r).astype(mxu_dtype)               # [gbN, gbE] gather x[row]
    s_dst = (nid_r == cols_r).astype(mxu_dtype)               # [gbN, gbE] gather x[col]
    nid_c = jax.lax.broadcasted_iota(jnp.int32, (gbE, gbN), 1)
    s_agg = (nid_c == cols_c).astype(mxu_dtype)               # [gbE, gbN] scatter_add over col

    # Pooling matrix: column g sums that graph's NMAX node columns (block structure).
    k_i = jax.lax.broadcasted_iota(jnp.int32, (gbN, gb), 0)
    g_o = jax.lax.broadcasted_iota(jnp.int32, (gbN, gb), 1) * nmax
    pool = ((k_i >= g_o) & (k_i < g_o + nmax)).astype(mxu_dtype)   # [gbN, gb]
    nvalid = nvalid_ref[...]                                       # [1, gbN] real-node mask

    # ---- Embed (Lin + ReLU; dropout p=0 omitted). Lane-dense: M on the lane axis. ----
    xT = relu(mm(wn_em, xT_ref[...]) + bn_em)    # [H, gbN]
    eT = relu(mm(we_em, eT_ref[...]) + be_em)    # [H, gbE]

    outT = jnp.zeros((out2, gb), f32)            # fused mu||logvar accumulator (transposed)

    for i in range(num_fine):                    # GNBlock weights shared across rounds
        # -- EdgeModel: project at node granularity, then gather: (S.x).W == S.(x.W) --
        a = mm(we1a, xT)                                         # [H, gbN]
        b = mm(we1b, xT)                                         # [H, gbN]
        h = relu(mm(a, s_src) + mm(b, s_dst) + mm(we1c, eT) + be1)   # [H, gbE]
        h = relu(mm(we2, h) + be2)
        eT = relu(mm(we3, h) + be3)

        # -- NodeModel: agg = scatter_add(e, col); x = MLP(cat[x, agg]) --
        agg = mm(eT, s_agg)                                      # [H, gbN]
        h = relu(mm(wn1a, xT) + mm(wn1b, agg) + bn1)
        h = relu(mm(wn2, h) + bn2)
        xT = relu(mm(wn3, h) + bn3)

        # -- global_add_pool over real nodes, fed straight into the fused readout --
        pooledT = mm(xT * nvalid, pool)                          # [H, gb]
        outT = outT + mm(woutT[:, i * H:(i + 1) * H], pooledT)   # [2*out, gb]

    # One tiny [2*out, gb] transpose, bias added once, single full-tile store.
    out_ref[...] = (jnp.transpose(outT) + bout).astype(out_ref.dtype)


@functools.partial(jax.jit,
                   static_argnames=("graphs_per_tile", "mxu_dtype", "vmem_limit_bytes"))
def vae_encoder_forward(x, e, rows, cols, edge_valid, node_valid, params, *,
                        graphs_per_tile=8, mxu_dtype=jnp.float32, vmem_limit_bytes=None):
    """VAEEncoder forward via a single Pallas kernel.

    x:          [G, NMAX, Dn]  padded node features
    e:          [G, EMAX, De]  padded edge features
    rows, cols: [G, EMAX] int  edge endpoints (values in [0, n_nodes) for valid edges)
    edge_valid: [G, EMAX]      1.0 for real edges
    node_valid: [G, NMAX]      1.0 for real nodes
    returns (mu, logvar), each [G, encoder_out_dim] float32.

    graphs_per_tile: graphs per grid step. The in-kernel block-diagonal select matrices
    scale as graphs_per_tile^2, so 16-32 (f32) / up to 64 (bf16) is the practical sweet
    spot for large batches; keep grid length an even number >= 4 so both v7x TensorCores
    get multiple, pipelined steps.
    mxu_dtype: set jnp.bfloat16 on v6e/v7x for full-rate MXU (selects stay exact 0/1);
    keep float32 on v5e (no bf16 VPU) or when bit-tight accuracy is required.
    """
    G, N_MAX, DN = x.shape
    _, E_MAX, DE = e.shape
    gb = graphs_per_tile
    H = params["we2"].shape[0]
    assert G % gb == 0, "pad the graph batch to a multiple of graphs_per_tile"
    assert gb == G or (gb % 8 == 0 and (gb * N_MAX) % 128 == 0 and (gb * E_MAX) % 128 == 0), \
        "graphs_per_tile must make gb*NMAX and gb*EMAX multiples of 128 (or gb == G)"

    f32 = jnp.float32

    # ---- layout plumbing (XLA side): feature-major, lane-flattened inputs ----
    xT = jnp.transpose(x, (2, 0, 1)).reshape(DN, G * N_MAX).astype(f32)   # [Dn, G*NMAX]
    eT = jnp.transpose(e, (2, 0, 1)).reshape(DE, G * E_MAX).astype(f32)   # [De, G*EMAX]
    nvalid = node_valid.astype(f32).reshape(1, G * N_MAX)

    # tile-global node indices; padded edges get a big negative sentinel (never matches iota)
    sentinel = jnp.int32(-(1 << 20))
    off = ((jnp.arange(G, dtype=jnp.int32) % gb) * N_MAX)[:, None]
    ev = edge_valid > 0
    rows_gl = jnp.where(ev, rows.astype(jnp.int32) + off, sentinel)
    cols_gl = jnp.where(ev, cols.astype(jnp.int32) + off, sentinel)
    rows_r = rows_gl.reshape(1, G * E_MAX)
    cols_r = cols_gl.reshape(1, G * E_MAX)
    cols_c = cols_gl.reshape(G * E_MAX, 1)

    # ---- consolidated parameter slabs, transposed to [out, in] for feature-major matmuls ----
    w_em = jnp.concatenate([params["wn_em"].T, params["we_em"].T], axis=1)          # [H, Dn+De]
    w_gn = jnp.concatenate([params["we1"].T, params["we2"].T, params["we3"].T,
                            params["wn1"].T, params["wn2"].T, params["wn3"].T], axis=1)  # [H, 9H]
    b_slab = jnp.concatenate([params["bn_em"], params["be_em"],
                              params["be1"], params["be2"], params["be3"],
                              params["bn1"], params["bn2"], params["bn3"]], axis=0).T    # [H, 8]
    woutT = jnp.concatenate([params["w_mu"], params["w_lv"]], axis=1).T             # [2*out, 3H]
    bout = jnp.concatenate([params["b_mu"], params["b_lv"]], axis=1)                # [1, 2*out]
    out2 = woutT.shape[0]

    # ---- rough per-step VMEM footprint; only raise the scoped limit when needed ----
    est = (3 * (gb * N_MAX) * (gb * E_MAX)                       # select matrices
           + 12 * H * gb * (N_MAX + E_MAX)                       # live activations (generous)
           + 2 * (DN * gb * N_MAX + DE * gb * E_MAX + 3 * gb * E_MAX + gb * N_MAX + gb * out2)
           + 2 * (H * (DN + DE) + 9 * H * H + 8 * H + out2 * 3 * H + out2)) * 4
    cp = {"dimension_semantics": ("parallel",)}
    if vmem_limit_bytes is None and est > 12 * 2 ** 20:
        vmem_limit_bytes = min(int(est * 3 // 2), 64 * 2 ** 20)  # clamp to v7x physical VMEM
    if vmem_limit_bytes is not None:
        cp["vmem_limit_bytes"] = int(vmem_limit_bytes)

    grid_spec = pltpu.PrefetchScalarGridSpec(
        num_scalar_prefetch=0,
        grid=(G // gb,),
        in_specs=[
            pl.BlockSpec((DN, gb * N_MAX), lambda i: (0, i)),
            pl.BlockSpec((DE, gb * E_MAX), lambda i: (0, i)),
            pl.BlockSpec((1, gb * E_MAX), lambda i: (0, i)),     # rows (row layout)
            pl.BlockSpec((1, gb * E_MAX), lambda i: (0, i)),     # cols (row layout)
            pl.BlockSpec((gb * E_MAX, 1), lambda i: (i, 0)),     # cols (column layout)
            pl.BlockSpec((1, gb * N_MAX), lambda i: (0, i)),     # node-valid mask
            pl.BlockSpec(w_em.shape, lambda i: (0, 0)),
            pl.BlockSpec(w_gn.shape, lambda i: (0, 0)),
            pl.BlockSpec(b_slab.shape, lambda i: (0, 0)),
            pl.BlockSpec(woutT.shape, lambda i: (0, 0)),
            pl.BlockSpec(bout.shape, lambda i: (0, 0)),
        ],
        out_specs=pl.BlockSpec((gb, out2), lambda i: (i, 0)),
    )

    out = pl.pallas_call(
        functools.partial(_vae_encoder_kernel, nmax=N_MAX, mxu_dtype=mxu_dtype),
        out_shape=jax.ShapeDtypeStruct((G, out2), jnp.float32),
        grid_spec=grid_spec,
        compiler_params=pltpu.CompilerParams(**cp),
    )(xT, eT, rows_r, cols_r, cols_c, nvalid, w_em, w_gn, b_slab, woutT, bout)

    d = params["w_mu"].shape[1]
    return out[:, :d], out[:, d:]


def init_vae_encoder_params(key, input_dim_n, input_dim_e,
                            hidden=HID, num_fine=NUM_FINE, encoder_out_dim=ENC_OUT):
    """U(-1/sqrt(fan_in), 1/sqrt(fan_in)) init mimicking nn.Linear.reset_parameters.
    Weights stored as [in, out] (transposed vs PyTorch), biases as [1, out]."""
    def lin(k, fan_in, fan_out):
        kw, kb = jax.random.split(k)
        bound = 1.0 / jnp.sqrt(float(fan_in))
        w = jax.random.uniform(kw, (fan_in, fan_out), jnp.float32, -bound, bound)
        b = jax.random.uniform(kb, (1, fan_out), jnp.float32, -bound, bound)
        return w, b

    ks = jax.random.split(key, 10)
    p = {}
    p["wn_em"], p["bn_em"] = lin(ks[0], input_dim_n, hidden)        # EmbedNodeModel
    p["we_em"], p["be_em"] = lin(ks[1], input_dim_e, hidden)        # EmbedEdgeModel
    p["we1"], p["be1"] = lin(ks[2], 3 * hidden, hidden)             # EdgeModel MLP
    p["we2"], p["be2"] = lin(ks[3], hidden, hidden)
    p["we3"], p["be3"] = lin(ks[4], hidden, hidden)
    p["wn1"], p["bn1"] = lin(ks[5], 2 * hidden, hidden)             # NodeModel MLP
    p["wn2"], p["bn2"] = lin(ks[6], hidden, hidden)
    p["wn3"], p["bn3"] = lin(ks[7], hidden, hidden)
    p["w_mu"], p["b_mu"] = lin(ks[8], num_fine * hidden, encoder_out_dim)
    p["w_lv"], p["b_lv"] = lin(ks[9], num_fine * hidden, encoder_out_dim)
    return p


def vae_encoder_reference(x, e, rows, cols, edge_valid, node_valid, params):
    """Plain-JAX reference using index gather / scatter-add (mirrors the PyTorch module).
    Matmuls use HIGHEST precision so the f32 comparison against the kernel is meaningful."""
    relu = jax.nn.relu
    hi = jax.lax.Precision.HIGHEST

    def dot(a, b):
        return jnp.dot(a, b, precision=hi)

    def edge_mlp(inp):
        h = relu(dot(inp, params["we1"]) + params["be1"])
        h = relu(dot(h, params["we2"]) + params["be2"])
        return relu(dot(h, params["we3"]) + params["be3"])

    def node_mlp(inp):
        h = relu(dot(inp, params["wn1"]) + params["bn1"])
        h = relu(dot(h, params["wn2"]) + params["bn2"])
        return relu(dot(h, params["wn3"]) + params["bn3"])

    def one_graph(xg, eg, rg, cg, ev, nv):
        xg = relu(dot(xg, params["wn_em"]) + params["bn_em"])
        eg = relu(dot(eg, params["we_em"]) + params["be_em"])
        pooled = []
        for _ in range(NUM_FINE):
            src = xg[rg] * ev[:, None]
            dst = xg[cg] * ev[:, None]
            eg = edge_mlp(jnp.concatenate([src, dst, eg], axis=-1))
            agg = jnp.zeros((xg.shape[0], eg.shape[1]), jnp.float32).at[cg].add(
                eg * ev[:, None])
            xg = node_mlp(jnp.concatenate([xg, agg], axis=-1))
            pooled.append(jnp.sum(xg * nv[:, None], axis=0))
        rep = jnp.concatenate(pooled, axis=-1)
        mu = dot(rep, params["w_mu"]) + params["b_mu"][0]
        logvar = dot(rep, params["w_lv"]) + params["b_lv"][0]
        return mu, logvar

    return jax.vmap(one_graph)(x, e, rows, cols, edge_valid, node_valid)


if __name__ == "__main__":
    key = jax.random.PRNGKey(0)
    k_param, kx, ke, kn, kne, kr, kc = jax.random.split(key, 7)

    # Small deterministic batch of padded molecular-style graphs.
    G, NMAX, EMAX = 32, 16, 32        # graphs, max nodes/graph, max directed edges/graph
    DN, DE = 14, 4                    # raw node / edge feature widths

    params = init_vae_encoder_params(k_param, input_dim_n=DN, input_dim_e=DE)

    n_nodes = jax.random.randint(kn, (G,), 3, NMAX + 1)
    n_edges = jax.random.randint(kne, (G,), 4, EMAX + 1)
    rows = jax.random.randint(kr, (G, EMAX), 0, 1 << 16) % n_nodes[:, None]
    cols = jax.random.randint(kc, (G, EMAX), 0, 1 << 16) % n_nodes[:, None]
    edge_valid = (jnp.arange(EMAX)[None, :] < n_edges[:, None]).astype(jnp.float32)
    node_valid = (jnp.arange(NMAX)[None, :] < n_nodes[:, None]).astype(jnp.float32)

    x = jax.random.normal(kx, (G, NMAX, DN), jnp.float32)
    e = jax.random.normal(ke, (G, EMAX, DE), jnp.float32)

    # graphs_per_tile=8 -> grid=(4,): even, >=4 steps so both v7x cores pipeline.
    mu, logvar = vae_encoder_forward(x, e, rows, cols, edge_valid, node_valid, params,
                                     graphs_per_tile=8)
    mu = jax.block_until_ready(mu)
    logvar = jax.block_until_ready(logvar)

    mu_ref, lv_ref = vae_encoder_reference(x, e, rows, cols, edge_valid, node_valid, params)

    assert mu.shape == (G, ENC_OUT) and logvar.shape == (G, ENC_OUT)
    assert jnp.allclose(mu, mu_ref, atol=3e-3, rtol=3e-3), \
        float(jnp.max(jnp.abs(mu - mu_ref)))
    assert jnp.allclose(logvar, lv_ref, atol=3e-3, rtol=3e-3), \
        float(jnp.max(jnp.abs(logvar - lv_ref)))

    print("KERNEL_OK")
</pallas_src>

<mosaic_0001>
module attributes {stable_mosaic.version = 11 : i64} {
  func.func @_vae_encoder_kernel(%arg0: i32, %arg1: memref<14x128xf32, #tpu.memory_space<vmem>>, %arg2: memref<4x256xf32, #tpu.memory_space<vmem>>, %arg3: memref<1x256xi32, #tpu.memory_space<vmem>>, %arg4: memref<1x256xi32, #tpu.memory_space<vmem>>, %arg5: memref<256x1xi32, #tpu.memory_space<vmem>>, %arg6: memref<1x128xf32, #tpu.memory_space<vmem>>, %arg7: memref<16x18xf32, #tpu.memory_space<vmem>>, %arg8: memref<16x144xf32, #tpu.memory_space<vmem>>, %arg9: memref<16x8xf32, #tpu.memory_space<vmem>>, %arg10: memref<64x48xf32, #tpu.memory_space<vmem>>, %arg11: memref<1x64xf32, #tpu.memory_space<vmem>>, %arg12: memref<8x64xf32, #tpu.memory_space<vmem>>) attributes {dimension_semantics = [#tpu.dimension_semantics<parallel>], iteration_bounds = array<i64: 4>, scalar_prefetch = 0 : i64, scratch_operands = 0 : i64, tpu.core_type = #tpu.core_type<tc>, window_params = [{transform_indices = @transform_0, window_bounds = array<i64: 14, 128>}, {transform_indices = @transform_1, window_bounds = array<i64: 4, 256>}, {transform_indices = @transform_2, window_bounds = array<i64: 1, 256>}, {transform_indices = @transform_3, window_bounds = array<i64: 1, 256>}, {transform_indices = @transform_4, window_bounds = array<i64: 256, 1>}, {transform_indices = @transform_5, window_bounds = array<i64: 1, 128>}, {pipeline_mode = #tpu.pipeline_mode<synchronous>, transform_indices = @transform_6, window_bounds = array<i64: 16, 18>}, {pipeline_mode = #tpu.pipeline_mode<synchronous>, transform_indices = @transform_7, window_bounds = array<i64: 16, 144>}, {pipeline_mode = #tpu.pipeline_mode<synchronous>, transform_indices = @transform_8, window_bounds = array<i64: 16, 8>}, {pipeline_mode = #tpu.pipeline_mode<synchronous>, transform_indices = @transform_9, window_bounds = array<i64: 64, 48>}, {pipeline_mode = #tpu.pipeline_mode<synchronous>, transform_indices = @transform_10, window_bounds = array<i64: 1, 64>}, {transform_indices = @transform_11, window_bounds = array<i64: 8, 64>}]} {
    %c0 = arith.constant 0 : index
    %c0_0 = arith.constant 0 : index
    %0 = vector.load %arg7[%c0, %c0_0] : memref<16x18xf32, #tpu.memory_space<vmem>>, vector<16x18xf32>
    %c0_1 = arith.constant 0 : index
    %c0_2 = arith.constant 0 : index
    %1 = vector.load %arg8[%c0_1, %c0_2] : memref<16x144xf32, #tpu.memory_space<vmem>>, vector<16x144xf32>
    %c0_3 = arith.constant 0 : index
    %c0_4 = arith.constant 0 : index
    %2 = vector.load %arg9[%c0_3, %c0_4] : memref<16x8xf32, #tpu.memory_space<vmem>>, vector<16x8xf32>
    %c0_5 = arith.constant 0 : index
    %c0_6 = arith.constant 0 : index
    %3 = vector.load %arg10[%c0_5, %c0_6] : memref<64x48xf32, #tpu.memory_space<vmem>>, vector<64x48xf32>
    %c0_7 = arith.constant 0 : index
    %c0_8 = arith.constant 0 : index
    %4 = vector.load %arg11[%c0_7, %c0_8] : memref<1x64xf32, #tpu.memory_space<vmem>>, vector<1x64xf32>
    %5 = vector.extract_strided_slice %0 {offsets = [0, 0], sizes = [16, 14], strides = [1, 1]} : vector<16x18xf32> to vector<16x14xf32>
    %6 = vector.extract_strided_slice %0 {offsets = [0, 14], sizes = [16, 4], strides = [1, 1]} : vector<16x18xf32> to vector<16x4xf32>
    %7 = vector.extract_strided_slice %1 {offsets = [0, 0], sizes = [16, 16], strides = [1, 1]} : vector<16x144xf32> to vector<16x16xf32>
    %8 = vector.extract_strided_slice %1 {offsets = [0, 16], sizes = [16, 16], strides = [1, 1]} : vector<16x144xf32> to vector<16x16xf32>
    %9 = vector.extract_strided_slice %1 {offsets = [0, 32], sizes = [16, 16], strides = [1, 1]} : vector<16x144xf32> to vector<16x16xf32>
    %10 = vector.extract_strided_slice %1 {offsets = [0, 48], sizes = [16, 16], strides = [1, 1]} : vector<16x144xf32> to vector<16x16xf32>
    %11 = vector.extract_strided_slice %1 {offsets = [0, 64], sizes = [16, 16], strides = [1, 1]} : vector<16x144xf32> to vector<16x16xf32>
    %12 = vector.extract_strided_slice %1 {offsets = [0, 80], sizes = [16, 16], strides = [1, 1]} : vector<16x144xf32> to vector<16x16xf32>
    %13 = vector.extract_strided_slice %1 {offsets = [0, 96], sizes = [16, 16], strides = [1, 1]} : vector<16x144xf32> to vector<16x16xf32>
    %14 = vector.extract_strided_slice %1 {offsets = [0, 112], sizes = [16, 16], strides = [1, 1]} : vector<16x144xf32> to vector<16x16xf32>
    %15 = vector.extract_strided_slice %1 {offsets = [0, 128], sizes = [16, 16], strides = [1, 1]} : vector<16x144xf32> to vector<16x16xf32>
    %16 = vector.extract_strided_slice %2 {offsets = [0, 0], sizes = [16, 1], strides = [1, 1]} : vector<16x8xf32> to vector<16x1xf32>
    %17 = vector.extract_strided_slice %2 {offsets = [0, 1], sizes = [16, 1], strides = [1, 1]} : vector<16x8xf32> to vector<16x1xf32>
    %18 = vector.extract_strided_slice %2 {offsets = [0, 2], sizes = [16, 1], strides = [1, 1]} : vector<16x8xf32> to vector<16x1xf32>
    %19 = vector.extract_strided_slice %2 {offsets = [0, 3], sizes = [16, 1], strides = [1, 1]} : vector<16x8xf32> to vector<16x1xf32>
    %20 = vector.extract_strided_slice %2 {offsets = [0, 4], sizes = [16, 1], strides = [1, 1]} : vector<16x8xf32> to vector<16x1xf32>
    %21 = vector.extract_strided_slice %2 {offsets = [0, 5], sizes = [16, 1], strides = [1, 1]} : vector<16x8xf32> to vector<16x1xf32>
    %22 = vector.extract_strided_slice %2 {offsets = [0, 6], sizes = [16, 1], strides = [1, 1]} : vector<16x8xf32> to vector<16x1xf32>
    %23 = vector.extract_strided_slice %2 {offsets = [0, 7], sizes = [16, 1], strides = [1, 1]} : vector<16x8xf32> to vector<16x1xf32>
    %c0_9 = arith.constant 0 : index
    %c0_10 = arith.constant 0 : index
    %24 = vector.load %arg3[%c0_9, %c0_10] : memref<1x256xi32, #tpu.memory_space<vmem>>, vector<1x256xi32>
    %c0_11 = arith.constant 0 : index
    %c0_12 = arith.constant 0 : index
    %25 = vector.load %arg4[%c0_11, %c0_12] : memref<1x256xi32, #tpu.memory_space<vmem>>, vector<1x256xi32>
    %c0_13 = arith.constant 0 : index
    %c0_14 = arith.constant 0 : index
    %26 = vector.load %arg5[%c0_13, %c0_14] : memref<256x1xi32, #tpu.memory_space<vmem>>, vector<256x1xi32>
    %27 = tpu.iota {dimensions = array<i32: 0>} : vector<128x256xi32>
    %28 = vector.broadcast %24 : vector<1x256xi32> to vector<128x256xi32>
    %29 = arith.cmpi eq, %27, %28 : vector<128x256xi32>
    %30 = arith.extui %29 : vector<128x256xi1> to vector<128x256xi32>
    %31 = arith.sitofp %30 : vector<128x256xi32> to vector<128x256xf32>
    %32 = vector.broadcast %25 : vector<1x256xi32> to vector<128x256xi32>
    %33 = arith.cmpi eq, %27, %32 : vector<128x256xi32>
    %34 = arith.extui %33 : vector<128x256xi1> to vector<128x256xi32>
    %35 = arith.sitofp %34 : vector<128x256xi32> to vector<128x256xf32>
    %36 = tpu.iota {dimensions = array<i32: 1>} : vector<256x128xi32>
    %37 = vector.broadcast %26 : vector<256x1xi32> to vector<256x128xi32>
    %38 = arith.cmpi eq, %36, %37 : vector<256x128xi32>
    %39 = arith.extui %38 : vector<256x128xi1> to vector<256x128xi32>
    %40 = arith.sitofp %39 : vector<256x128xi32> to vector<256x128xf32>
    %41 = tpu.iota {dimensions = array<i32: 0>} : vector<128x8xi32>
    %42 = tpu.iota {dimensions = array<i32: 1>} : vector<128x8xi32>
    %c16_i32 = arith.constant 16 : i32
    %43 = vector.broadcast %c16_i32 : i32 to vector<128x8xi32>
    %44 = arith.muli %42, %43 : vector<128x8xi32>
    %45 = arith.cmpi sge, %41, %44 : vector<128x8xi32>
    %c16_i32_15 = arith.constant 16 : i32
    %46 = vector.broadcast %c16_i32_15 : i32 to vector<128x8xi32>
    %47 = arith.addi %44, %46 : vector<128x8xi32>
    %48 = arith.cmpi slt, %41, %47 : vector<128x8xi32>
    %49 = arith.andi %45, %48 : vector<128x8xi1>
    %50 = arith.extui %49 : vector<128x8xi1> to vector<128x8xi32>
    %51 = arith.sitofp %50 : vector<128x8xi32> to vector<128x8xf32>
    %c0_16 = arith.constant 0 : index
    %c0_17 = arith.constant 0 : index
    %52 = vector.load %arg6[%c0_16, %c0_17] : memref<1x128xf32, #tpu.memory_space<vmem>>, vector<1x128xf32>
    %c0_18 = arith.constant 0 : index
    %c0_19 = arith.constant 0 : index
    %53 = vector.load %arg1[%c0_18, %c0_19] : memref<14x128xf32, #tpu.memory_space<vmem>>, vector<14x128xf32>
    %cst = arith.constant dense<0.000000e+00> : vector<16x128xf32>
    %54 = tpu.matmul %5, %53, %cst {dimension_numbers = #tpu.dot_dimension_numbers<[1], [0], [0], [1], [0, 0, 1, 1], [], []>} : vector<16x14xf32>, vector<14x128xf32>, vector<16x128xf32> -> vector<16x128xf32>
    %55 = vector.broadcast %16 : vector<16x1xf32> to vector<16x128xf32>
    %56 = arith.addf %54, %55 : vector<16x128xf32>
    %cst_20 = arith.constant 0.000000e+00 : f32
    %57 = vector.broadcast %cst_20 : f32 to vector<16x128xf32>
    %58 = arith.maximumf %56, %57 : vector<16x128xf32>
    %c0_21 = arith.constant 0 : index
    %c0_22 = arith.constant 0 : index
    %59 = vector.load %arg2[%c0_21, %c0_22] : memref<4x256xf32, #tpu.memory_space<vmem>>, vector<4x256xf32>
    %cst_23 = arith.constant dense<0.000000e+00> : vector<16x256xf32>
    %60 = tpu.matmul %6, %59, %cst_23 {dimension_numbers = #tpu.dot_dimension_numbers<[1], [0], [0], [1], [0, 0, 1, 1], [], []>} : vector<16x4xf32>, vector<4x256xf32>, vector<16x256xf32> -> vector<16x256xf32>
    %61 = vector.broadcast %17 : vector<16x1xf32> to vector<16x256xf32>
    %62 = arith.addf %60, %61 : vector<16x256xf32>
    %cst_24 = arith.constant 0.000000e+00 : f32
    %63 = vector.broadcast %cst_24 : f32 to vector<16x256xf32>
    %64 = arith.maximumf %62, %63 : vector<16x256xf32>
    %cst_25 = arith.constant 0.000000e+00 : f32
    %65 = vector.broadcast %cst_25 : f32 to vector<64x8xf32>
    %cst_26 = arith.constant dense<0.000000e+00> : vector<16x128xf32>
    %66 = tpu.matmul %7, %58, %cst_26 {dimension_numbers = #tpu.dot_dimension_numbers<[1], [0], [0], [1], [0, 0, 1, 1], [], []>} : vector<16x16xf32>, vector<16x128xf32>, vector<16x128xf32> -> vector<16x128xf32>
    %cst_27 = arith.constant dense<0.000000e+00> : vector<16x128xf32>
    %67 = tpu.matmul %8, %58, %cst_27 {dimension_numbers = #tpu.dot_dimension_numbers<[1], [0], [0], [1], [0, 0, 1, 1], [], []>} : vector<16x16xf32>, vector<16x128xf32>, vector<16x128xf32> -> vector<16x128xf32>
    %cst_28 = arith.constant dense<0.000000e+00> : vector<16x256xf32>
    %68 = tpu.matmul %66, %31, %cst_28 {dimension_numbers = #tpu.dot_dimension_numbers<[1], [0], [0], [1], [0, 0, 1, 1], [], []>} : vector<16x128xf32>, vector<128x256xf32>, vector<16x256xf32> -> vector<16x256xf32>
    %cst_29 = arith.constant dense<0.000000e+00> : vector<16x256xf32>
    %69 = tpu.matmul %67, %35, %cst_29 {dimension_numbers = #tpu.dot_dimension_numbers<[1], [0], [0], [1], [0, 0, 1, 1], [], []>} : vector<16x128xf32>, vector<128x256xf32>, vector<16x256xf32> -> vector<16x256xf32>
    %70 = arith.addf %68, %69 : vector<16x256xf32>
    %cst_30 = arith.constant dense<0.000000e+00> : vector<16x256xf32>
    %71 = tpu.matmul %9, %64, %cst_30 {dimension_numbers = #tpu.dot_dimension_numbers<[1], [0], [0], [1], [0, 0, 1, 1], [], []>} : vector<16x16xf32>, vector<16x256xf32>, vector<16x256xf32> -> vector<16x256xf32>
    %72 = arith.addf %70, %71 : vector<16x256xf32>
    %73 = vector.broadcast %18 : vector<16x1xf32> to vector<16x256xf32>
    %74 = arith.addf %72, %73 : vector<16x256xf32>
    %cst_31 = arith.constant 0.000000e+00 : f32
    %75 = vector.broadcast %cst_31 : f32 to vector<16x256xf32>
    %76 = arith.maximumf %74, %75 : vector<16x256xf32>
    %cst_32 = arith.constant dense<0.000000e+00> : vector<16x256xf32>
    %77 = tpu.matmul %10, %76, %cst_32 {dimension_numbers = #tpu.dot_dimension_numbers<[1], [0], [0], [1], [0, 0, 1, 1], [], []>} : vector<16x16xf32>, vector<16x256xf32>, vector<16x256xf32> -> vector<16x256xf32>
    %78 = vector.broadcast %19 : vector<16x1xf32> to vector<16x256xf32>
    %79 = arith.addf %77, %78 : vector<16x256xf32>
    %cst_33 = arith.constant 0.000000e+00 : f32
    %80 = vector.broadcast %cst_33 : f32 to vector<16x256xf32>
    %81 = arith.maximumf %79, %80 : vector<16x256xf32>
    %cst_34 = arith.constant dense<0.000000e+00> : vector<16x256xf32>
    %82 = tpu.matmul %11, %81, %cst_34 {dimension_numbers = #tpu.dot_dimension_numbers<[1], [0], [0], [1], [0, 0, 1, 1], [], []>} : vector<16x16xf32>, vector<16x256xf32>, vector<16x256xf32> -> vector<16x256xf32>
    %83 = vector.broadcast %20 : vector<16x1xf32> to vector<16x256xf32>
    %84 = arith.addf %82, %83 : vector<16x256xf32>
    %cst_35 = arith.constant 0.000000e+00 : f32
    %85 = vector.broadcast %cst_35 : f32 to vector<16x256xf32>
    %86 = arith.maximumf %84, %85 : vector<16x256xf32>
    %cst_36 = arith.constant dense<0.000000e+00> : vector<16x128xf32>
    %87 = tpu.matmul %86, %40, %cst_36 {dimension_numbers = #tpu.dot_dimension_numbers<[1], [0], [0], [1], [0, 0, 1, 1], [], []>} : vector<16x256xf32>, vector<256x128xf32>, vector<16x128xf32> -> vector<16x128xf32>
    %cst_37 = arith.constant dense<0.000000e+00> : vector<16x128xf32>
    %88 = tpu.matmul %12, %58, %cst_37 {dimension_numbers = #tpu.dot_dimension_numbers<[1], [0], [0], [1], [0, 0, 1, 1], [], []>} : vector<16x16xf32>, vector<16x128xf32>, vector<16x128xf32> -> vector<16x128xf32>
    %cst_38 = arith.constant dense<0.000000e+00> : vector<16x128xf32>
    %89 = tpu.matmul %13, %87, %cst_38 {dimension_numbers = #tpu.dot_dimension_numbers<[1], [0], [0], [1], [0, 0, 1, 1], [], []>} : vector<16x16xf32>, vector<16x128xf32>, vector<16x128xf32> -> vector<16x128xf32>
    %90 = arith.addf %88, %89 : vector<16x128xf32>
    %91 = vector.broadcast %21 : vector<16x1xf32> to vector<16x128xf32>
    %92 = arith.addf %90, %91 : vector<16x128xf32>
    %cst_39 = arith.constant 0.000000e+00 : f32
    %93 = vector.broadcast %cst_39 : f32 to vector<16x128xf32>
    %94 = arith.maximumf %92, %93 : vector<16x128xf32>
    %cst_40 = arith.constant dense<0.000000e+00> : vector<16x128xf32>
    %95 = tpu.matmul %14, %94, %cst_40 {dimension_numbers = #tpu.dot_dimension_numbers<[1], [0], [0], [1], [0, 0, 1, 1], [], []>} : vector<16x16xf32>, vector<16x128xf32>, vector<16x128xf32> -> vector<16x128xf32>
    %96 = vector.broadcast %22 : vector<16x1xf32> to vector<16x128xf32>
    %97 = arith.addf %95, %96 : vector<16x128xf32>
    %cst_41 = arith.constant 0.000000e+00 : f32
    %98 = vector.broadcast %cst_41 : f32 to vector<16x128xf32>
    %99 = arith.maximumf %97, %98 : vector<16x128xf32>
    %cst_42 = arith.constant dense<0.000000e+00> : vector<16x128xf32>
    %100 = tpu.matmul %15, %99, %cst_42 {dimension_numbers = #tpu.dot_dimension_numbers<[1], [0], [0], [1], [0, 0, 1, 1], [], []>} : vector<16x16xf32>, vector<16x128xf32>, vector<16x128xf32> -> vector<16x128xf32>
    %101 = vector.broadcast %23 : vector<16x1xf32> to vector<16x128xf32>
    %102 = arith.addf %100, %101 : vector<16x128xf32>
    %cst_43 = arith.constant 0.000000e+00 : f32
    %103 = vector.broadcast %cst_43 : f32 to vector<16x128xf32>
    %104 = arith.maximumf %102, %103 : vector<16x128xf32>
    %105 = vector.broadcast %52 : vector<1x128xf32> to vector<16x128xf32>
    %106 = arith.mulf %104, %105 : vector<16x128xf32>
    %cst_44 = arith.constant dense<0.000000e+00> : vector<16x8xf32>
    %107 = tpu.matmul %106, %51, %cst_44 {dimension_numbers = #tpu.dot_dimension_numbers<[1], [0], [0], [1], [0, 0, 1, 1], [], []>} : vector<16x128xf32>, vector<128x8xf32>, vector<16x8xf32> -> vector<16x8xf32>
    %108 = vector.extract_strided_slice %3 {offsets = [0, 0], sizes = [64, 16], strides = [1, 1]} : vector<64x48xf32> to vector<64x16xf32>
    %cst_45 = arith.constant dense<0.000000e+00> : vector<64x8xf32>
    %109 = tpu.matmul %108, %107, %cst_45 {dimension_numbers = #tpu.dot_dimension_numbers<[1], [0], [0], [1], [0, 0, 1, 1], [], []>} : vector<64x16xf32>, vector<16x8xf32>, vector<64x8xf32> -> vector<64x8xf32>
    %110 = arith.addf %65, %109 : vector<64x8xf32>
    %cst_46 = arith.constant dense<0.000000e+00> : vector<16x128xf32>
    %111 = tpu.matmul %7, %104, %cst_46 {dimension_numbers = #tpu.dot_dimension_numbers<[1], [0], [0], [1], [0, 0, 1, 1], [], []>} : vector<16x16xf32>, vector<16x128xf32>, vector<16x128xf32> -> vector<16x128xf32>
    %cst_47 = arith.constant dense<0.000000e+00> : vector<16x128xf32>
    %112 = tpu.matmul %8, %104, %cst_47 {dimension_numbers = #tpu.dot_dimension_numbers<[1], [0], [0], [1], [0, 0, 1, 1], [], []>} : vector<16x16xf32>, vector<16x128xf32>, vector<16x128xf32> -> vector<16x128xf32>
    %cst_48 = arith.constant dense<0.000000e+00> : vector<16x256xf32>
    %113 = tpu.matmul %111, %31, %cst_48 {dimension_numbers = #tpu.dot_dimension_numbers<[1], [0], [0], [1], [0, 0, 1, 1], [], []>} : vector<16x128xf32>, vector<128x256xf32>, vector<16x256xf32> -> vector<16x256xf32>
    %cst_49 = arith.constant dense<0.000000e+00> : vector<16x256xf32>
    %114 = tpu.matmul %112, %35, %cst_49 {dimension_numbers = #tpu.dot_dimension_numbers<[1], [0], [0], [1], [0, 0, 1, 1], [], []>} : vector<16x128xf32>, vector<128x256xf32>, vector<16x256xf32> -> vector<16x256xf32>
    %115 = arith.addf %113, %114 : vector<16x256xf32>
    %cst_50 = arith.constant dense<0.000000e+00> : vector<16x256xf32>
    %116 = tpu.matmul %9, %86, %cst_50 {dimension_numbers = #tpu.dot_dimension_numbers<[1], [0], [0], [1], [0, 0, 1, 1], [], []>} : vector<16x16xf32>, vector<16x256xf32>, vector<16x256xf32> -> vector<16x256xf32>
    %117 = arith.addf %115, %116 : vector<16x256xf32>
    %118 = vector.broadcast %18 : vector<16x1xf32> to vector<16x256xf32>
    %119 = arith.addf %117, %118 : vector<16x256xf32>
    %cst_51 = arith.constant 0.000000e+00 : f32
    %120 = vector.broadcast %cst_51 : f32 to vector<16x256xf32>
    %121 = arith.maximumf %119, %120 : vector<16x256xf32>
    %cst_52 = arith.constant dense<0.000000e+00> : vector<16x256xf32>
    %122 = tpu.matmul %10, %121, %cst_52 {dimension_numbers = #tpu.dot_dimension_numbers<[1], [0], [0], [1], [0, 0, 1, 1], [], []>} : vector<16x16xf32>, vector<16x256xf32>, vector<16x256xf32> -> vector<16x256xf32>
    %123 = vector.broadcast %19 : vector<16x1xf32> to vector<16x256xf32>
    %124 = arith.addf %122, %123 : vector<16x256xf32>
    %cst_53 = arith.constant 0.000000e+00 : f32
    %125 = vector.broadcast %cst_53 : f32 to vector<16x256xf32>
    %126 = arith.maximumf %124, %125 : vector<16x256xf32>
    %cst_54 = arith.constant dense<0.000000e+00> : vector<16x256xf32>
    %127 = tpu.matmul %11, %126, %cst_54 {dimension_numbers = #tpu.dot_dimension_numbers<[1], [0], [0], [1], [0, 0, 1, 1], [], []>} : vector<16x16xf32>, vector<16x256xf32>, vector<16x256xf32> -> vector<16x256xf32>
    %128 = vector.broadcast %20 : vector<16x1xf32> to vector<16x256xf32>
    %129 = arith.addf %127, %128 : vector<16x256xf32>
    %cst_55 = arith.constant 0.000000e+00 : f32
    %130 = vector.broadcast %cst_55 : f32 to vector<16x256xf32>
    %131 = arith.maximumf %129, %130 : vector<16x256xf32>
    %cst_56 = arith.constant dense<0.000000e+00> : vector<16x128xf32>
    %132 = tpu.matmul %131, %40, %cst_56 {dimension_numbers = #tpu.dot_dimension_numbers<[1], [0], [0], [1], [0, 0, 1, 1], [], []>} : vector<16x256xf32>, vector<256x128xf32>, vector<16x128xf32> -> vector<16x128xf32>
    %cst_57 = arith.constant dense<0.000000e+00> : vector<16x128xf32>
    %133 = tpu.matmul %12, %104, %cst_57 {dimension_numbers = #tpu.dot_dimension_numbers<[1], [0], [0], [1], [0, 0, 1, 1], [], []>} : vector<16x16xf32>, vector<16x128xf32>, vector<16x128xf32> -> vector<16x128xf32>
    %cst_58 = arith.constant dense<0.000000e+00> : vector<16x128xf32>
    %134 = tpu.matmul %13, %132, %cst_58 {dimension_numbers = #tpu.dot_dimension_numbers<[1], [0], [0], [1], [0, 0, 1, 1], [], []>} : vector<16x16xf32>, vector<16x128xf32>, vector<16x128xf32> -> vector<16x128xf32>
    %135 = arith.addf %133, %134 : vector<16x128xf32>
    %136 = vector.broadcast %21 : vector<16x1xf32> to vector<16x128xf32>
    %137 = arith.addf %135, %136 : vector<16x128xf32>
    %cst_59 = arith.constant 0.000000e+00 : f32
    %138 = vector.broadcast %cst_59 : f32 to vector<16x128xf32>
    %139 = arith.maximumf %137, %138 : vector<16x128xf32>
    %cst_60 = arith.constant dense<0.000000e+00> : vector<16x128xf32>
    %140 = tpu.matmul %14, %139, %cst_60 {dimension_numbers = #tpu.dot_dimension_numbers<[1], [0], [0], [1], [0, 0, 1, 1], [], []>} : vector<16x16xf32>, vector<16x128xf32>, vector<16x128xf32> -> vector<16x128xf32>
    %141 = vector.broadcast %22 : vector<16x1xf32> to vector<16x128xf32>
    %142 = arith.addf %140, %141 : vector<16x128xf32>
    %cst_61 = arith.constant 0.000000e+00 : f32
    %143 = vector.broadcast %cst_61 : f32 to vector<16x128xf32>
    %144 = arith.maximumf %142, %143 : vector<16x128xf32>
    %cst_62 = arith.constant dense<0.000000e+00> : vector<16x128xf32>
    %145 = tpu.matmul %15, %144, %cst_62 {dimension_numbers = #tpu.dot_dimension_numbers<[1], [0], [0], [1], [0, 0, 1, 1], [], []>} : vector<16x16xf32>, vector<16x128xf32>, vector<16x128xf32> -> vector<16x128xf32>
    %146 = vector.broadcast %23 : vector<16x1xf32> to vector<16x128xf32>
    %147 = arith.addf %145, %146 : vector<16x128xf32>
    %cst_63 = arith.constant 0.000000e+00 : f32
    %148 = vector.broadcast %cst_63 : f32 to vector<16x128xf32>
    %149 = arith.maximumf %147, %148 : vector<16x128xf32>
    %150 = vector.broadcast %52 : vector<1x128xf32> to vector<16x128xf32>
    %151 = arith.mulf %149, %150 : vector<16x128xf32>
    %cst_64 = arith.constant dense<0.000000e+00> : vector<16x8xf32>
    %152 = tpu.matmul %151, %51, %cst_64 {dimension_numbers = #tpu.dot_dimension_numbers<[1], [0], [0], [1], [0, 0, 1, 1], [], []>} : vector<16x128xf32>, vector<128x8xf32>, vector<16x8xf32> -> vector<16x8xf32>
    %153 = vector.extract_strided_slice %3 {offsets = [0, 16], sizes = [64, 16], strides = [1, 1]} : vector<64x48xf32> to vector<64x16xf32>
    %cst_65 = arith.constant dense<0.000000e+00> : vector<64x8xf32>
    %154 = tpu.matmul %153, %152, %cst_65 {dimension_numbers = #tpu.dot_dimension_numbers<[1], [0], [0], [1], [0, 0, 1, 1], [], []>} : vector<64x16xf32>, vector<16x8xf32>, vector<64x8xf32> -> vector<64x8xf32>
    %155 = arith.addf %110, %154 : vector<64x8xf32>
    %cst_66 = arith.constant dense<0.000000e+00> : vector<16x128xf32>
    %156 = tpu.matmul %7, %149, %cst_66 {dimension_numbers = #tpu.dot_dimension_numbers<[1], [0], [0], [1], [0, 0, 1, 1], [], []>} : vector<16x16xf32>, vector<16x128xf32>, vector<16x128xf32> -> vector<16x128xf32>
    %cst_67 = arith.constant dense<0.000000e+00> : vector<16x128xf32>
    %157 = tpu.matmul %8, %149, %cst_67 {dimension_numbers = #tpu.dot_dimension_numbers<[1], [0], [0], [1], [0, 0, 1, 1], [], []>} : vector<16x16xf32>, vector<16x128xf32>, vector<16x128xf32> -> vector<16x128xf32>
    %cst_68 = arith.constant dense<0.000000e+00> : vector<16x256xf32>
    %158 = tpu.matmul %156, %31, %cst_68 {dimension_numbers = #tpu.dot_dimension_numbers<[1], [0], [0], [1], [0, 0, 1, 1], [], []>} : vector<16x128xf32>, vector<128x256xf32>, vector<16x256xf32> -> vector<16x256xf32>
    %cst_69 = arith.constant dense<0.000000e+00> : vector<16x256xf32>
    %159 = tpu.matmul %157, %35, %cst_69 {dimension_numbers = #tpu.dot_dimension_numbers<[1], [0], [0], [1], [0, 0, 1, 1], [], []>} : vector<16x128xf32>, vector<128x256xf32>, vector<16x256xf32> -> vector<16x256xf32>
    %160 = arith.addf %158, %159 : vector<16x256xf32>
    %cst_70 = arith.constant dense<0.000000e+00> : vector<16x256xf32>
    %161 = tpu.matmul %9, %131, %cst_70 {dimension_numbers = #tpu.dot_dimension_numbers<[1], [0], [0], [1], [0, 0, 1, 1], [], []>} : vector<16x16xf32>, vector<16x256xf32>, vector<16x256xf32> -> vector<16x256xf32>
    %162 = arith.addf %160, %161 : vector<16x256xf32>
    %163 = vector.broadcast %18 : vector<16x1xf32> to vector<16x256xf32>
    %164 = arith.addf %162, %163 : vector<16x256xf32>
    %cst_71 = arith.constant 0.000000e+00 : f32
    %165 = vector.broadcast %cst_71 : f32 to vector<16x256xf32>
    %166 = arith.maximumf %164, %165 : vector<16x256xf32>
    %cst_72 = arith.constant dense<0.000000e+00> : vector<16x256xf32>
    %167 = tpu.matmul %10, %166, %cst_72 {dimension_numbers = #tpu.dot_dimension_numbers<[1], [0], [0], [1], [0, 0, 1, 1], [], []>} : vector<16x16xf32>, vector<16x256xf32>, vector<16x256xf32> -> vector<16x256xf32>
    %168 = vector.broadcast %19 : vector<16x1xf32> to vector<16x256xf32>
    %169 = arith.addf %167, %168 : vector<16x256xf32>
    %cst_73 = arith.constant 0.000000e+00 : f32
    %170 = vector.broadcast %cst_73 : f32 to vector<16x256xf32>
    %171 = arith.maximumf %169, %170 : vector<16x256xf32>
    %cst_74 = arith.constant dense<0.000000e+00> : vector<16x256xf32>
    %172 = tpu.matmul %11, %171, %cst_74 {dimension_numbers = #tpu.dot_dimension_numbers<[1], [0], [0], [1], [0, 0, 1, 1], [], []>} : vector<16x16xf32>, vector<16x256xf32>, vector<16x256xf32> -> vector<16x256xf32>
    %173 = vector.broadcast %20 : vector<16x1xf32> to vector<16x256xf32>
    %174 = arith.addf %172, %173 : vector<16x256xf32>
    %cst_75 = arith.constant 0.000000e+00 : f32
    %175 = vector.broadcast %cst_75 : f32 to vector<16x256xf32>
    %176 = arith.maximumf %174, %175 : vector<16x256xf32>
    %cst_76 = arith.constant dense<0.000000e+00> : vector<16x128xf32>
    %177 = tpu.matmul %176, %40, %cst_76 {dimension_numbers = #tpu.dot_dimension_numbers<[1], [0], [0], [1], [0, 0, 1, 1], [], []>} : vector<16x256xf32>, vector<256x128xf32>, vector<16x128xf32> -> vector<16x128xf32>
    %cst_77 = arith.constant dense<0.000000e+00> : vector<16x128xf32>
    %178 = tpu.matmul %12, %149, %cst_77 {dimension_numbers = #tpu.dot_dimension_numbers<[1], [0], [0], [1], [0, 0, 1, 1], [], []>} : vector<16x16xf32>, vector<16x128xf32>, vector<16x128xf32> -> vector<16x128xf32>
    %cst_78 = arith.constant dense<0.000000e+00> : vector<16x128xf32>
    %179 = tpu.matmul %13, %177, %cst_78 {dimension_numbers = #tpu.dot_dimension_numbers<[1], [0], [0], [1], [0, 0, 1, 1], [], []>} : vector<16x16xf32>, vector<16x128xf32>, vector<16x128xf32> -> vector<16x128xf32>
    %180 = arith.addf %178, %179 : vector<16x128xf32>
    %181 = vector.broadcast %21 : vector<16x1xf32> to vector<16x128xf32>
    %182 = arith.addf %180, %181 : vector<16x128xf32>
    %cst_79 = arith.constant 0.000000e+00 : f32
    %183 = vector.broadcast %cst_79 : f32 to vector<16x128xf32>
    %184 = arith.maximumf %182, %183 : vector<16x128xf32>
    %cst_80 = arith.constant dense<0.000000e+00> : vector<16x128xf32>
    %185 = tpu.matmul %14, %184, %cst_80 {dimension_numbers = #tpu.dot_dimension_numbers<[1], [0], [0], [1], [0, 0, 1, 1], [], []>} : vector<16x16xf32>, vector<16x128xf32>, vector<16x128xf32> -> vector<16x128xf32>
    %186 = vector.broadcast %22 : vector<16x1xf32> to vector<16x128xf32>
    %187 = arith.addf %185, %186 : vector<16x128xf32>
    %cst_81 = arith.constant 0.000000e+00 : f32
    %188 = vector.broadcast %cst_81 : f32 to vector<16x128xf32>
    %189 = arith.maximumf %187, %188 : vector<16x128xf32>
    %cst_82 = arith.constant dense<0.000000e+00> : vector<16x128xf32>
    %190 = tpu.matmul %15, %189, %cst_82 {dimension_numbers = #tpu.dot_dimension_numbers<[1], [0], [0], [1], [0, 0, 1, 1], [], []>} : vector<16x16xf32>, vector<16x128xf32>, vector<16x128xf32> -> vector<16x128xf32>
    %191 = vector.broadcast %23 : vector<16x1xf32> to vector<16x128xf32>
    %192 = arith.addf %190, %191 : vector<16x128xf32>
    %cst_83 = arith.constant 0.000000e+00 : f32
    %193 = vector.broadcast %cst_83 : f32 to vector<16x128xf32>
    %194 = arith.maximumf %192, %193 : vector<16x128xf32>
    %195 = vector.broadcast %52 : vector<1x128xf32> to vector<16x128xf32>
    %196 = arith.mulf %194, %195 : vector<16x128xf32>
    %cst_84 = arith.constant dense<0.000000e+00> : vector<16x8xf32>
    %197 = tpu.matmul %196, %51, %cst_84 {dimension_numbers = #tpu.dot_dimension_numbers<[1], [0], [0], [1], [0, 0, 1, 1], [], []>} : vector<16x128xf32>, vector<128x8xf32>, vector<16x8xf32> -> vector<16x8xf32>
    %198 = vector.extract_strided_slice %3 {offsets = [0, 32], sizes = [64, 16], strides = [1, 1]} : vector<64x48xf32> to vector<64x16xf32>
    %cst_85 = arith.constant dense<0.000000e+00> : vector<64x8xf32>
    %199 = tpu.matmul %198, %197, %cst_85 {dimension_numbers = #tpu.dot_dimension_numbers<[1], [0], [0], [1], [0, 0, 1, 1], [], []>} : vector<64x16xf32>, vector<16x8xf32>, vector<64x8xf32> -> vector<64x8xf32>
    %200 = arith.addf %155, %199 : vector<64x8xf32>
    %201 = tpu.transpose %200, [1, 0] : vector<64x8xf32> -> vector<8x64xf32>
    %202 = vector.broadcast %4 : vector<1x64xf32> to vector<8x64xf32>
    %203 = arith.addf %201, %202 : vector<8x64xf32>
    %c0_86 = arith.constant 0 : index
    %c0_87 = arith.constant 0 : index
    %204 = vector.load %arg12[%c0_86, %c0_87] : memref<8x64xf32, #tpu.memory_space<vmem>>, vector<8x64xf32>
    tpu.vector_store %arg12[%c0_86, %c0_87], %203 {strides = array<i32>} : memref<8x64xf32, #tpu.memory_space<vmem>>, vector<8x64xf32>,
    return
  }
  func.func @transform_0(%arg0: i32) -> (i32, i32) {
    %c0_i32 = arith.constant 0 : i32
    %c0_i32_0 = arith.constant 0 : i32
    return %c0_i32, %arg0 : i32, i32
  }
  func.func @transform_1(%arg0: i32) -> (i32, i32) {
    %c0_i32 = arith.constant 0 : i32
    %c0_i32_0 = arith.constant 0 : i32
    return %c0_i32, %arg0 : i32, i32
  }
  func.func @transform_2(%arg0: i32) -> (i32, i32) {
    %c0_i32 = arith.constant 0 : i32
    %c0_i32_0 = arith.constant 0 : i32
    return %c0_i32, %arg0 : i32, i32
  }
  func.func @transform_3(%arg0: i32) -> (i32, i32) {
    %c0_i32 = arith.constant 0 : i32
    %c0_i32_0 = arith.constant 0 : i32
    return %c0_i32, %arg0 : i32, i32
  }
  func.func @transform_4(%arg0: i32) -> (i32, i32) {
    %c0_i32 = arith.constant 0 : i32
    %c0_i32_0 = arith.constant 0 : i32
    return %arg0, %c0_i32 : i32, i32
  }
  func.func @transform_5(%arg0: i32) -> (i32, i32) {
    %c0_i32 = arith.constant 0 : i32
    %c0_i32_0 = arith.constant 0 : i32
    return %c0_i32, %arg0 : i32, i32
  }
  func.func @transform_6(%arg0: i32) -> (i32, i32) {
    %c0_i32 = arith.constant 0 : i32
    %c0_i32_0 = arith.constant 0 : i32
    %c0_i32_1 = arith.constant 0 : i32
    return %c0_i32, %c0_i32_0 : i32, i32
  }
  func.func @transform_7(%arg0: i32) -> (i32, i32) {
    %c0_i32 = arith.constant 0 : i32
    %c0_i32_0 = arith.constant 0 : i32
    %c0_i32_1 = arith.constant 0 : i32
    return %c0_i32, %c0_i32_0 : i32, i32
  }
  func.func @transform_8(%arg0: i32) -> (i32, i32) {
    %c0_i32 = arith.constant 0 : i32
    %c0_i32_0 = arith.constant 0 : i32
    %c0_i32_1 = arith.constant 0 : i32
    return %c0_i32, %c0_i32_0 : i32, i32
  }
  func.func @transform_9(%arg0: i32) -> (i32, i32) {
    %c0_i32 = arith.constant 0 : i32
    %c0_i32_0 = arith.constant 0 : i32
    %c0_i32_1 = arith.constant 0 : i32
    return %c0_i32, %c0_i32_0 : i32, i32
  }
  func.func @transform_10(%arg0: i32) -> (i32, i32) {
    %c0_i32 = arith.constant 0 : i32
    %c0_i32_0 = arith.constant 0 : i32
    %c0_i32_1 = arith.constant 0 : i32
    return %c0_i32, %c0_i32_0 : i32, i32
  }
  func.func @transform_11(%arg0: i32) -> (i32, i32) {
    %c0_i32 = arith.constant 0 : i32
    %c0_i32_0 = arith.constant 0 : i32
    return %arg0, %c0_i32 : i32, i32
  }
}

</mosaic_0001>

<llo_original>
// kernel: vae_encoder_forward.1
$region0: #{vae_encoder_forward.1}
  #allocation0 [shape = 'u32[]', space=smem, size = 0x4, offset = 0x4, fixed_abs, tag = 'smem constant byte address 0x4 - core index']
  #allocation1 [shape = 'u32[72,128]{1,0:T(1,128)}', space=vmem, size = 0x9000, scoped, tag = 'internal scratch']
  %s0 = inlined_call_operand.vmem [shape: f32[14,512], index: 0, kind: input, shape index: {}]
  %s1 = inlined_call_operand.vmem [shape: f32[4,1024], index: 1, kind: input, shape index: {}]
  %s2 = inlined_call_operand.vmem [shape: s32[1,1024], index: 2, kind: input, shape index: {}]
  %s3 = inlined_call_operand.vmem [shape: s32[1,1024], index: 3, kind: input, shape index: {}]
  %s4 = inlined_call_operand.vmem [shape: s32[1024,1], index: 4, kind: input, shape index: {}]
  %s5 = inlined_call_operand.vmem [shape: f32[1,512], index: 5, kind: input, shape index: {}]
  %s6 = inlined_call_operand.vmem [shape: f32[16,18], index: 6, kind: input, shape index: {}]
  %s7 = inlined_call_operand.vmem [shape: f32[16,144], index: 7, kind: input, shape index: {}]
  %s8 = inlined_call_operand.vmem [shape: f32[16,8], index: 8, kind: input, shape index: {}]
  %s9 = inlined_call_operand.vmem [shape: f32[64,48], index: 9, kind: input, shape index: {}]
  %s10 = inlined_call_operand.vmem [shape: f32[1,64], index: 10, kind: input, shape index: {}]
  %s11 = inlined_call_operand.vmem [shape: f32[32,64], index: 11, kind: output, shape index: {}]
  %s12 = sld [smem:[#allocation0]]
  $region115: #{vae_encoder_forward.1} parent=0
    _
  %s14 = ssub.s32 1, %s12
  %s15 = scalar_select 0, %s14, %s12
  $region1: #{vae_encoder_forward.1} parent=0
    #allocation2 [shape = 'u8[16384]{0}', space=vmem, size = 0x4000, scoped, tag = 'input window, operand 0']
    loop: start=0, step=1, limit=6
    $region2: #{vae_encoder_forward.1} parent=1 // loop_pre_header
      _
    $region3: #{vae_encoder_forward.1} parent=1 // loop_header
      %s17 = sphi 0, %s21
      %p18 = scmp.ge.s32.totalorder %s17, 6
      %s27 = sphi 0, %s29
      %s30 = sphi 0, %s27
      %s31 = sphi 0, %s30
      %s47 = sphi 0, %s31
      %s53 = sphi 0, %s55
      %s56 = sphi 0, %s53
      %s57 = sphi 0, %s56
      %s73 = sphi 0, %s57
      %s79 = sphi 0, %s81
      %s82 = sphi 0, %s79
      %s83 = sphi 0, %s82
      %s99 = sphi 0, %s83
      %s105 = sphi 0, %s107
      %s108 = sphi 0, %s105
      %s109 = sphi 0, %s108
      %s125 = sphi 0, %s109
      %s131 = sphi 0, %s133
      %s134 = sphi 0, %s131
      %s135 = sphi 0, %s134
      %s151 = sphi 0, %s135
      %s157 = sphi 0, %s159
      %s160 = sphi 0, %s157
      %s161 = sphi 0, %s160
      %s177 = sphi 0, %s161
      %s181 = sphi 0, %s181
      %s183 = sphi 0, %s181
      %s184 = sphi 0, %s183
      %s198 = sphi 0, %s184
      %s202 = sphi 0, %s202
      %s204 = sphi 0, %s202
      %s205 = sphi 0, %s204
      %s219 = sphi 0, %s205
      %s223 = sphi 0, %s223
      %s225 = sphi 0, %s223
      %s226 = sphi 0, %s225
      %s240 = sphi 0, %s226
      %s244 = sphi 0, %s244
      %s246 = sphi 0, %s244
      %s247 = sphi 0, %s246
      %s261 = sphi 0, %s247
      %s265 = sphi 0, %s265
      %s267 = sphi 0, %s265
      %s268 = sphi 0, %s267
      %s282 = sphi 0, %s268
      %s288 = sphi 0, %s290
      %s291 = sphi 0, %s288
      %s292 = sphi 0, %s291
      %s308 = sphi 0, %s292
    $region4: #{vae_encoder_forward.1} parent=1 // loop_header_branch
      %20 = sbr.rel (%p18) target = $region8
    $region5: #{vae_encoder_forward.1} parent=1 // loop_body
      %s22 = ssub.s32 %s17, 1
      %s23 = ssub.s32 %s17, 2
      %s24 = sadd.s32 %s17, 1
      %s25 = ssub.s32 %s17, %s24
      %p26 = scmp.eq.s32.totalorder %s25, 0
      %s28 = sadd.s32 %s27, 1
      %s29 = scalar_select %p26, %s27, %s28
      %p32 = pneg %p26
      %p33 = scmp.eq.s32.totalorder %s17, 3
      %p34 = por %p32, %p33
      %p35 = scmp.ne.s32.totalorder %s27, %s30
      %p36 = scmp.eq.s32.totalorder %s17, 0
      %p37 = por %p35, %p36
      %p38 = scmp.ne.s32.totalorder %s27, %s30
      %p39 = scmp.eq.s32.totalorder %s22, 3
      %p40 = por %p38, %p39
      %p41 = scmp.ne.s32.totalorder %s30, %s31
      %p42 = scmp.eq.s32.totalorder %s22, 0
      %p43 = por %p41, %p42
      %p44 = scmp.ne.s32.totalorder %s30, %s31
      %p45 = scmp.eq.s32.totalorder %s23, 3
      %p46 = por %p44, %p45
      %p48 = scmp.ne.s32.totalorder %s31, %s47
      %p49 = scmp.eq.s32.totalorder %s23, 0
      %p50 = por %p48, %p49
      %s51 = ssub.s32 %s17, %s24
      %p52 = scmp.eq.s32.totalorder %s51, 0
      %s54 = sadd.s32 %s53, 1
      %s55 = scalar_select %p52, %s53, %s54
      %p58 = pneg %p52
      %p59 = scmp.eq.s32.totalorder %s17, 3
      %p60 = por %p58, %p59
      %p61 = scmp.ne.s32.totalorder %s53, %s56
      %p62 = scmp.eq.s32.totalorder %s17, 0
      %p63 = por %p61, %p62
      %p64 = scmp.ne.s32.totalorder %s53, %s56
      %p65 = scmp.eq.s32.totalorder %s22, 3
      %p66 = por %p64, %p65
      %p67 = scmp.ne.s32.totalorder %s56, %s57
      %p68 = scmp.eq.s32.totalorder %s22, 0
      %p69 = por %p67, %p68
      %p70 = scmp.ne.s32.totalorder %s56, %s57
      %p71 = scmp.eq.s32.totalorder %s23, 3
      %p72 = por %p70, %p71
      %p74 = scmp.ne.s32.totalorder %s57, %s73
      %p75 = scmp.eq.s32.totalorder %s23, 0
      %p76 = por %p74, %p75
      %s77 = ssub.s32 %s17, %s24
      %p78 = scmp.eq.s32.totalorder %s77, 0
      %s80 = sadd.s32 %s79, 1
      %s81 = scalar_select %p78, %s79, %s80
      %p84 = pneg %p78
      %p85 = scmp.eq.s32.totalorder %s17, 3
      %p86 = por %p84, %p85
      %p87 = scmp.ne.s32.totalorder %s79, %s82
      %p88 = scmp.eq.s32.totalorder %s17, 0
      %p89 = por %p87, %p88
      %p90 = scmp.ne.s32.totalorder %s79, %s82
      %p91 = scmp.eq.s32.totalorder %s22, 3
      %p92 = por %p90, %p91
      %p93 = scmp.ne.s32.totalorder %s82, %s83
      %p94 = scmp.eq.s32.totalorder %s22, 0
      %p95 = por %p93, %p94
      %p96 = scmp.ne.s32.totalorder %s82, %s83
      %p97 = scmp.eq.s32.totalorder %s23, 3
      %p98 = por %p96, %p97
      %p100 = scmp.ne.s32.totalorder %s83, %s99
      %p101 = scmp.eq.s32.totalorder %s23, 0
      %p102 = por %p100, %p101
      %s103 = ssub.s32 %s17, %s24
      %p104 = scmp.eq.s32.totalorder %s103, 0
      %s106 = sadd.s32 %s105, 1
      %s107 = scalar_select %p104, %s105, %s106
      %p110 = pneg %p104
      %p111 = scmp.eq.s32.totalorder %s17, 3
      %p112 = por %p110, %p111
      %p113 = scmp.ne.s32.totalorder %s105, %s108
      %p114 = scmp.eq.s32.totalorder %s17, 0
      %p115 = por %p113, %p114
      %p116 = scmp.ne.s32.totalorder %s105, %s108
      %p117 = scmp.eq.s32.totalorder %s22, 3
      %p118 = por %p116, %p117
      %p119 = scmp.ne.s32.totalorder %s108, %s109
      %p120 = scmp.eq.s32.totalorder %s22, 0
      %p121 = por %p119, %p120
      %p122 = scmp.ne.s32.totalorder %s108, %s109
      %p123 = scmp.eq.s32.totalorder %s23, 3
      %p124 = por %p122, %p123
      %p126 = scmp.ne.s32.totalorder %s109, %s125
      %p127 = scmp.eq.s32.totalorder %s23, 0
      %p128 = por %p126, %p127
      %s129 = ssub.s32 %s17, %s24
      %p130 = scmp.eq.s32.totalorder %s129, 0
      %s132 = sadd.s32 %s131, 1
      %s133 = scalar_select %p130, %s131, %s132
      %p136 = pneg %p130
      %p137 = scmp.eq.s32.totalorder %s17, 3
      %p138 = por %p136, %p137
      %p139 = scmp.ne.s32.totalorder %s131, %s134
      %p140 = scmp.eq.s32.totalorder %s17, 0
      %p141 = por %p139, %p140
      %p142 = scmp.ne.s32.totalorder %s131, %s134
      %p143 = scmp.eq.s32.totalorder %s22, 3
      %p144 = por %p142, %p143
      %p145 = scmp.ne.s32.totalorder %s134, %s135
      %p146 = scmp.eq.s32.totalorder %s22, 0
      %p147 = por %p145, %p146
      %p148 = scmp.ne.s32.totalorder %s134, %s135
      %p149 = scmp.eq.s32.totalorder %s23, 3
      %p150 = por %p148, %p149
      %p152 = scmp.ne.s32.totalorder %s135, %s151
      %p153 = scmp.eq.s32.totalorder %s23, 0
      %p154 = por %p152, %p153
      %s155 = ssub.s32 %s17, %s24
      %p156 = scmp.eq.s32.totalorder %s155, 0
      %s158 = sadd.s32 %s157, 1
      %s159 = scalar_select %p156, %s157, %s158
      %p162 = pneg %p156
      %p163 = scmp.eq.s32.totalorder %s17, 3
      %p164 = por %p162, %p163
      %p165 = scmp.ne.s32.totalorder %s157, %s160
      %p166 = scmp.eq.s32.totalorder %s17, 0
      %p167 = por %p165, %p166
      %p168 = scmp.ne.s32.totalorder %s157, %s160
      %p169 = scmp.eq.s32.totalorder %s22, 3
      %p170 = por %p168, %p169
      %p171 = scmp.ne.s32.totalorder %s160, %s161
      %p172 = scmp.eq.s32.totalorder %s22, 0
      %p173 = por %p171, %p172
      %p174 = scmp.ne.s32.totalorder %s160, %s161
      %p175 = scmp.eq.s32.totalorder %s23, 3
      %p176 = por %p174, %p175
      %p178 = scmp.ne.s32.totalorder %s161, %s177
      %p179 = scmp.eq.s32.totalorder %s23, 0
      %p180 = por %p178, %p179
      %s182 = sadd.s32 %s181, 1
      %p185 = scmp.eq.s32.totalorder %s17, 3
      %p186 = scmp.ne.s32.totalorder %s181, %s183
      %p187 = scmp.eq.s32.totalorder %s17, 0
      %p188 = por %p186, %p187
      %p189 = scmp.ne.s32.totalorder %s181, %s183
      %p190 = scmp.eq.s32.totalorder %s22, 3
      %p191 = por %p189, %p190
      %p192 = scmp.ne.s32.totalorder %s183, %s184
      %p193 = scmp.eq.s32.totalorder %s22, 0
      %p194 = por %p192, %p193
      %p195 = scmp.ne.s32.totalorder %s183, %s184
      %p196 = scmp.eq.s32.totalorder %s23, 3
      %p197 = por %p195, %p196
      %p199 = scmp.ne.s32.totalorder %s184, %s198
      %p200 = scmp.eq.s32.totalorder %s23, 0
      %p201 = por %p199, %p200
      %s203 = sadd.s32 %s202, 1
      %p206 = scmp.eq.s32.totalorder %s17, 3
      %p207 = scmp.ne.s32.totalorder %s202, %s204
      %p208 = scmp.eq.s32.totalorder %s17, 0
      %p209 = por %p207, %p208
      %p210 = scmp.ne.s32.totalorder %s202, %s204
      %p211 = scmp.eq.s32.totalorder %s22, 3
      %p212 = por %p210, %p211
      %p213 = scmp.ne.s32.totalorder %s204, %s205
      %p214 = scmp.eq.s32.totalorder %s22, 0
      %p215 = por %p213, %p214
      %p216 = scmp.ne.s32.totalorder %s204, %s205
      %p217 = scmp.eq.s32.totalorder %s23, 3
      %p218 = por %p216, %p217
      %p220 = scmp.ne.s32.totalorder %s205, %s219
      %p221 = scmp.eq.s32.totalorder %s23, 0
      %p222 = por %p220, %p221
      %s224 = sadd.s32 %s223, 1
      %p227 = scmp.eq.s32.totalorder %s17, 3
      %p228 = scmp.ne.s32.totalorder %s223, %s225
      %p229 = scmp.eq.s32.totalorder %s17, 0
      %p230 = por %p228, %p229
      %p231 = scmp.ne.s32.totalorder %s223, %s225
      %p232 = scmp.eq.s32.totalorder %s22, 3
      %p233 = por %p231, %p232
      %p234 = scmp.ne.s32.totalorder %s225, %s226
      %p235 = scmp.eq.s32.totalorder %s22, 0
      %p236 = por %p234, %p235
      %p237 = scmp.ne.s32.totalorder %s225, %s226
      %p238 = scmp.eq.s32.totalorder %s23, 3
      %p239 = por %p237, %p238
      %p241 = scmp.ne.s32.totalorder %s226, %s240
      %p242 = scmp.eq.s32.totalorder %s23, 0
      %p243 = por %p241, %p242
      %s245 = sadd.s32 %s244, 1
      %p248 = scmp.eq.s32.totalorder %s17, 3
      %p249 = scmp.ne.s32.totalorder %s244, %s246
      %p250 = scmp.eq.s32.totalorder %s17, 0
      %p251 = por %p249, %p250
      %p252 = scmp.ne.s32.totalorder %s244, %s246
      %p253 = scmp.eq.s32.totalorder %s22, 3
      %p254 = por %p252, %p253
      %p255 = scmp.ne.s32.totalorder %s246, %s247
      %p256 = scmp.eq.s32.totalorder %s22, 0
      %p257 = por %p255, %p256
      %p258 = scmp.ne.s32.totalorder %s246, %s247
      %p259 = scmp.eq.s32.totalorder %s23, 3
      %p260 = por %p258, %p259
      %p262 = scmp.ne.s32.totalorder %s247, %s261
      %p263 = scmp.eq.s32.totalorder %s23, 0
      %p264 = por %p262, %p263
      %s266 = sadd.s32 %s265, 1
      %p269 = scmp.eq.s32.totalorder %s17, 3
      %p270 = scmp.ne.s32.totalorder %s265, %s267
      %p271 = scmp.eq.s32.totalorder %s17, 0
      %p272 = por %p270, %p271
      %p273 = scmp.ne.s32.totalorder %s265, %s267
      %p274 = scmp.eq.s32.totalorder %s22, 3
      %p275 = por %p273, %p274
      %p276 = scmp.ne.s32.totalorder %s267, %s268
      %p277 = scmp.eq.s32.totalorder %s22, 0
      %p278 = por %p276, %p277
      %p279 = scmp.ne.s32.totalorder %s267, %s268
      %p280 = scmp.eq.s32.totalorder %s23, 3
      %p281 = por %p279, %p280
      %p283 = scmp.ne.s32.totalorder %s268, %s282
      %p284 = scmp.eq.s32.totalorder %s23, 0
      %p285 = por %p283, %p284
      %s286 = ssub.s32 %s17, %s24
      %p287 = scmp.eq.s32.totalorder %s286, 0
      %s289 = sadd.s32 %s288, 1
      %s290 = scalar_select %p287, %s288, %s289
      %p293 = pneg %p287
      %p294 = scmp.eq.s32.totalorder %s17, 3
      %p295 = por %p293, %p294
      %p296 = scmp.ne.s32.totalorder %s288, %s291
      %p297 = scmp.eq.s32.totalorder %s17, 0
      %p298 = por %p296, %p297
      %p299 = scmp.ne.s32.totalorder %s288, %s291
      %p300 = scmp.eq.s32.totalorder %s22, 3
      %p301 = por %p299, %p300
      %p302 = scmp.ne.s32.totalorder %s291, %s292
      %p303 = scmp.eq.s32.totalorder %s22, 0
      %p304 = por %p302, %p303
      %p305 = scmp.ne.s32.totalorder %s291, %s292
      %p306 = scmp.eq.s32.totalorder %s23, 3
      %p307 = por %p305, %p306
      %p309 = scmp.ne.s32.totalorder %s292, %s308
      %p310 = scmp.eq.s32.totalorder %s23, 0
      %p311 = por %p309, %p310
      %p312 = scmp.le.s32.totalorder 1, %s17
      %p313 = scmp.lt.s32.totalorder %s17, 5
      %p314 = pnand %p312, %p313
      %p315 = pneg %p314
      // Predicated region
      $region9: #{vae_encoder_forward.1} parent=5 // pred_check
        _
      $region10: #{vae_encoder_forward.1} parent=5 // pred_check_branch
        %317 = sbr.rel (%p314) target = $region12
      $region11: #{vae_encoder_forward.1} parent=5 // pred_region
        %s318 = ssub.s32 %s17, 1
        // Predicated region
        $region13: #{vae_encoder_forward.1} parent=11 // pred_check
          %p319 = pneg %p194
        $region14: #{vae_encoder_forward.1} parent=11 // pred_check_branch
          %321 = sbr.rel (%p319) target = $region16
        $region15: #{vae_encoder_forward.1} parent=11 // pred_region
          _
        $region16: #{vae_encoder_forward.1} parent=11 // pred_fallthru
          _
        // Predicated region
        $region17: #{vae_encoder_forward.1} parent=11 // pred_check
          %p322 = pneg %p215
        $region18: #{vae_encoder_forward.1} parent=11 // pred_check_branch
          %324 = sbr.rel (%p322) target = $region20
        $region19: #{vae_encoder_forward.1} parent=11 // pred_region
          _
        $region20: #{vae_encoder_forward.1} parent=11 // pred_fallthru
          _
        // Predicated region
        $region21: #{vae_encoder_forward.1} parent=11 // pred_check
          %p325 = pneg %p236
        $region22: #{vae_encoder_forward.1} parent=11 // pred_check_branch
          %327 = sbr.rel (%p325) target = $region24
        $region23: #{vae_encoder_forward.1} parent=11 // pred_region
          _
        $region24: #{vae_encoder_forward.1} parent=11 // pred_fallthru
          _
        // Predicated region
        $region25: #{vae_encoder_forward.1} parent=11 // pred_check
          %p328 = pneg %p257
        $region26: #{vae_encoder_forward.1} parent=11 // pred_check_branch
          %330 = sbr.rel (%p328) target = $region28
        $region27: #{vae_encoder_forward.1} parent=11 // pred_region
          _
        $region28: #{vae_encoder_forward.1} parent=11 // pred_fallthru
          _
        // Predicated region
        $region29: #{vae_encoder_forward.1} parent=11 // pred_check
          %p331 = pneg %p278
        $region30: #{vae_encoder_forward.1} parent=11 // pred_check_branch
          %333 = sbr.rel (%p331) target = $region32
        $region31: #{vae_encoder_forward.1} parent=11 // pred_region
          _
        $region32: #{vae_encoder_forward.1} parent=11 // pred_fallthru
          _
      $region12: #{vae_encoder_forward.1} parent=5 // pred_fallthru
        _
      %p334 = scmp.lt.s32.totalorder %s17, 4
      // Predicated region
      $region33: #{vae_encoder_forward.1} parent=5 // pred_check
        %p335 = pneg %p334
      $region34: #{vae_encoder_forward.1} parent=5 // pred_check_branch
        %337 = sbr.rel (%p335) target = $region36
      $region35: #{vae_encoder_forward.1} parent=5 // pred_region
        // Predicated region
        $region37: #{vae_encoder_forward.1} parent=35 // pred_check
          %p338 = pneg %p37
        $region38: #{vae_encoder_forward.1} parent=35 // pred_check_branch
          %340 = sbr.rel (%p338) target = $region40
        $region39: #{vae_encoder_forward.1} parent=35 // pred_region
          %s341 = sand.u32 %s27, 1
          %s342 = sand.u32 %s27, 1
          %s343 = smul.addr %s342, 16
          %s344 = scalar_lea.vmem [#allocation2], %s343
          %s345 = smul.addr %s17, 8
          %s346 = scalar_lea.vmem %s0, %s345
          // Predicated region
          $region41: #{vae_encoder_forward.1} parent=39 // pred_check
            _
          $region42: #{vae_encoder_forward.1} parent=39 // pred_check_branch
            %348 = sbr.rel (0) target = $region44
          $region43: #{vae_encoder_forward.1} parent=39 // pred_region
            // Predicated region
            $region45: #{vae_encoder_forward.1} parent=43 // pred_check
              _
            $region46: #{vae_encoder_forward.1} parent=43 // pred_check_branch
              %350 = sbr.rel (0) target = $region48
            $region47: #{vae_encoder_forward.1} parent=43 // pred_region
              // Predicated region
              $region60: #{vae_encoder_forward.1} parent=47 // pred_check
                _
              $region61: #{vae_encoder_forward.1} parent=47 // pred_check_branch
                %368 = sbr.rel (0) target = $region63
              $region62: #{vae_encoder_forward.1} parent=47 // pred_region
                loop: start=0, step=1, limit=1
                $region64: #{vae_encoder_forward.1} parent=62 // loop_pre_header
                  _
                $region65: #{vae_encoder_forward.1} parent=62 // loop_header
                  %s370 = sphi 0, %s374
                  %p371 = scmp.ge.s32.totalorder %s370, 1
                  %s375 = sphi %s346, %s346
                  %s376 = sphi %s344, %s344
                $region66: #{vae_encoder_forward.1} parent=62 // loop_header_branch
                  %373 = sbr.rel (%p371) target = $region70
                $region67: #{vae_encoder_forward.1} parent=62 // loop_body
                  %v377 = vld [vmem:[%s375] sm:$0xff]
                  %378 = vst [vmem:[%s376] sm:$0xff] %v377
                  %v379 = vld [vmem:[%s375 + $0x20] sm:$0xff]
                  %380 = vst [vmem:[%s376 + $0x8] sm:$0xff] %v379
                $region68: #{vae_encoder_forward.1} parent=62 // loop_footer
                  %s374 = sadd.s32 1, %s370
                $region69: #{vae_encoder_forward.1} parent=62 // loop_footer_branch
                  %369 = sbr.rel target = $region65
                $region70: #{vae_encoder_forward.1} parent=62 // loop_exit
                  _
              $region63: #{vae_encoder_forward.1} parent=47 // pred_fallthru
                _
              // Predicated region
              $region71: #{vae_encoder_forward.1} parent=47 // pred_check
                _
              $region72: #{vae_encoder_forward.1} parent=47 // pred_check_branch
                %382 = sbr.rel target = $region74
              $region73: #{vae_encoder_forward.1} parent=47 // pred_region
                _
              $region74: #{vae_encoder_forward.1} parent=47 // pred_fallthru
                _
            $region48: #{vae_encoder_forward.1} parent=43 // pred_fallthru
              _
            // Predicated region
            $region49: #{vae_encoder_forward.1} parent=43 // pred_check
              _
            $region50: #{vae_encoder_forward.1} parent=43 // pred_check_branch
              %352 = sbr.rel target = $region52
            $region51: #{vae_encoder_forward.1} parent=43 // pred_region
              %s354 = ssub.s32 256, 1
              loop: start=0, step=1, limit=1
              $region53: #{vae_encoder_forward.1} parent=51 // loop_pre_header
                _
              $region54: #{vae_encoder_forward.1} parent=51 // loop_header
                %s356 = sphi 0, %s360
                %p357 = scmp.ge.s32.totalorder %s356, 1
                %s361 = sphi %s346, %s346
                %s362 = sphi %s344, %s344
              $region55: #{vae_encoder_forward.1} parent=51 // loop_header_branch
                %359 = sbr.rel (%p357) target = $region59
              $region56: #{vae_encoder_forward.1} parent=51 // loop_body
                %v363 = vld [vmem:[%s361] sm:%s354]
                %364 = vst [vmem:[%s362] sm:%s354] %v363
                %v365 = vld [vmem:[%s361 + $0x20] sm:%s354]
                %366 = vst [vmem:[%s362 + $0x8] sm:%s354] %v365
              $region57: #{vae_encoder_forward.1} parent=51 // loop_footer
                %s360 = sadd.s32 1, %s356
              $region58: #{vae_encoder_forward.1} parent=51 // loop_footer_branch
                %355 = sbr.rel target = $region54
              $region59: #{vae_encoder_forward.1} parent=51 // loop_exit
                _
            $region52: #{vae_encoder_forward.1} parent=43 // pred_fallthru
              _
          $region44: #{vae_encoder_forward.1} parent=39 // pred_fallthru
            _
          %383 = vnop
        $region40: #{vae_encoder_forward.1} parent=35 // pred_fallthru
          _
        // Predicated region
        $region75: #{vae_encoder_forward.1} parent=35 // pred_check
          %p384 = pneg %p63
        $region76: #{vae_encoder_forward.1} parent=35 // pred_check_branch
          %386 = sbr.rel (%p384) target = $region78
        $region77: #{vae_encoder_forward.1} parent=35 // pred_region
          %s387 = smul.u32 2, %s17
          %p388 = scmp.lt.s32.totalorder %s387, 7
          %s389 = scalar_select %p388, %s387, 7
          %s390 = smul.addr %s389, 4
          %s391 = scalar_lea.vmem %s1, %s390
          %s392 = smul.u32 2, %s17
        $region78: #{vae_encoder_forward.1} parent=35 // pred_fallthru
          _
        // Predicated region
        $region79: #{vae_encoder_forward.1} parent=35 // pred_check
          %p393 = pneg %p89
        $region80: #{vae_encoder_forward.1} parent=35 // pred_check_branch
          %395 = sbr.rel (%p393) target = $region82
        $region81: #{vae_encoder_forward.1} parent=35 // pred_region
          %s396 = smul.u32 2, %s17
          %p397 = scmp.lt.s32.totalorder %s396, 7
          %s398 = scalar_select %p397, %s396, 7
          %s399 = scalar_lea.vmem %s2, %s398
          %s400 = smul.u32 2, %s17
        $region82: #{vae_encoder_forward.1} parent=35 // pred_fallthru
          _
        // Predicated region
        $region83: #{vae_encoder_forward.1} parent=35 // pred_check
          %p401 = pneg %p115
        $region84: #{vae_encoder_forward.1} parent=35 // pred_check_branch
          %403 = sbr.rel (%p401) target = $region86
        $region85: #{vae_encoder_forward.1} parent=35 // pred_region
          %s404 = smul.u32 2, %s17
          %p405 = scmp.lt.s32.totalorder %s404, 7
          %s406 = scalar_select %p405, %s404, 7
          %s407 = scalar_lea.vmem %s3, %s406
          %s408 = smul.u32 2, %s17
        $region86: #{vae_encoder_forward.1} parent=35 // pred_fallthru
          _
        // Predicated region
        $region87: #{vae_encoder_forward.1} parent=35 // pred_check
          %p409 = pneg %p141
        $region88: #{vae_encoder_forward.1} parent=35 // pred_check_branch
          %411 = sbr.rel (%p409) target = $region90
        $region89: #{vae_encoder_forward.1} parent=35 // pred_region
          %s412 = smul.u32 32, %s17
          %p413 = scmp.lt.s32.totalorder %s412, 127
          %s414 = scalar_select %p413, %s412, 127
          %s415 = smul.addr %s414, 8
          %s416 = scalar_lea.vmem %s4, %s415
          %s417 = smul.u32 32, %s17
        $region90: #{vae_encoder_forward.1} parent=35 // pred_fallthru
          _
        // Predicated region
        $region91: #{vae_encoder_forward.1} parent=35 // pred_check
          %p418 = pneg %p167
        $region92: #{vae_encoder_forward.1} parent=35 // pred_check_branch
          %420 = sbr.rel (%p418) target = $region94
        $region93: #{vae_encoder_forward.1} parent=35 // pred_region
          %p421 = scmp.lt.s32.totalorder %s17, 3
          %s422 = scalar_select %p421, %s17, 3
          %s423 = scalar_lea.vmem %s5, %s422
        $region94: #{vae_encoder_forward.1} parent=35 // pred_fallthru
          _
      $region36: #{vae_encoder_forward.1} parent=5 // pred_fallthru
        _
      %p424 = scmp.le.s32.totalorder 1, %s17
      %p425 = scmp.lt.s32.totalorder %s17, 5
      %p426 = pnand %p424, %p425
      %p427 = pneg %p426
      // Predicated region
      $region95: #{vae_encoder_forward.1} parent=5 // pred_check
        _
      $region96: #{vae_encoder_forward.1} parent=5 // pred_check_branch
        %429 = sbr.rel (%p426) target = $region98
      $region97: #{vae_encoder_forward.1} parent=5 // pred_region
        %s430 = ssub.s32 %s17, 1
        %s431 = sand.u32 %s30, 1
        %s432 = sand.u32 %s30, 1
        %s433 = smul.addr %s432, 16
        %s434 = scalar_lea.vmem [#allocation2], %s433
        // Predicated region
        $region99: #{vae_encoder_forward.1} parent=97 // pred_check
          %p435 = pneg %p43
        $region100: #{vae_encoder_forward.1} parent=97 // pred_check_branch
          %437 = sbr.rel (%p435) target = $region102
        $region101: #{vae_encoder_forward.1} parent=97 // pred_region
          _
        $region102: #{vae_encoder_forward.1} parent=97 // pred_fallthru
          _
        %s438 = sand.u32 %s30, 1
        %s439 = sand.u32 %s30, 1
        %s440 = smul.addr %s439, 16
        %s441 = scalar_lea.vmem [#allocation2], %s440
        %p442 = pneg %p43
        %p443 = pneg %p40
        %s444 = smul.u32 2, %s22
        %p445 = scmp.lt.s32.totalorder %s444, 7
        %s446 = scalar_select %p445, %s444, 7
        %s447 = smul.addr %s446, 4
        %s448 = scalar_lea.vmem %s1, %s447
        %p449 = pneg %p69
        %p450 = pneg %p66
        %s451 = smul.u32 2, %s22
        %p452 = scmp.lt.s32.totalorder %s451, 7
        %s453 = scalar_select %p452, %s451, 7
        %s454 = scalar_lea.vmem %s2, %s453
        %p455 = pneg %p95
        %p456 = pneg %p92
        %s457 = smul.u32 2, %s22
        %p458 = scmp.lt.s32.totalorder %s457, 7
        %s459 = scalar_select %p458, %s457, 7
        %s460 = scalar_lea.vmem %s3, %s459
        %p461 = pneg %p121
        %p462 = pneg %p118
        %s463 = smul.u32 32, %s22
        %p464 = scmp.lt.s32.totalorder %s463, 127
        %s465 = scalar_select %p464, %s463, 127
        %s466 = smul.addr %s465, 8
        %s467 = scalar_lea.vmem %s4, %s466
        %p468 = pneg %p147
        %p469 = pneg %p144
        %p470 = scmp.lt.s32.totalorder %s22, 3
        %s471 = scalar_select %p470, %s22, 3
        %s472 = scalar_lea.vmem %s5, %s471
        %p473 = pneg %p173
        %p474 = pneg %p170
        %p475 = pneg %p194
        %p476 = pneg %p191
        %p477 = pneg %p215
        %p478 = pneg %p212
        %p479 = pneg %p236
        %p480 = pneg %p233
        %p481 = pneg %p257
        %p482 = pneg %p254
        %p483 = pneg %p278
        %p484 = pneg %p275
        %p485 = pneg %p304
        %p486 = pneg %p301
        %p487 = scmp.lt.s32.totalorder %s22, 3
        %s488 = scalar_select %p487, %s22, 3
        %s489 = smul.addr %s488, 8
        %s490 = scalar_lea.vmem %s11, %s489
        %s491 = smul.u32 2, %s22
        %p492 = scmp.lt.s32.totalorder %s491, 7
        %s493 = scalar_select %p492, %s491, 7
        %s494 = smul.addr %s493, 4
        %s495 = scalar_lea.vmem %s1, %s494
        %s496 = smul.u32 2, %s22
        %s497 = smul.u32 2, %s22
        %p498 = scmp.lt.s32.totalorder %s497, 7
        %s499 = scalar_select %p498, %s497, 7
        %s500 = scalar_lea.vmem %s2, %s499
        %s501 = smul.u32 2, %s22
        %s502 = smul.u32 2, %s22
        %p503 = scmp.lt.s32.totalorder %s502, 7
        %s504 = scalar_select %p503, %s502, 7
        %s505 = scalar_lea.vmem %s3, %s504
        %s506 = smul.u32 2, %s22
        %s507 = smul.u32 32, %s22
        %p508 = scmp.lt.s32.totalorder %s507, 127
        %s509 = scalar_select %p508, %s507, 127
        %s510 = smul.addr %s509, 8
        %s511 = scalar_lea.vmem %s4, %s510
        %s512 = smul.u32 32, %s22
        %p513 = scmp.lt.s32.totalorder %s22, 3
        %s514 = scalar_select %p513, %s22, 3
        %s515 = scalar_lea.vmem %s5, %s514
        %p516 = scmp.lt.s32.totalorder %s22, 3
        %s517 = scalar_select %p516, %s22, 3
        %s518 = smul.addr %s517, 8
        %s519 = scalar_lea.vmem %s11, %s518
        %v520 = vld [vmem:[%s6] sm:$0xff]
        %v521 = vld [vmem:[%s6 + $0x8] sm:$0xff]
        %v522 = vld [vmem:[%s7] sm:$0xff]
        %v523 = vld [vmem:[%s7 + $0x8] sm:$0xff]
        %v524 = vld [vmem:[%s7 + $0x10] sm:$0xff]
        %v525 = vld [vmem:[%s7 + $0x18] sm:$0xff]
        %v526 = vld [vmem:[%s8] sm:$0xff]
        %v527 = vld [vmem:[%s8 + $0x8] sm:$0xff]
        %v528 = vld [vmem:[%s9] sm:$0xff]
        %v529 = vld [vmem:[%s9 + $0x8] sm:$0xff]
        %v530 = vld [vmem:[%s9 + $0x10] sm:$0xff]
        %v531 = vld [vmem:[%s9 + $0x18] sm:$0xff]
        %v532 = vld [vmem:[%s9 + $0x20] sm:$0xff]
        %v533 = vld [vmem:[%s9 + $0x28] sm:$0xff]
        %v534 = vld [vmem:[%s9 + $0x30] sm:$0xff]
        %v535 = vld [vmem:[%s9 + $0x38] sm:$0xff]
        %v536 = vld [vmem:[%s10] sm:$0x1]
        %v537 = vld [vmem:[%s500] sm:$0x3]
        %v538 = vld [vmem:[%s505] sm:$0x3]
        %v539 = vld [vmem:[%s511] sm:$0xff]
        %v540 = vld [vmem:[%s511 + $0x8] sm:$0xff]
        %v541 = vld [vmem:[%s511 + $0x10] sm:$0xff]
        %v542 = vld [vmem:[%s511 + $0x18] sm:$0xff]
        %v543 = vld [vmem:[%s511 + $0x20] sm:$0xff]
        %v544 = vld [vmem:[%s511 + $0x28] sm:$0xff]
        %v545 = vld [vmem:[%s511 + $0x30] sm:$0xff]
        %v546 = vld [vmem:[%s511 + $0x38] sm:$0xff]
        %v547 = vld [vmem:[%s511 + $0x40] sm:$0xff]
        %v548 = vld [vmem:[%s511 + $0x48] sm:$0xff]
        %v549 = vld [vmem:[%s511 + $0x50] sm:$0xff]
        %v550 = vld [vmem:[%s511 + $0x58] sm:$0xff]
        %v551 = vld [vmem:[%s511 + $0x60] sm:$0xff]
        %v552 = vld [vmem:[%s511 + $0x68] sm:$0xff]
        %v553 = vld [vmem:[%s511 + $0x70] sm:$0xff]
        %v554 = vld [vmem:[%s511 + $0x78] sm:$0xff]
        %v555 = vld [vmem:[%s511 + $0x80] sm:$0xff]
        %v556 = vld [vmem:[%s511 + $0x88] sm:$0xff]
        %v557 = vld [vmem:[%s511 + $0x90] sm:$0xff]
        %v558 = vld [vmem:[%s511 + $0x98] sm:$0xff]
        %v559 = vld [vmem:[%s511 + $0xa0] sm:$0xff]
        %v560 = vld [vmem:[%s511 + $0xa8] sm:$0xff]
        %v561 = vld [vmem:[%s511 + $0xb0] sm:$0xff]
        %v562 = vld [vmem:[%s511 + $0xb8] sm:$0xff]
        %v563 = vld [vmem:[%s511 + $0xc0] sm:$0xff]
        %v564 = vld [vmem:[%s511 + $0xc8] sm:$0xff]
        %v565 = vld [vmem:[%s511 + $0xd0] sm:$0xff]
        %v566 = vld [vmem:[%s511 + $0xd8] sm:$0xff]
        %v567 = vld [vmem:[%s511 + $0xe0] sm:$0xff]
        %v568 = vld [vmem:[%s511 + $0xe8] sm:$0xff]
        %v569 = vld [vmem:[%s511 + $0xf0] sm:$0xff]
        %v570 = vld [vmem:[%s511 + $0xf8] sm:$0xff]
        %v571 = vlaneseq
        %v572 = vshrl.u32 %v571, 7
        %v573 = vadd.s32 %v572, 8
        %v574 = vadd.s32 %v572, 16
        %v575 = vadd.s32 %v572, 24
        %v576 = vadd.s32 %v572, 32
        %v577 = vadd.s32 %v572, 40
        %v578 = vadd.s32 %v572, 48
        %v579 = vadd.s32 %v572, 56
        %v580 = vadd.s32 %v572, 64
        %v581 = vadd.s32 %v572, 72
        %v582 = vadd.s32 %v572, 80
        %v583 = vadd.s32 %v572, 88
        %v584 = vadd.s32 %v572, 96
        %v585 = vadd.s32 %v572, 104
        %v586 = vadd.s32 %v572, 112
        %v587 = vadd.s32 %v572, 120
        %v588 = vperm.slane %v537, 0
        %v589 = vperm.slane %v537, 1
        %vm590 = vcmp.eq.s32.totalorder %v572, %v588
        %vm591 = vcmp.eq.s32.totalorder %v572, %v589
        %vm592 = vcmp.eq.s32.totalorder %v573, %v588
        %vm593 = vcmp.eq.s32.totalorder %v573, %v589
        %vm594 = vcmp.eq.s32.totalorder %v574, %v588
        %vm595 = vcmp.eq.s32.totalorder %v574, %v589
        %vm596 = vcmp.eq.s32.totalorder %v575, %v588
        %vm597 = vcmp.eq.s32.totalorder %v575, %v589
        %vm598 = vcmp.eq.s32.totalorder %v576, %v588
        %vm599 = vcmp.eq.s32.totalorder %v576, %v589
        %vm600 = vcmp.eq.s32.totalorder %v577, %v588
        %vm601 = vcmp.eq.s32.totalorder %v577, %v589
        %vm602 = vcmp.eq.s32.totalorder %v578, %v588
        %vm603 = vcmp.eq.s32.totalorder %v578, %v589
        %vm604 = vcmp.eq.s32.totalorder %v579, %v588
        %vm605 = vcmp.eq.s32.totalorder %v579, %v589
        %vm606 = vcmp.eq.s32.totalorder %v580, %v588
        %vm607 = vcmp.eq.s32.totalorder %v580, %v589
        %vm608 = vcmp.eq.s32.totalorder %v581, %v588
        %vm609 = vcmp.eq.s32.totalorder %v581, %v589
        %vm610 = vcmp.eq.s32.totalorder %v582, %v588
        %vm611 = vcmp.eq.s32.totalorder %v582, %v589
        %vm612 = vcmp.eq.s32.totalorder %v583, %v588
        %vm613 = vcmp.eq.s32.totalorder %v583, %v589
        %vm614 = vcmp.eq.s32.totalorder %v584, %v588
        %vm615 = vcmp.eq.s32.totalorder %v584, %v589
        %vm616 = vcmp.eq.s32.totalorder %v585, %v588
        %vm617 = vcmp.eq.s32.totalorder %v585, %v589
        %vm618 = vcmp.eq.s32.totalorder %v586, %v588
        %vm619 = vcmp.eq.s32.totalorder %v586, %v589
        %vm620 = vcmp.eq.s32.totalorder %v587, %v588
        %vm621 = vcmp.eq.s32.totalorder %v587, %v589
        %v622 = vsel %vm590, 1, 0
        %v623 = vsel %vm591, 1, 0
        %v624 = vsel %vm592, 1, 0
        %v625 = vsel %vm593, 1, 0
        %v626 = vsel %vm594, 1, 0
        %v627 = vsel %vm595, 1, 0
        %v628 = vsel %vm596, 1, 0
        %v629 = vsel %vm597, 1, 0
        %v630 = vsel %vm598, 1, 0
        %v631 = vsel %vm599, 1, 0
        %v632 = vsel %vm600, 1, 0
        %v633 = vsel %vm601, 1, 0
        %v634 = vsel %vm602, 1, 0
        %v635 = vsel %vm603, 1, 0
        %v636 = vsel %vm604, 1, 0
        %v637 = vsel %vm605, 1, 0
        %v638 = vsel %vm606, 1, 0
        %v639 = vsel %vm607, 1, 0
        %v640 = vsel %vm608, 1, 0
        %v641 = vsel %vm609, 1, 0
        %v642 = vsel %vm610, 1, 0
        %v643 = vsel %vm611, 1, 0
        %v644 = vsel %vm612, 1, 0
        %v645 = vsel %vm613, 1, 0
        %v646 = vsel %vm614, 1, 0
        %v647 = vsel %vm615, 1, 0
        %v648 = vsel %vm616, 1, 0
        %v649 = vsel %vm617, 1, 0
        %v650 = vsel %vm618, 1, 0
        %v651 = vsel %vm619, 1, 0
        %v652 = vsel %vm620, 1, 0
        %v653 = vsel %vm621, 1, 0
        %v654 = vcvt.s32.f32 %v622
        %v655 = vcvt.s32.f32 %v623
        %v656 = vcvt.s32.f32 %v624
        %v657 = vcvt.s32.f32 %v625
        %v658 = vcvt.s32.f32 %v626
        %v659 = vcvt.s32.f32 %v627
        %v660 = vcvt.s32.f32 %v628
        %v661 = vcvt.s32.f32 %v629
        %v662 = vcvt.s32.f32 %v630
        %v663 = vcvt.s32.f32 %v631
        %v664 = vcvt.s32.f32 %v632
        %v665 = vcvt.s32.f32 %v633
        %v666 = vcvt.s32.f32 %v634
        %v667 = vcvt.s32.f32 %v635
        %v668 = vcvt.s32.f32 %v636
        %v669 = vcvt.s32.f32 %v637
        %v670 = vcvt.s32.f32 %v638
        %v671 = vcvt.s32.f32 %v639
        %v672 = vcvt.s32.f32 %v640
        %v673 = vcvt.s32.f32 %v641
        %v674 = vcvt.s32.f32 %v642
        %v675 = vcvt.s32.f32 %v643
        %v676 = vcvt.s32.f32 %v644
        %v677 = vcvt.s32.f32 %v645
        %v678 = vcvt.s32.f32 %v646
        %v679 = vcvt.s32.f32 %v647
        %v680 = vcvt.s32.f32 %v648
        %v681 = vcvt.s32.f32 %v649
        %v682 = vcvt.s32.f32 %v650
        %v683 = vcvt.s32.f32 %v651
        %v684 = vcvt.s32.f32 %v652
        %v685 = vcvt.s32.f32 %v653
        %v686 = vperm.slane %v538, 0
        %v687 = vperm.slane %v538, 1
        %vm688 = vcmp.eq.s32.totalorder %v572, %v686
        %vm689 = vcmp.eq.s32.totalorder %v572, %v687
        %vm690 = vcmp.eq.s32.totalorder %v573, %v686
        %vm691 = vcmp.eq.s32.totalorder %v573, %v687
        %vm692 = vcmp.eq.s32.totalorder %v574, %v686
        %vm693 = vcmp.eq.s32.totalorder %v574, %v687
        %vm694 = vcmp.eq.s32.totalorder %v575, %v686
        %vm695 = vcmp.eq.s32.totalorder %v575, %v687
        %vm696 = vcmp.eq.s32.totalorder %v576, %v686
        %vm697 = vcmp.eq.s32.totalorder %v576, %v687
        %vm698 = vcmp.eq.s32.totalorder %v577, %v686
        %vm699 = vcmp.eq.s32.totalorder %v577, %v687
        %vm700 = vcmp.eq.s32.totalorder %v578, %v686
        %vm701 = vcmp.eq.s32.totalorder %v578, %v687
        %vm702 = vcmp.eq.s32.totalorder %v579, %v686
        %vm703 = vcmp.eq.s32.totalorder %v579, %v687
        %vm704 = vcmp.eq.s32.totalorder %v580, %v686
        %vm705 = vcmp.eq.s32.totalorder %v580, %v687
        %vm706 = vcmp.eq.s32.totalorder %v581, %v686
        %vm707 = vcmp.eq.s32.totalorder %v581, %v687
        %vm708 = vcmp.eq.s32.totalorder %v582, %v686
        %vm709 = vcmp.eq.s32.totalorder %v582, %v687
        %vm710 = vcmp.eq.s32.totalorder %v583, %v686
        %vm711 = vcmp.eq.s32.totalorder %v583, %v687
        %vm712 = vcmp.eq.s32.totalorder %v584, %v686
        %vm713 = vcmp.eq.s32.totalorder %v584, %v687
        %vm714 = vcmp.eq.s32.totalorder %v585, %v686
        %vm715 = vcmp.eq.s32.totalorder %v585, %v687
        %vm716 = vcmp.eq.s32.totalorder %v586, %v686
        %vm717 = vcmp.eq.s32.totalorder %v586, %v687
        %vm718 = vcmp.eq.s32.totalorder %v587, %v686
        %vm719 = vcmp.eq.s32.totalorder %v587, %v687
        %v720 = vsel %vm688, 1, 0
        %v721 = vsel %vm689, 1, 0
        %v722 = vsel %vm690, 1, 0
        %v723 = vsel %vm691, 1, 0
        %v724 = vsel %vm692, 1, 0
        %v725 = vsel %vm693, 1, 0
        %v726 = vsel %vm694, 1, 0
        %v727 = vsel %vm695, 1, 0
        %v728 = vsel %vm696, 1, 0
        %v729 = vsel %vm697, 1, 0
        %v730 = vsel %vm698, 1, 0
        %v731 = vsel %vm699, 1, 0
        %v732 = vsel %vm700, 1, 0
        %v733 = vsel %vm701, 1, 0
        %v734 = vsel %vm702, 1, 0
        %v735 = vsel %vm703, 1, 0
        %v736 = vsel %vm704, 1, 0
        %v737 = vsel %vm705, 1, 0
        %v738 = vsel %vm706, 1, 0
        %v739 = vsel %vm707, 1, 0
        %v740 = vsel %vm708, 1, 0
        %v741 = vsel %vm709, 1, 0
        %v742 = vsel %vm710, 1, 0
        %v743 = vsel %vm711, 1, 0
        %v744 = vsel %vm712, 1, 0
        %v745 = vsel %vm713, 1, 0
        %v746 = vsel %vm714, 1, 0
        %v747 = vsel %vm715, 1, 0
        %v748 = vsel %vm716, 1, 0
        %v749 = vsel %vm717, 1, 0
        %v750 = vsel %vm718, 1, 0
        %v751 = vsel %vm719, 1, 0
        %v752 = vcvt.s32.f32 %v720
        %v753 = vcvt.s32.f32 %v721
        %v754 = vcvt.s32.f32 %v722
        %v755 = vcvt.s32.f32 %v723
        %v756 = vcvt.s32.f32 %v724
        %v757 = vcvt.s32.f32 %v725
        %v758 = vcvt.s32.f32 %v726
        %v759 = vcvt.s32.f32 %v727
        %v760 = vcvt.s32.f32 %v728
        %v761 = vcvt.s32.f32 %v729
        %v762 = vcvt.s32.f32 %v730
        %v763 = vcvt.s32.f32 %v731
        %v764 = vcvt.s32.f32 %v732
        %v765 = vcvt.s32.f32 %v733
        %v766 = vcvt.s32.f32 %v734
        %v767 = vcvt.s32.f32 %v735
        %v768 = vcvt.s32.f32 %v736
        %v769 = vcvt.s32.f32 %v737
        %v770 = vcvt.s32.f32 %v738
        %v771 = vcvt.s32.f32 %v739
        %v772 = vcvt.s32.f32 %v740
        %v773 = vcvt.s32.f32 %v741
        %v774 = vcvt.s32.f32 %v742
        %v775 = vcvt.s32.f32 %v743
        %v776 = vcvt.s32.f32 %v744
        %v777 = vcvt.s32.f32 %v745
        %v778 = vcvt.s32.f32 %v746
        %v779 = vcvt.s32.f32 %v747
        %v780 = vcvt.s32.f32 %v748
        %v781 = vcvt.s32.f32 %v749
        %v782 = vcvt.s32.f32 %v750
        %v783 = vcvt.s32.f32 %v751
        %v784 = vlaneseq
        %v785 = vand.u32 %v784, 127
        %786 = vset.pattern.permute.xlu0 0
        %787 = vperm.xlu0 %786, %v539
        %v788 = vpop.permute.xlu0 %787
        %789 = vset.pattern.permute.xlu0 0
        %790 = vperm.xlu0 %789, %v540
        %v791 = vpop.permute.xlu0 %790
        %792 = vset.pattern.permute.xlu0 0
        %793 = vperm.xlu0 %792, %v541
        %v794 = vpop.permute.xlu0 %793
        %795 = vset.pattern.permute.xlu0 0
        %796 = vperm.xlu0 %795, %v542
        %v797 = vpop.permute.xlu0 %796
        %798 = vset.pattern.permute.xlu0 0
        %799 = vperm.xlu0 %798, %v543
        %v800 = vpop.permute.xlu0 %799
        %801 = vset.pattern.permute.xlu0 0
        %802 = vperm.xlu0 %801, %v544
        %v803 = vpop.permute.xlu0 %802
        %804 = vset.pattern.permute.xlu0 0
        %805 = vperm.xlu0 %804, %v545
        %v806 = vpop.permute.xlu0 %805
        %807 = vset.pattern.permute.xlu0 0
        %808 = vperm.xlu0 %807, %v546
        %v809 = vpop.permute.xlu0 %808
        %810 = vset.pattern.permute.xlu0 0
        %811 = vperm.xlu0 %810, %v547
        %v812 = vpop.permute.xlu0 %811
        %813 = vset.pattern.permute.xlu0 0
        %814 = vperm.xlu0 %813, %v548
        %v815 = vpop.permute.xlu0 %814
        %816 = vset.pattern.permute.xlu0 0
        %817 = vperm.xlu0 %816, %v549
        %v818 = vpop.permute.xlu0 %817
        %819 = vset.pattern.permute.xlu0 0
        %820 = vperm.xlu0 %819, %v550
        %v821 = vpop.permute.xlu0 %820
        %822 = vset.pattern.permute.xlu0 0
        %823 = vperm.xlu0 %822, %v551
        %v824 = vpop.permute.xlu0 %823
        %825 = vset.pattern.permute.xlu0 0
        %826 = vperm.xlu0 %825, %v552
        %v827 = vpop.permute.xlu0 %826
        %828 = vset.pattern.permute.xlu0 0
        %829 = vperm.xlu0 %828, %v553
        %v830 = vpop.permute.xlu0 %829
        %831 = vset.pattern.permute.xlu0 0
        %832 = vperm.xlu0 %831, %v554
        %v833 = vpop.permute.xlu0 %832
        %834 = vset.pattern.permute.xlu0 0
        %835 = vperm.xlu0 %834, %v555
        %v836 = vpop.permute.xlu0 %835
        %837 = vset.pattern.permute.xlu0 0
        %838 = vperm.xlu0 %837, %v556
        %v839 = vpop.permute.xlu0 %838
        %840 = vset.pattern.permute.xlu0 0
        %841 = vperm.xlu0 %840, %v557
        %v842 = vpop.permute.xlu0 %841
        %843 = vset.pattern.permute.xlu0 0
        %844 = vperm.xlu0 %843, %v558
        %v845 = vpop.permute.xlu0 %844
        %846 = vset.pattern.permute.xlu0 0
        %847 = vperm.xlu0 %846, %v559
        %v848 = vpop.permute.xlu0 %847
        %849 = vset.pattern.permute.xlu0 0
        %850 = vperm.xlu0 %849, %v560
        %v851 = vpop.permute.xlu0 %850
        %852 = vset.pattern.permute.xlu0 0
        %853 = vperm.xlu0 %852, %v561
        %v854 = vpop.permute.xlu0 %853
        %855 = vset.pattern.permute.xlu0 0
        %856 = vperm.xlu0 %855, %v562
        %v857 = vpop.permute.xlu0 %856
        %858 = vset.pattern.permute.xlu0 0
        %859 = vperm.xlu0 %858, %v563
        %v860 = vpop.permute.xlu0 %859
        %861 = vset.pattern.permute.xlu0 0
        %862 = vperm.xlu0 %861, %v564
        %v863 = vpop.permute.xlu0 %862
        %864 = vset.pattern.permute.xlu0 0
        %865 = vperm.xlu0 %864, %v565
        %v866 = vpop.permute.xlu0 %865
        %867 = vset.pattern.permute.xlu0 0
        %868 = vperm.xlu0 %867, %v566
        %v869 = vpop.permute.xlu0 %868
        %870 = vset.pattern.permute.xlu0 0
        %871 = vperm.xlu0 %870, %v567
        %v872 = vpop.permute.xlu0 %871
        %873 = vset.pattern.permute.xlu0 0
        %874 = vperm.xlu0 %873, %v568
        %v875 = vpop.permute.xlu0 %874
        %876 = vset.pattern.permute.xlu0 0
        %877 = vperm.xlu0 %876, %v569
        %v878 = vpop.permute.xlu0 %877
        %879 = vset.pattern.permute.xlu0 0
        %880 = vperm.xlu0 %879, %v570
        %v881 = vpop.permute.xlu0 %880
        %vm882 = vcmp.eq.s32.totalorder %v785, %v788
        %vm883 = vcmp.eq.s32.totalorder %v785, %v791
        %vm884 = vcmp.eq.s32.totalorder %v785, %v794
        %vm885 = vcmp.eq.s32.totalorder %v785, %v797
        %vm886 = vcmp.eq.s32.totalorder %v785, %v800
        %vm887 = vcmp.eq.s32.totalorder %v785, %v803
        %vm888 = vcmp.eq.s32.totalorder %v785, %v806
        %vm889 = vcmp.eq.s32.totalorder %v785, %v809
        %vm890 = vcmp.eq.s32.totalorder %v785, %v812
        %vm891 = vcmp.eq.s32.totalorder %v785, %v815
        %vm892 = vcmp.eq.s32.totalorder %v785, %v818
        %vm893 = vcmp.eq.s32.totalorder %v785, %v821
        %vm894 = vcmp.eq.s32.totalorder %v785, %v824
        %vm895 = vcmp.eq.s32.totalorder %v785, %v827
        %vm896 = vcmp.eq.s32.totalorder %v785, %v830
        %vm897 = vcmp.eq.s32.totalorder %v785, %v833
        %vm898 = vcmp.eq.s32.totalorder %v785, %v836
        %vm899 = vcmp.eq.s32.totalorder %v785, %v839
        %vm900 = vcmp.eq.s32.totalorder %v785, %v842
        %vm901 = vcmp.eq.s32.totalorder %v785, %v845
        %vm902 = vcmp.eq.s32.totalorder %v785, %v848
        %vm903 = vcmp.eq.s32.totalorder %v785, %v851
        %vm904 = vcmp.eq.s32.totalorder %v785, %v854
        %vm905 = vcmp.eq.s32.totalorder %v785, %v857
        %vm906 = vcmp.eq.s32.totalorder %v785, %v860
        %vm907 = vcmp.eq.s32.totalorder %v785, %v863
        %vm908 = vcmp.eq.s32.totalorder %v785, %v866
        %vm909 = vcmp.eq.s32.totalorder %v785, %v869
        %vm910 = vcmp.eq.s32.totalorder %v785, %v872
        %vm911 = vcmp.eq.s32.totalorder %v785, %v875
        %vm912 = vcmp.eq.s32.totalorder %v785, %v878
        %vm913 = vcmp.eq.s32.totalorder %v785, %v881
        %v914 = vsel %vm882, 1, 0
        %v915 = vsel %vm883, 1, 0
        %v916 = vsel %vm884, 1, 0
        %v917 = vsel %vm885, 1, 0
        %v918 = vsel %vm886, 1, 0
        %v919 = vsel %vm887, 1, 0
        %v920 = vsel %vm888, 1, 0
        %v921 = vsel %vm889, 1, 0
        %v922 = vsel %vm890, 1, 0
        %v923 = vsel %vm891, 1, 0
        %v924 = vsel %vm892, 1, 0
        %v925 = vsel %vm893, 1, 0
        %v926 = vsel %vm894, 1, 0
        %v927 = vsel %vm895, 1, 0
        %v928 = vsel %vm896, 1, 0
        %v929 = vsel %vm897, 1, 0
        %v930 = vsel %vm898, 1, 0
        %v931 = vsel %vm899, 1, 0
        %v932 = vsel %vm900, 1, 0
        %v933 = vsel %vm901, 1, 0
        %v934 = vsel %vm902, 1, 0
        %v935 = vsel %vm903, 1, 0
        %v936 = vsel %vm904, 1, 0
        %v937 = vsel %vm905, 1, 0
        %v938 = vsel %vm906, 1, 0
        %v939 = vsel %vm907, 1, 0
        %v940 = vsel %vm908, 1, 0
        %v941 = vsel %vm909, 1, 0
        %v942 = vsel %vm910, 1, 0
        %v943 = vsel %vm911, 1, 0
        %v944 = vsel %vm912, 1, 0
        %v945 = vsel %vm913, 1, 0
        %v946 = vcvt.s32.f32 %v914
        %v947 = vcvt.s32.f32 %v915
        %v948 = vcvt.s32.f32 %v916
        %v949 = vcvt.s32.f32 %v917
        %v950 = vcvt.s32.f32 %v918
        %v951 = vcvt.s32.f32 %v919
        %v952 = vcvt.s32.f32 %v920
        %v953 = vcvt.s32.f32 %v921
        %v954 = vcvt.s32.f32 %v922
        %v955 = vcvt.s32.f32 %v923
        %v956 = vcvt.s32.f32 %v924
        %v957 = vcvt.s32.f32 %v925
        %v958 = vcvt.s32.f32 %v926
        %v959 = vcvt.s32.f32 %v927
        %v960 = vcvt.s32.f32 %v928
        %v961 = vcvt.s32.f32 %v929
        %v962 = vcvt.s32.f32 %v930
        %v963 = vcvt.s32.f32 %v931
        %v964 = vcvt.s32.f32 %v932
        %v965 = vcvt.s32.f32 %v933
        %v966 = vcvt.s32.f32 %v934
        %v967 = vcvt.s32.f32 %v935
        %v968 = vcvt.s32.f32 %v936
        %v969 = vcvt.s32.f32 %v937
        %v970 = vcvt.s32.f32 %v938
        %v971 = vcvt.s32.f32 %v939
        %v972 = vcvt.s32.f32 %v940
        %v973 = vcvt.s32.f32 %v941
        %v974 = vcvt.s32.f32 %v942
        %v975 = vcvt.s32.f32 %v943
        %v976 = vcvt.s32.f32 %v944
        %v977 = vcvt.s32.f32 %v945
        %v978 = vmul.u32 %v785, 16
        %vm979 = vcmp.ge.s32.totalorder %v572, %v978
        %vm980 = vcmp.ge.s32.totalorder %v573, %v978
        %vm981 = vcmp.ge.s32.totalorder %v574, %v978
        %vm982 = vcmp.ge.s32.totalorder %v575, %v978
        %vm983 = vcmp.ge.s32.totalorder %v576, %v978
        %vm984 = vcmp.ge.s32.totalorder %v577, %v978
        %vm985 = vcmp.ge.s32.totalorder %v578, %v978
        %vm986 = vcmp.ge.s32.totalorder %v579, %v978
        %vm987 = vcmp.ge.s32.totalorder %v580, %v978
        %vm988 = vcmp.ge.s32.totalorder %v581, %v978
        %vm989 = vcmp.ge.s32.totalorder %v582, %v978
        %vm990 = vcmp.ge.s32.totalorder %v583, %v978
        %vm991 = vcmp.ge.s32.totalorder %v584, %v978
        %vm992 = vcmp.ge.s32.totalorder %v585, %v978
        %vm993 = vcmp.ge.s32.totalorder %v586, %v978
        %vm994 = vcmp.ge.s32.totalorder %v587, %v978
        %v995 = vadd.s32 %v978, 16
        %vm996 = vcmp.lt.s32.totalorder %v572, %v995
        %vm997 = vcmp.lt.s32.totalorder %v573, %v995
        %vm998 = vcmp.lt.s32.totalorder %v574, %v995
        %vm999 = vcmp.lt.s32.totalorder %v575, %v995
        %vm1000 = vcmp.lt.s32.totalorder %v576, %v995
        %vm1001 = vcmp.lt.s32.totalorder %v577, %v995
        %vm1002 = vcmp.lt.s32.totalorder %v578, %v995
        %vm1003 = vcmp.lt.s32.totalorder %v579, %v995
        %vm1004 = vcmp.lt.s32.totalorder %v580, %v995
        %vm1005 = vcmp.lt.s32.totalorder %v581, %v995
        %vm1006 = vcmp.lt.s32.totalorder %v582, %v995
        %vm1007 = vcmp.lt.s32.totalorder %v583, %v995
        %vm1008 = vcmp.lt.s32.totalorder %v584, %v995
        %vm1009 = vcmp.lt.s32.totalorder %v585, %v995
        %vm1010 = vcmp.lt.s32.totalorder %v586, %v995
        %vm1011 = vcmp.lt.s32.totalorder %v587, %v995
        %vm1012 = vmand %vm979, %vm996
        %vm1013 = vmand %vm980, %vm997
        %vm1014 = vmand %vm981, %vm998
        %vm1015 = vmand %vm982, %vm999
        %vm1016 = vmand %vm983, %vm1000
        %vm1017 = vmand %vm984, %vm1001
        %vm1018 = vmand %vm985, %vm1002
        %vm1019 = vmand %vm986, %vm1003
        %vm1020 = vmand %vm987, %vm1004
        %vm1021 = vmand %vm988, %vm1005
        %vm1022 = vmand %vm989, %vm1006
        %vm1023 = vmand %vm990, %vm1007
        %vm1024 = vmand %vm991, %vm1008
        %vm1025 = vmand %vm992, %vm1009
        %vm1026 = vmand %vm993, %vm1010
        %vm1027 = vmand %vm994, %vm1011
        %v1028 = vsel %vm1012, 1, 0
        %v1029 = vsel %vm1013, 1, 0
        %v1030 = vsel %vm1014, 1, 0
        %v1031 = vsel %vm1015, 1, 0
        %v1032 = vsel %vm1016, 1, 0
        %v1033 = vsel %vm1017, 1, 0
        %v1034 = vsel %vm1018, 1, 0
        %v1035 = vsel %vm1019, 1, 0
        %v1036 = vsel %vm1020, 1, 0
        %v1037 = vsel %vm1021, 1, 0
        %v1038 = vsel %vm1022, 1, 0
        %v1039 = vsel %vm1023, 1, 0
        %v1040 = vsel %vm1024, 1, 0
        %v1041 = vsel %vm1025, 1, 0
        %v1042 = vsel %vm1026, 1, 0
        %v1043 = vsel %vm1027, 1, 0
        %v1044 = vcvt.s32.f32 %v1028
        %v1045 = vcvt.s32.f32 %v1029
        %v1046 = vcvt.s32.f32 %v1030
        %v1047 = vcvt.s32.f32 %v1031
        %v1048 = vcvt.s32.f32 %v1032
        %v1049 = vcvt.s32.f32 %v1033
        %v1050 = vcvt.s32.f32 %v1034
        %v1051 = vcvt.s32.f32 %v1035
        %v1052 = vcvt.s32.f32 %v1036
        %v1053 = vcvt.s32.f32 %v1037
        %v1054 = vcvt.s32.f32 %v1038
        %v1055 = vcvt.s32.f32 %v1039
        %v1056 = vcvt.s32.f32 %v1040
        %v1057 = vcvt.s32.f32 %v1041
        %v1058 = vcvt.s32.f32 %v1042
        %v1059 = vcvt.s32.f32 %v1043
        %v1060 = vld [vmem:[%s515] sm:$0x1]
        %v1061 = vld [vmem:[%s434] sm:$0xff]
        %v1062 = vld [vmem:[%s434 + $0x8] sm:$0x3f]
        %1064 = vset.pattern.permute.xlu0 0
        %1065 = vperm.xlu0 %1064, %v526
        %v1066 = vpop.permute.xlu0 %1065
        %1069 = vset.pattern.permute.xlu0 0
        %1070 = vperm.xlu0 %1069, %v527
        %v1071 = vpop.permute.xlu0 %1070
        %vm1073 = vcmask 113664
        %v1075 = vsel %vm1073, %v520, 0
        %v1078 = vsel %vm1073, %v521, 0
        %vm1080 = vcmask 1045504
        %v1082 = vsel %vm1080, %v1062, 0
        %1084 = vmatpush.msra.mxu0 0.0
        %1085 = vmatpush.msra.mxu0 0.0
        %1086 = vmatpush.msra.mxu0 0.0
        %1087 = vmatpush.msra.mxu0 0.0
        %1088 = vmatpush.msra.mxu0 0.0
        %1089 = vmatpush.msra.mxu0 0.0
        %1090 = vmatpush.msra.mxu0 0.0
        %1091 = vmatpush.msra.mxu0 0.0
        %1092 = vmatpush.msra.mxu0 0.0
        %1093 = vmatpush.msra.mxu0 0.0
        %1094 = vmatpush.msra.mxu0 0.0
        %1095 = vmatpush.msra.mxu0 0.0
        %1096 = vmatpush.msra.mxu0 0.0
        %1097 = vmatpush.msra.mxu0 0.0
        %1098 = vmatpush.msra.mxu0 %v1082
        %1099 = vmatpush.msra.mxu0 %v1061
        %1100 = vmatmul.f32.gmra.mxu0 %v1075
        %v1101 = vpop.f32.mrf.mxu0
        %v1102 = vadd.f32 %v1066, %v1101
        %1103 = vmatmul.f32.gmra.mxu0 %v1078
        %v1104 = vpop.f32.mrf.mxu0
        %v1105 = vadd.f32 %v1071, %v1104
        %1106 = vdwg.mxu0
        %v1107 = vmax.f32 %v1102, 0.0
        %v1108 = vmax.f32 %v1105, 0.0
        %v1109 = vld [vmem:[%s495] sm:$0xff]
        %1110 = vset.pattern.permute.xlu0 1
        %1111 = vperm.xlu0 %1110, %v526
        %v1112 = vpop.permute.xlu0 %1111
        %1114 = vset.pattern.permute.xlu0 1
        %1115 = vperm.xlu0 %1114, %v527
        %v1116 = vpop.permute.xlu0 %1115
        %1118 = vrot.lane.b32.xlu0 %v520, 114
        %v1119 = vpop.permute.xlu0 %1118
        %1120 = vrot.lane.b32.xlu0 %v521, 114
        %v1121 = vpop.permute.xlu0 %1120
        %1123 = vst [vmem:[#allocation1] ss:$2 sm:$0xff] %v1109
        %v1124 = vld.sshfl [vmem:[#allocation1] sm:$0xff pattern:$0x75316420]
        %v1125 = vld.sshfl [vmem:[#allocation1 + $0x8] sm:$0xff pattern:$0x75316420]
        %vm1126 = vcmask 31744
        %v1127 = vsel %vm1126, %v1119, 0
        %v1129 = vsel %vm1126, %v1121, 0
        %vm1131 = vcmask 1043456
        %v1132 = vsel %vm1131, %v1124, 0
        %v1134 = vsel %vm1131, %v1125, 0
        %1136 = vmatpush.msra.mxu0 0.0
        %1137 = vmatpush.msra.mxu0 0.0
        %1138 = vmatpush.msra.mxu0 0.0
        %1139 = vmatpush.msra.mxu0 0.0
        %1140 = vmatpush.msra.mxu0 0.0
        %1141 = vmatpush.msra.mxu0 0.0
        %1142 = vmatpush.msra.mxu0 0.0
        %1143 = vmatpush.msra.mxu0 0.0
        %1144 = vmatpush.msra.mxu0 0.0
        %1145 = vmatpush.msra.mxu0 0.0
        %1146 = vmatpush.msra.mxu0 0.0
        %1147 = vmatpush.msra.mxu0 0.0
        %1148 = vmatpush.msra.mxu0 0.0
        %1149 = vmatpush.msra.mxu0 0.0
        %1150 = vmatpush.msra.mxu0 0.0
        %1151 = vmatpush.msra.mxu0 %v1132
        %1152 = vmatmul.f32.gmra.mxu0 %v1127
        %v1153 = vpop.f32.mrf.mxu0
        %v1154 = vadd.f32 %v1112, %v1153
        %1155 = vmatmul.f32.gmra.mxu0 %v1129
        %v1156 = vpop.f32.mrf.mxu0
        %v1157 = vadd.f32 %v1116, %v1156
        %1158 = vdwg.mxu0
        %1159 = vmatpush.msra.mxu0 0.0
        %1160 = vmatpush.msra.mxu0 0.0
        %1161 = vmatpush.msra.mxu0 0.0
        %1162 = vmatpush.msra.mxu0 0.0
        %1163 = vmatpush.msra.mxu0 0.0
        %1164 = vmatpush.msra.mxu0 0.0
        %1165 = vmatpush.msra.mxu0 0.0
        %1166 = vmatpush.msra.mxu0 0.0
        %1167 = vmatpush.msra.mxu0 0.0
        %1168 = vmatpush.msra.mxu0 0.0
        %1169 = vmatpush.msra.mxu0 0.0
        %1170 = vmatpush.msra.mxu0 0.0
        %1171 = vmatpush.msra.mxu0 0.0
        %1172 = vmatpush.msra.mxu0 0.0
        %1173 = vmatpush.msra.mxu0 0.0
        %1174 = vmatpush.msra.mxu0 %v1134
        %1175 = vmatmul.f32.gmra.mxu0 %v1127
        %v1176 = vpop.f32.mrf.mxu0
        %v1177 = vadd.f32 %v1112, %v1176
        %1178 = vmatmul.f32.gmra.mxu0 %v1129
        %v1179 = vpop.f32.mrf.mxu0
        %v1180 = vadd.f32 %v1116, %v1179
        %1181 = vdwg.mxu0
        %v1182 = vmax.f32 %v1154, 0.0
        %v1183 = vmax.f32 %v1177, 0.0
        %v1184 = vmax.f32 %v1157, 0.0
        %v1185 = vmax.f32 %v1180, 0.0
        %vm1186 = vcmask 130048
        %v1188 = vsel %vm1186, %v522, 0
        %v1191 = vsel %vm1186, %v524, 0
        %1193 = vmatpush.msra.mxu0 0.0
        %1194 = vmatpush.msra.mxu0 0.0
        %1195 = vmatpush.msra.mxu0 0.0
        %1196 = vmatpush.msra.mxu0 0.0
        %1197 = vmatpush.msra.mxu0 0.0
        %1198 = vmatpush.msra.mxu0 0.0
        %1199 = vmatpush.msra.mxu0 0.0
        %1200 = vmatpush.msra.mxu0 0.0
        %1201 = vmatpush.msra.mxu0 0.0
        %1202 = vmatpush.msra.mxu0 0.0
        %1203 = vmatpush.msra.mxu0 0.0
        %1204 = vmatpush.msra.mxu0 0.0
        %1205 = vmatpush.msra.mxu0 0.0
        %1206 = vmatpush.msra.mxu0 0.0
        %1207 = vmatpush.msra.mxu0 %v1108
        %1208 = vmatpush.msra.mxu0 %v1107
        %1209 = vmatmul.f32.gmra.mxu0 %v1188
        %v1210 = vpop.f32.mrf.mxu0
        %v1211 = vadd.f32 0.0, %v1210
        %1212 = vmatmul.f32.gmra.mxu0 %v1191
        %v1213 = vpop.f32.mrf.mxu0
        %v1214 = vadd.f32 0.0, %v1213
        %1215 = vdwg.mxu0
        %1216 = vrot.lane.b32.xlu0 %v522, 112
        %v1217 = vpop.permute.xlu0 %1216
        %1218 = vrot.lane.b32.xlu0 %v524, 112
        %v1219 = vpop.permute.xlu0 %1218
        %v1220 = vsel %vm1186, %v1217, 0
        %v1222 = vsel %vm1186, %v1219, 0
        %1224 = vmatpush.msra.mxu0 0.0
        %1225 = vmatpush.msra.mxu0 0.0
        %1226 = vmatpush.msra.mxu0 0.0
        %1227 = vmatpush.msra.mxu0 0.0
        %1228 = vmatpush.msra.mxu0 0.0
        %1229 = vmatpush.msra.mxu0 0.0
        %1230 = vmatpush.msra.mxu0 0.0
        %1231 = vmatpush.msra.mxu0 0.0
        %1232 = vmatpush.msra.mxu0 0.0
        %1233 = vmatpush.msra.mxu0 0.0
        %1234 = vmatpush.msra.mxu0 0.0
        %1235 = vmatpush.msra.mxu0 0.0
        %1236 = vmatpush.msra.mxu0 0.0
        %1237 = vmatpush.msra.mxu0 0.0
        %1238 = vmatpush.msra.mxu0 %v1108
        %1239 = vmatpush.msra.mxu0 %v1107
        %1240 = vmatmul.f32.gmra.mxu0 %v1220
        %v1241 = vpop.f32.mrf.mxu0
        %v1242 = vadd.f32 0.0, %v1241
        %1243 = vmatmul.f32.gmra.mxu0 %v1222
        %v1244 = vpop.f32.mrf.mxu0
        %v1245 = vadd.f32 0.0, %v1244
        %1246 = vdwg.mxu0
        %1247 = vmatpush.msra.mxu0 %v782
        %1248 = vmatpush.msra.mxu0 %v780
        %1249 = vmatpush.msra.mxu0 %v778
        %1250 = vmatpush.msra.mxu0 %v776
        %1251 = vmatpush.msra.mxu0 %v774
        %1252 = vmatpush.msra.mxu0 %v772
        %1253 = vmatpush.msra.mxu0 %v770
        %1254 = vmatpush.msra.mxu0 %v768
        %1255 = vmatpush.msra.mxu0 %v766
        %1256 = vmatpush.msra.mxu0 %v764
        %1257 = vmatpush.msra.mxu0 %v762
        %1258 = vmatpush.msra.mxu0 %v760
        %1259 = vmatpush.msra.mxu0 %v758
        %1260 = vmatpush.msra.mxu0 %v756
        %1261 = vmatpush.msra.mxu0 %v754
        %1262 = vmatpush.msra.mxu0 %v752
        %1263 = vmatmul.f32.gmra.mxu0 %v1242
        %v1264 = vpop.f32.mrf.mxu0
        %v1265 = vadd.f32 0.0, %v1264
        %1266 = vmatmul.f32.gmra.mxu0 %v1245
        %v1267 = vpop.f32.mrf.mxu0
        %v1268 = vadd.f32 0.0, %v1267
        %1269 = vdwg.mxu0
        %1270 = vmatpush.msra.mxu0 %v783
        %1271 = vmatpush.msra.mxu0 %v781
        %1272 = vmatpush.msra.mxu0 %v779
        %1273 = vmatpush.msra.mxu0 %v777
        %1274 = vmatpush.msra.mxu0 %v775
        %1275 = vmatpush.msra.mxu0 %v773
        %1276 = vmatpush.msra.mxu0 %v771
        %1277 = vmatpush.msra.mxu0 %v769
        %1278 = vmatpush.msra.mxu0 %v767
        %1279 = vmatpush.msra.mxu0 %v765
        %1280 = vmatpush.msra.mxu0 %v763
        %1281 = vmatpush.msra.mxu0 %v761
        %1282 = vmatpush.msra.mxu0 %v759
        %1283 = vmatpush.msra.mxu0 %v757
        %1284 = vmatpush.msra.mxu0 %v755
        %1285 = vmatpush.msra.mxu0 %v753
        %1286 = vmatmul.f32.gmra.mxu0 %v1242
        %v1287 = vpop.f32.mrf.mxu0
        %v1288 = vadd.f32 0.0, %v1287
        %1289 = vmatmul.f32.gmra.mxu0 %v1245
        %v1290 = vpop.f32.mrf.mxu0
        %v1291 = vadd.f32 0.0, %v1290
        %1292 = vdwg.mxu0
        %1293 = vmatpush.msra.mxu0 %v684
        %1294 = vmatpush.msra.mxu0 %v682
        %1295 = vmatpush.msra.mxu0 %v680
        %1296 = vmatpush.msra.mxu0 %v678
        %1297 = vmatpush.msra.mxu0 %v676
        %1298 = vmatpush.msra.mxu0 %v674
        %1299 = vmatpush.msra.mxu0 %v672
        %1300 = vmatpush.msra.mxu0 %v670
        %1301 = vmatpush.msra.mxu0 %v668
        %1302 = vmatpush.msra.mxu0 %v666
        %1303 = vmatpush.msra.mxu0 %v664
        %1304 = vmatpush.msra.mxu0 %v662
        %1305 = vmatpush.msra.mxu0 %v660
        %1306 = vmatpush.msra.mxu0 %v658
        %1307 = vmatpush.msra.mxu0 %v656
        %1308 = vmatpush.msra.mxu0 %v654
        %1309 = vmatmul.f32.gmra.mxu0 %v1211
        %v1310 = vpop.f32.mrf.mxu0
        %v1311 = vadd.f32 %v1265, %v1310
        %1312 = vmatmul.f32.gmra.mxu0 %v1214
        %v1313 = vpop.f32.mrf.mxu0
        %v1314 = vadd.f32 %v1268, %v1313
        %1315 = vdwg.mxu0
        %1316 = vmatpush.msra.mxu0 %v685
        %1317 = vmatpush.msra.mxu0 %v683
        %1318 = vmatpush.msra.mxu0 %v681
        %1319 = vmatpush.msra.mxu0 %v679
        %1320 = vmatpush.msra.mxu0 %v677
        %1321 = vmatpush.msra.mxu0 %v675
        %1322 = vmatpush.msra.mxu0 %v673
        %1323 = vmatpush.msra.mxu0 %v671
        %1324 = vmatpush.msra.mxu0 %v669
        %1325 = vmatpush.msra.mxu0 %v667
        %1326 = vmatpush.msra.mxu0 %v665
        %1327 = vmatpush.msra.mxu0 %v663
        %1328 = vmatpush.msra.mxu0 %v661
        %1329 = vmatpush.msra.mxu0 %v659
        %1330 = vmatpush.msra.mxu0 %v657
        %1331 = vmatpush.msra.mxu0 %v655
        %1332 = vmatmul.f32.gmra.mxu0 %v1211
        %v1333 = vpop.f32.mrf.mxu0
        %v1334 = vadd.f32 %v1288, %v1333
        %1335 = vmatmul.f32.gmra.mxu0 %v1214
        %v1336 = vpop.f32.mrf.mxu0
        %v1337 = vadd.f32 %v1291, %v1336
        %1338 = vdwg.mxu0
        %1339 = vrot.lane.b32.xlu0 %v522, 96
        %v1340 = vpop.permute.xlu0 %1339
        %1341 = vrot.lane.b32.xlu0 %v524, 96
        %v1342 = vpop.permute.xlu0 %1341
        %v1343 = vsel %vm1186, %v1340, 0
        %v1345 = vsel %vm1186, %v1342, 0
        %1347 = vmatpush.msra.mxu0 0.0
        %1348 = vmatpush.msra.mxu0 0.0
        %1349 = vmatpush.msra.mxu0 0.0
        %1350 = vmatpush.msra.mxu0 0.0
        %1351 = vmatpush.msra.mxu0 0.0
        %1352 = vmatpush.msra.mxu0 0.0
        %1353 = vmatpush.msra.mxu0 0.0
        %1354 = vmatpush.msra.mxu0 0.0
        %1355 = vmatpush.msra.mxu0 0.0
        %1356 = vmatpush.msra.mxu0 0.0
        %1357 = vmatpush.msra.mxu0 0.0
        %1358 = vmatpush.msra.mxu0 0.0
        %1359 = vmatpush.msra.mxu0 0.0
        %1360 = vmatpush.msra.mxu0 0.0
        %1361 = vmatpush.msra.mxu0 %v1184
        %1362 = vmatpush.msra.mxu0 %v1182
        %1363 = vmatmul.f32.gmra.mxu0 %v1343
        %v1364 = vpop.f32.mrf.mxu0
        %v1365 = vadd.f32 0.0, %v1364
        %1366 = vmatmul.f32.gmra.mxu0 %v1345
        %v1367 = vpop.f32.mrf.mxu0
        %v1368 = vadd.f32 0.0, %v1367
        %1369 = vdwg.mxu0
        %1370 = vmatpush.msra.mxu0 0.0
        %1371 = vmatpush.msra.mxu0 0.0
        %1372 = vmatpush.msra.mxu0 0.0
        %1373 = vmatpush.msra.mxu0 0.0
        %1374 = vmatpush.msra.mxu0 0.0
        %1375 = vmatpush.msra.mxu0 0.0
        %1376 = vmatpush.msra.mxu0 0.0
        %1377 = vmatpush.msra.mxu0 0.0
        %1378 = vmatpush.msra.mxu0 0.0
        %1379 = vmatpush.msra.mxu0 0.0
        %1380 = vmatpush.msra.mxu0 0.0
        %1381 = vmatpush.msra.mxu0 0.0
        %1382 = vmatpush.msra.mxu0 0.0
        %1383 = vmatpush.msra.mxu0 0.0
        %1384 = vmatpush.msra.mxu0 %v1185
        %1385 = vmatpush.msra.mxu0 %v1183
        %1386 = vmatmul.f32.gmra.mxu0 %v1343
        %v1387 = vpop.f32.mrf.mxu0
        %v1388 = vadd.f32 0.0, %v1387
        %1389 = vmatmul.f32.gmra.mxu0 %v1345
        %v1390 = vpop.f32.mrf.mxu0
        %v1391 = vadd.f32 0.0, %v1390
        %1392 = vdwg.mxu0
        %v1393 = vadd.f32 %v1311, %v1365
        %v1394 = vadd.f32 %v1334, %v1388
        %v1395 = vadd.f32 %v1314, %v1368
        %v1396 = vadd.f32 %v1337, %v1391
        %1397 = vset.pattern.permute.xlu0 2
        %1398 = vperm.xlu0 %1397, %v526
        %v1399 = vpop.permute.xlu0 %1398
        %1401 = vset.pattern.permute.xlu0 2
        %1402 = vperm.xlu0 %1401, %v527
        %v1403 = vpop.permute.xlu0 %1402
        %v1405 = vadd.f32 %v1393, %v1399
        %v1406 = vadd.f32 %v1394, %v1399
        %v1407 = vadd.f32 %v1395, %v1403
        %v1408 = vadd.f32 %v1396, %v1403
        %v1409 = vmax.f32 %v1405, 0.0
        %v1410 = vmax.f32 %v1406, 0.0
        %v1411 = vmax.f32 %v1407, 0.0
        %v1412 = vmax.f32 %v1408, 0.0
        %1413 = vset.pattern.permute.xlu0 3
        %1414 = vperm.xlu0 %1413, %v526
        %v1415 = vpop.permute.xlu0 %1414
        %1417 = vset.pattern.permute.xlu0 3
        %1418 = vperm.xlu0 %1417, %v527
        %v1419 = vpop.permute.xlu0 %1418
        %1421 = vrot.lane.b32.xlu0 %v522, 80
        %v1422 = vpop.permute.xlu0 %1421
        %1423 = vrot.lane.b32.xlu0 %v524, 80
        %v1424 = vpop.permute.xlu0 %1423
        %v1425 = vsel %vm1186, %v1422, 0
        %v1427 = vsel %vm1186, %v1424, 0
        %1429 = vmatpush.msra.mxu0 0.0
        %1430 = vmatpush.msra.mxu0 0.0
        %1431 = vmatpush.msra.mxu0 0.0
        %1432 = vmatpush.msra.mxu0 0.0
        %1433 = vmatpush.msra.mxu0 0.0
        %1434 = vmatpush.msra.mxu0 0.0
        %1435 = vmatpush.msra.mxu0 0.0
        %1436 = vmatpush.msra.mxu0 0.0
        %1437 = vmatpush.msra.mxu0 0.0
        %1438 = vmatpush.msra.mxu0 0.0
        %1439 = vmatpush.msra.mxu0 0.0
        %1440 = vmatpush.msra.mxu0 0.0
        %1441 = vmatpush.msra.mxu0 0.0
        %1442 = vmatpush.msra.mxu0 0.0
        %1443 = vmatpush.msra.mxu0 %v1411
        %1444 = vmatpush.msra.mxu0 %v1409
        %1445 = vmatmul.f32.gmra.mxu0 %v1425
        %v1446 = vpop.f32.mrf.mxu0
        %v1447 = vadd.f32 %v1415, %v1446
        %1448 = vmatmul.f32.gmra.mxu0 %v1427
        %v1449 = vpop.f32.mrf.mxu0
        %v1450 = vadd.f32 %v1419, %v1449
        %1451 = vdwg.mxu0
        %1452 = vmatpush.msra.mxu0 0.0
        %1453 = vmatpush.msra.mxu0 0.0
        %1454 = vmatpush.msra.mxu0 0.0
        %1455 = vmatpush.msra.mxu0 0.0
        %1456 = vmatpush.msra.mxu0 0.0
        %1457 = vmatpush.msra.mxu0 0.0
        %1458 = vmatpush.msra.mxu0 0.0
        %1459 = vmatpush.msra.mxu0 0.0
        %1460 = vmatpush.msra.mxu0 0.0
        %1461 = vmatpush.msra.mxu0 0.0
        %1462 = vmatpush.msra.mxu0 0.0
        %1463 = vmatpush.msra.mxu0 0.0
        %1464 = vmatpush.msra.mxu0 0.0
        %1465 = vmatpush.msra.mxu0 0.0
        %1466 = vmatpush.msra.mxu0 %v1412
        %1467 = vmatpush.msra.mxu0 %v1410
        %1468 = vmatmul.f32.gmra.mxu0 %v1425
        %v1469 = vpop.f32.mrf.mxu0
        %v1470 = vadd.f32 %v1415, %v1469
        %1471 = vmatmul.f32.gmra.mxu0 %v1427
        %v1472 = vpop.f32.mrf.mxu0
        %v1473 = vadd.f32 %v1419, %v1472
        %1474 = vdwg.mxu0
        %v1475 = vmax.f32 %v1447, 0.0
        %v1476 = vmax.f32 %v1470, 0.0
        %v1477 = vmax.f32 %v1450, 0.0
        %v1478 = vmax.f32 %v1473, 0.0
        %1479 = vset.pattern.permute.xlu0 4
        %1480 = vperm.xlu0 %1479, %v526
        %v1481 = vpop.permute.xlu0 %1480
        %1483 = vset.pattern.permute.xlu0 4
        %1484 = vperm.xlu0 %1483, %v527
        %v1485 = vpop.permute.xlu0 %1484
        %1487 = vrot.lane.b32.xlu0 %v522, 64
        %v1488 = vpop.permute.xlu0 %1487
        %1489 = vrot.lane.b32.xlu0 %v524, 64
        %v1490 = vpop.permute.xlu0 %1489
        %v1491 = vsel %vm1186, %v1488, 0
        %v1493 = vsel %vm1186, %v1490, 0
        %1495 = vmatpush.msra.mxu0 0.0
        %1496 = vmatpush.msra.mxu0 0.0
        %1497 = vmatpush.msra.mxu0 0.0
        %1498 = vmatpush.msra.mxu0 0.0
        %1499 = vmatpush.msra.mxu0 0.0
        %1500 = vmatpush.msra.mxu0 0.0
        %1501 = vmatpush.msra.mxu0 0.0
        %1502 = vmatpush.msra.mxu0 0.0
        %1503 = vmatpush.msra.mxu0 0.0
        %1504 = vmatpush.msra.mxu0 0.0
        %1505 = vmatpush.msra.mxu0 0.0
        %1506 = vmatpush.msra.mxu0 0.0
        %1507 = vmatpush.msra.mxu0 0.0
        %1508 = vmatpush.msra.mxu0 0.0
        %1509 = vmatpush.msra.mxu0 %v1477
        %1510 = vmatpush.msra.mxu0 %v1475
        %1511 = vmatmul.f32.gmra.mxu0 %v1491
        %v1512 = vpop.f32.mrf.mxu0
        %v1513 = vadd.f32 %v1481, %v1512
        %1514 = vmatmul.f32.gmra.mxu0 %v1493
        %v1515 = vpop.f32.mrf.mxu0
        %v1516 = vadd.f32 %v1485, %v1515
        %1517 = vdwg.mxu0
        %1518 = vmatpush.msra.mxu0 0.0
        %1519 = vmatpush.msra.mxu0 0.0
        %1520 = vmatpush.msra.mxu0 0.0
        %1521 = vmatpush.msra.mxu0 0.0
        %1522 = vmatpush.msra.mxu0 0.0
        %1523 = vmatpush.msra.mxu0 0.0
        %1524 = vmatpush.msra.mxu0 0.0
        %1525 = vmatpush.msra.mxu0 0.0
        %1526 = vmatpush.msra.mxu0 0.0
        %1527 = vmatpush.msra.mxu0 0.0
        %1528 = vmatpush.msra.mxu0 0.0
        %1529 = vmatpush.msra.mxu0 0.0
        %1530 = vmatpush.msra.mxu0 0.0
        %1531 = vmatpush.msra.mxu0 0.0
        %1532 = vmatpush.msra.mxu0 %v1478
        %1533 = vmatpush.msra.mxu0 %v1476
        %1534 = vmatmul.f32.gmra.mxu0 %v1491
        %v1535 = vpop.f32.mrf.mxu0
        %v1536 = vadd.f32 %v1481, %v1535
        %1537 = vmatmul.f32.gmra.mxu0 %v1493
        %v1538 = vpop.f32.mrf.mxu0
        %v1539 = vadd.f32 %v1485, %v1538
        %1540 = vdwg.mxu0
        %v1541 = vmax.f32 %v1513, 0.0
        %v1542 = vmax.f32 %v1536, 0.0
        %v1543 = vmax.f32 %v1516, 0.0
        %v1544 = vmax.f32 %v1539, 0.0
        %1545 = vmatpush.msra.mxu0 %v961
        %1546 = vmatpush.msra.mxu0 %v960
        %1547 = vmatpush.msra.mxu0 %v959
        %1548 = vmatpush.msra.mxu0 %v958
        %1549 = vmatpush.msra.mxu0 %v957
        %1550 = vmatpush.msra.mxu0 %v956
        %1551 = vmatpush.msra.mxu0 %v955
        %1552 = vmatpush.msra.mxu0 %v954
        %1553 = vmatpush.msra.mxu0 %v953
        %1554 = vmatpush.msra.mxu0 %v952
        %1555 = vmatpush.msra.mxu0 %v951
        %1556 = vmatpush.msra.mxu0 %v950
        %1557 = vmatpush.msra.mxu0 %v949
        %1558 = vmatpush.msra.mxu0 %v948
        %1559 = vmatpush.msra.mxu0 %v947
        %1560 = vmatpush.msra.mxu0 %v946
        %1561 = vmatmul.f32.gmra.mxu0 %v1541
        %v1562 = vpop.f32.mrf.mxu0
        %v1563 = vadd.f32 0.0, %v1562
        %1564 = vmatmul.f32.gmra.mxu0 %v1543
        %v1565 = vpop.f32.mrf.mxu0
        %v1566 = vadd.f32 0.0, %v1565
        %1567 = vdwg.mxu0
        %1568 = vmatpush.msra.mxu0 %v977
        %1569 = vmatpush.msra.mxu0 %v976
        %1570 = vmatpush.msra.mxu0 %v975
        %1571 = vmatpush.msra.mxu0 %v974
        %1572 = vmatpush.msra.mxu0 %v973
        %1573 = vmatpush.msra.mxu0 %v972
        %1574 = vmatpush.msra.mxu0 %v971
        %1575 = vmatpush.msra.mxu0 %v970
        %1576 = vmatpush.msra.mxu0 %v969
        %1577 = vmatpush.msra.mxu0 %v968
        %1578 = vmatpush.msra.mxu0 %v967
        %1579 = vmatpush.msra.mxu0 %v966
        %1580 = vmatpush.msra.mxu0 %v965
        %1581 = vmatpush.msra.mxu0 %v964
        %1582 = vmatpush.msra.mxu0 %v963
        %1583 = vmatpush.msra.mxu0 %v962
        %1584 = vmatmul.f32.gmra.mxu0 %v1542
        %v1585 = vpop.f32.mrf.mxu0
        %v1586 = vadd.f32 %v1563, %v1585
        %1587 = vmatmul.f32.gmra.mxu0 %v1544
        %v1588 = vpop.f32.mrf.mxu0
        %v1589 = vadd.f32 %v1566, %v1588
        %1590 = vdwg.mxu0
        %1591 = vrot.lane.b32.xlu0 %v522, 32
        %v1592 = vpop.permute.xlu0 %1591
        %1593 = vrot.lane.b32.xlu0 %v524, 32
        %v1594 = vpop.permute.xlu0 %1593
        %v1595 = vsel %vm1186, %v1592, 0
        %v1597 = vsel %vm1186, %v1594, 0
        %1599 = vmatpush.msra.mxu0 0.0
        %1600 = vmatpush.msra.mxu0 0.0
        %1601 = vmatpush.msra.mxu0 0.0
        %1602 = vmatpush.msra.mxu0 0.0
        %1603 = vmatpush.msra.mxu0 0.0
        %1604 = vmatpush.msra.mxu0 0.0
        %1605 = vmatpush.msra.mxu0 0.0
        %1606 = vmatpush.msra.mxu0 0.0
        %1607 = vmatpush.msra.mxu0 0.0
        %1608 = vmatpush.msra.mxu0 0.0
        %1609 = vmatpush.msra.mxu0 0.0
        %1610 = vmatpush.msra.mxu0 0.0
        %1611 = vmatpush.msra.mxu0 0.0
        %1612 = vmatpush.msra.mxu0 0.0
        %1613 = vmatpush.msra.mxu0 %v1589
        %1614 = vmatpush.msra.mxu0 %v1586
        %1615 = vmatmul.f32.gmra.mxu0 %v1595
        %v1616 = vpop.f32.mrf.mxu0
        %v1617 = vadd.f32 0.0, %v1616
        %1618 = vmatmul.f32.gmra.mxu0 %v1597
        %v1619 = vpop.f32.mrf.mxu0
        %v1620 = vadd.f32 0.0, %v1619
        %1621 = vdwg.mxu0
        %1622 = vrot.lane.b32.xlu0 %v522, 48
        %v1623 = vpop.permute.xlu0 %1622
        %1624 = vrot.lane.b32.xlu0 %v524, 48
        %v1625 = vpop.permute.xlu0 %1624
        %v1626 = vsel %vm1186, %v1623, 0
        %v1628 = vsel %vm1186, %v1625, 0
        %1630 = vmatpush.msra.mxu0 0.0
        %1631 = vmatpush.msra.mxu0 0.0
        %1632 = vmatpush.msra.mxu0 0.0
        %1633 = vmatpush.msra.mxu0 0.0
        %1634 = vmatpush.msra.mxu0 0.0
        %1635 = vmatpush.msra.mxu0 0.0
        %1636 = vmatpush.msra.mxu0 0.0
        %1637 = vmatpush.msra.mxu0 0.0
        %1638 = vmatpush.msra.mxu0 0.0
        %1639 = vmatpush.msra.mxu0 0.0
        %1640 = vmatpush.msra.mxu0 0.0
        %1641 = vmatpush.msra.mxu0 0.0
        %1642 = vmatpush.msra.mxu0 0.0
        %1643 = vmatpush.msra.mxu0 0.0
        %1644 = vmatpush.msra.mxu0 %v1108
        %1645 = vmatpush.msra.mxu0 %v1107
        %1646 = vmatmul.f32.gmra.mxu0 %v1626
        %v1647 = vpop.f32.mrf.mxu0
        %v1648 = vadd.f32 %v1617, %v1647
        %1649 = vmatmul.f32.gmra.mxu0 %v1628
        %v1650 = vpop.f32.mrf.mxu0
        %v1651 = vadd.f32 %v1620, %v1650
        %1652 = vdwg.mxu0
        %1653 = vset.pattern.permute.xlu0 5
        %1654 = vperm.xlu0 %1653, %v526
        %v1655 = vpop.permute.xlu0 %1654
        %1657 = vset.pattern.permute.xlu0 5
        %1658 = vperm.xlu0 %1657, %v527
        %v1659 = vpop.permute.xlu0 %1658
        %v1661 = vadd.f32 %v1648, %v1655
        %v1662 = vadd.f32 %v1651, %v1659
        %v1663 = vmax.f32 %v1661, 0.0
        %v1664 = vmax.f32 %v1662, 0.0
        %1665 = vset.pattern.permute.xlu0 6
        %1666 = vperm.xlu0 %1665, %v526
        %v1667 = vpop.permute.xlu0 %1666
        %1669 = vset.pattern.permute.xlu0 6
        %1670 = vperm.xlu0 %1669, %v527
        %v1671 = vpop.permute.xlu0 %1670
        %1673 = vrot.lane.b32.xlu0 %v522, 16
        %v1674 = vpop.permute.xlu0 %1673
        %1675 = vrot.lane.b32.xlu0 %v524, 16
        %v1676 = vpop.permute.xlu0 %1675
        %v1677 = vsel %vm1186, %v1674, 0
        %v1679 = vsel %vm1186, %v1676, 0
        %1681 = vmatpush.msra.mxu0 0.0
        %1682 = vmatpush.msra.mxu0 0.0
        %1683 = vmatpush.msra.mxu0 0.0
        %1684 = vmatpush.msra.mxu0 0.0
        %1685 = vmatpush.msra.mxu0 0.0
        %1686 = vmatpush.msra.mxu0 0.0
        %1687 = vmatpush.msra.mxu0 0.0
        %1688 = vmatpush.msra.mxu0 0.0
        %1689 = vmatpush.msra.mxu0 0.0
        %1690 = vmatpush.msra.mxu0 0.0
        %1691 = vmatpush.msra.mxu0 0.0
        %1692 = vmatpush.msra.mxu0 0.0
        %1693 = vmatpush.msra.mxu0 0.0
        %1694 = vmatpush.msra.mxu0 0.0
        %1695 = vmatpush.msra.mxu0 %v1664
        %1696 = vmatpush.msra.mxu0 %v1663
        %1697 = vmatmul.f32.gmra.mxu0 %v1677
        %v1698 = vpop.f32.mrf.mxu0
        %v1699 = vadd.f32 %v1667, %v1698
        %1700 = vmatmul.f32.gmra.mxu0 %v1679
        %v1701 = vpop.f32.mrf.mxu0
        %v1702 = vadd.f32 %v1671, %v1701
        %1703 = vdwg.mxu0
        %v1704 = vmax.f32 %v1699, 0.0
        %v1705 = vmax.f32 %v1702, 0.0
        %1706 = vset.pattern.permute.xlu0 7
        %1707 = vperm.xlu0 %1706, %v526
        %v1708 = vpop.permute.xlu0 %1707
        %1710 = vset.pattern.permute.xlu0 7
        %1711 = vperm.xlu0 %1710, %v527
        %v1712 = vpop.permute.xlu0 %1711
        %v1715 = vsel %vm1186, %v523, 0
        %v1718 = vsel %vm1186, %v525, 0
        %1720 = vmatpush.msra.mxu0 0.0
        %1721 = vmatpush.msra.mxu0 0.0
        %1722 = vmatpush.msra.mxu0 0.0
        %1723 = vmatpush.msra.mxu0 0.0
        %1724 = vmatpush.msra.mxu0 0.0
        %1725 = vmatpush.msra.mxu0 0.0
        %1726 = vmatpush.msra.mxu0 0.0
        %1727 = vmatpush.msra.mxu0 0.0
        %1728 = vmatpush.msra.mxu0 0.0
        %1729 = vmatpush.msra.mxu0 0.0
        %1730 = vmatpush.msra.mxu0 0.0
        %1731 = vmatpush.msra.mxu0 0.0
        %1732 = vmatpush.msra.mxu0 0.0
        %1733 = vmatpush.msra.mxu0 0.0
        %1734 = vmatpush.msra.mxu0 %v1705
        %1735 = vmatpush.msra.mxu0 %v1704
        %1736 = vmatmul.f32.gmra.mxu0 %v1715
        %v1737 = vpop.f32.mrf.mxu0
        %v1738 = vadd.f32 %v1708, %v1737
        %1739 = vmatmul.f32.gmra.mxu0 %v1718
        %v1740 = vpop.f32.mrf.mxu0
        %v1741 = vadd.f32 %v1712, %v1740
        %1742 = vdwg.mxu0
        %v1743 = vmax.f32 %v1738, 0.0
        %v1744 = vmax.f32 %v1741, 0.0
        %v1746 = vperm.slane %v1060, 0
        %v1748 = vmul.f32 %v1743, %v1746
        %v1749 = vmul.f32 %v1744, %v1746
        %1750 = vmatpush.msra.mxu0 %v1059
        %1751 = vmatpush.msra.mxu0 %v1058
        %1752 = vmatpush.msra.mxu0 %v1057
        %1753 = vmatpush.msra.mxu0 %v1056
        %1754 = vmatpush.msra.mxu0 %v1055
        %1755 = vmatpush.msra.mxu0 %v1054
        %1756 = vmatpush.msra.mxu0 %v1053
        %1757 = vmatpush.msra.mxu0 %v1052
        %1758 = vmatpush.msra.mxu0 %v1051
        %1759 = vmatpush.msra.mxu0 %v1050
        %1760 = vmatpush.msra.mxu0 %v1049
        %1761 = vmatpush.msra.mxu0 %v1048
        %1762 = vmatpush.msra.mxu0 %v1047
        %1763 = vmatpush.msra.mxu0 %v1046
        %1764 = vmatpush.msra.mxu0 %v1045
        %1765 = vmatpush.msra.mxu0 %v1044
        %1766 = vmatmul.f32.gmra.mxu0 %v1748
        %v1767 = vpop.f32.mrf.mxu0
        %v1768 = vadd.f32 0.0, %v1767
        %1769 = vmatmul.f32.gmra.mxu0 %v1749
        %v1770 = vpop.f32.mrf.mxu0
        %v1771 = vadd.f32 0.0, %v1770
        %1772 = vdwg.mxu0
        %1773 = vmatpush.msra.mxu0 0.0
        %1774 = vmatpush.msra.mxu0 0.0
        %1775 = vmatpush.msra.mxu0 0.0
        %1776 = vmatpush.msra.mxu0 0.0
        %1777 = vmatpush.msra.mxu0 0.0
        %1778 = vmatpush.msra.mxu0 0.0
        %1779 = vmatpush.msra.mxu0 0.0
        %1780 = vmatpush.msra.mxu0 0.0
        %1781 = vmatpush.msra.mxu0 0.0
        %1782 = vmatpush.msra.mxu0 0.0
        %1783 = vmatpush.msra.mxu0 0.0
        %1784 = vmatpush.msra.mxu0 0.0
        %1785 = vmatpush.msra.mxu0 0.0
        %1786 = vmatpush.msra.mxu0 0.0
        %1787 = vmatpush.msra.mxu0 %v1744
        %1788 = vmatpush.msra.mxu0 %v1743
        %1789 = vmatmul.f32.gmra.mxu0 %v1188
        %v1790 = vpop.f32.mrf.mxu0
        %v1791 = vadd.f32 0.0, %v1790
        %1792 = vmatmul.f32.gmra.mxu0 %v1191
        %v1793 = vpop.f32.mrf.mxu0
        %v1794 = vadd.f32 0.0, %v1793
        %1795 = vdwg.mxu0
        %1796 = vmatpush.msra.mxu0 0.0
        %1797 = vmatpush.msra.mxu0 0.0
        %1798 = vmatpush.msra.mxu0 0.0
        %1799 = vmatpush.msra.mxu0 0.0
        %1800 = vmatpush.msra.mxu0 0.0
        %1801 = vmatpush.msra.mxu0 0.0
        %1802 = vmatpush.msra.mxu0 0.0
        %1803 = vmatpush.msra.mxu0 0.0
        %1804 = vmatpush.msra.mxu0 0.0
        %1805 = vmatpush.msra.mxu0 0.0
        %1806 = vmatpush.msra.mxu0 0.0
        %1807 = vmatpush.msra.mxu0 0.0
        %1808 = vmatpush.msra.mxu0 0.0
        %1809 = vmatpush.msra.mxu0 0.0
        %1810 = vmatpush.msra.mxu0 %v1744
        %1811 = vmatpush.msra.mxu0 %v1743
        %1812 = vmatmul.f32.gmra.mxu0 %v1220
        %v1813 = vpop.f32.mrf.mxu0
        %v1814 = vadd.f32 0.0, %v1813
        %1815 = vmatmul.f32.gmra.mxu0 %v1222
        %v1816 = vpop.f32.mrf.mxu0
        %v1817 = vadd.f32 0.0, %v1816
        %1818 = vdwg.mxu0
        %1819 = vmatpush.msra.mxu0 %v782
        %1820 = vmatpush.msra.mxu0 %v780
        %1821 = vmatpush.msra.mxu0 %v778
        %1822 = vmatpush.msra.mxu0 %v776
        %1823 = vmatpush.msra.mxu0 %v774
        %1824 = vmatpush.msra.mxu0 %v772
        %1825 = vmatpush.msra.mxu0 %v770
        %1826 = vmatpush.msra.mxu0 %v768
        %1827 = vmatpush.msra.mxu0 %v766
        %1828 = vmatpush.msra.mxu0 %v764
        %1829 = vmatpush.msra.mxu0 %v762
        %1830 = vmatpush.msra.mxu0 %v760
        %1831 = vmatpush.msra.mxu0 %v758
        %1832 = vmatpush.msra.mxu0 %v756
        %1833 = vmatpush.msra.mxu0 %v754
        %1834 = vmatpush.msra.mxu0 %v752
        %1835 = vmatmul.f32.gmra.mxu0 %v1814
        %v1836 = vpop.f32.mrf.mxu0
        %v1837 = vadd.f32 0.0, %v1836
        %1838 = vmatmul.f32.gmra.mxu0 %v1817
        %v1839 = vpop.f32.mrf.mxu0
        %v1840 = vadd.f32 0.0, %v1839
        %1841 = vdwg.mxu0
        %1842 = vmatpush.msra.mxu0 %v783
        %1843 = vmatpush.msra.mxu0 %v781
        %1844 = vmatpush.msra.mxu0 %v779
        %1845 = vmatpush.msra.mxu0 %v777
        %1846 = vmatpush.msra.mxu0 %v775
        %1847 = vmatpush.msra.mxu0 %v773
        %1848 = vmatpush.msra.mxu0 %v771
        %1849 = vmatpush.msra.mxu0 %v769
        %1850 = vmatpush.msra.mxu0 %v767
        %1851 = vmatpush.msra.mxu0 %v765
        %1852 = vmatpush.msra.mxu0 %v763
        %1853 = vmatpush.msra.mxu0 %v761
        %1854 = vmatpush.msra.mxu0 %v759
        %1855 = vmatpush.msra.mxu0 %v757
        %1856 = vmatpush.msra.mxu0 %v755
        %1857 = vmatpush.msra.mxu0 %v753
        %1858 = vmatmul.f32.gmra.mxu0 %v1814
        %v1859 = vpop.f32.mrf.mxu0
        %v1860 = vadd.f32 0.0, %v1859
        %1861 = vmatmul.f32.gmra.mxu0 %v1817
        %v1862 = vpop.f32.mrf.mxu0
        %v1863 = vadd.f32 0.0, %v1862
        %1864 = vdwg.mxu0
        %1865 = vmatpush.msra.mxu0 %v684
        %1866 = vmatpush.msra.mxu0 %v682
        %1867 = vmatpush.msra.mxu0 %v680
        %1868 = vmatpush.msra.mxu0 %v678
        %1869 = vmatpush.msra.mxu0 %v676
        %1870 = vmatpush.msra.mxu0 %v674
        %1871 = vmatpush.msra.mxu0 %v672
        %1872 = vmatpush.msra.mxu0 %v670
        %1873 = vmatpush.msra.mxu0 %v668
        %1874 = vmatpush.msra.mxu0 %v666
        %1875 = vmatpush.msra.mxu0 %v664
        %1876 = vmatpush.msra.mxu0 %v662
        %1877 = vmatpush.msra.mxu0 %v660
        %1878 = vmatpush.msra.mxu0 %v658
        %1879 = vmatpush.msra.mxu0 %v656
        %1880 = vmatpush.msra.mxu0 %v654
        %1881 = vmatmul.f32.gmra.mxu0 %v1791
        %v1882 = vpop.f32.mrf.mxu0
        %v1883 = vadd.f32 %v1837, %v1882
        %1884 = vmatmul.f32.gmra.mxu0 %v1794
        %v1885 = vpop.f32.mrf.mxu0
        %v1886 = vadd.f32 %v1840, %v1885
        %1887 = vdwg.mxu0
        %1888 = vmatpush.msra.mxu0 %v685
        %1889 = vmatpush.msra.mxu0 %v683
        %1890 = vmatpush.msra.mxu0 %v681
        %1891 = vmatpush.msra.mxu0 %v679
        %1892 = vmatpush.msra.mxu0 %v677
        %1893 = vmatpush.msra.mxu0 %v675
        %1894 = vmatpush.msra.mxu0 %v673
        %1895 = vmatpush.msra.mxu0 %v671
        %1896 = vmatpush.msra.mxu0 %v669
        %1897 = vmatpush.msra.mxu0 %v667
        %1898 = vmatpush.msra.mxu0 %v665
        %1899 = vmatpush.msra.mxu0 %v663
        %1900 = vmatpush.msra.mxu0 %v661
        %1901 = vmatpush.msra.mxu0 %v659
        %1902 = vmatpush.msra.mxu0 %v657
        %1903 = vmatpush.msra.mxu0 %v655
        %1904 = vmatmul.f32.gmra.mxu0 %v1791
        %v1905 = vpop.f32.mrf.mxu0
        %v1906 = vadd.f32 %v1860, %v1905
        %1907 = vmatmul.f32.gmra.mxu0 %v1794
        %v1908 = vpop.f32.mrf.mxu0
        %v1909 = vadd.f32 %v1863, %v1908
        %1910 = vdwg.mxu0
        %1911 = vmatpush.msra.mxu0 0.0
        %1912 = vmatpush.msra.mxu0 0.0
        %1913 = vmatpush.msra.mxu0 0.0
        %1914 = vmatpush.msra.mxu0 0.0
        %1915 = vmatpush.msra.mxu0 0.0
        %1916 = vmatpush.msra.mxu0 0.0
        %1917 = vmatpush.msra.mxu0 0.0
        %1918 = vmatpush.msra.mxu0 0.0
        %1919 = vmatpush.msra.mxu0 0.0
        %1920 = vmatpush.msra.mxu0 0.0
        %1921 = vmatpush.msra.mxu0 0.0
        %1922 = vmatpush.msra.mxu0 0.0
        %1923 = vmatpush.msra.mxu0 0.0
        %1924 = vmatpush.msra.mxu0 0.0
        %1925 = vmatpush.msra.mxu0 %v1543
        %1926 = vmatpush.msra.mxu0 %v1541
        %1927 = vmatmul.f32.gmra.mxu0 %v1343
        %v1928 = vpop.f32.mrf.mxu0
        %v1929 = vadd.f32 0.0, %v1928
        %1930 = vmatmul.f32.gmra.mxu0 %v1345
        %v1931 = vpop.f32.mrf.mxu0
        %v1932 = vadd.f32 0.0, %v1931
        %1933 = vdwg.mxu0
        %1934 = vmatpush.msra.mxu0 0.0
        %1935 = vmatpush.msra.mxu0 0.0
        %1936 = vmatpush.msra.mxu0 0.0
        %1937 = vmatpush.msra.mxu0 0.0
        %1938 = vmatpush.msra.mxu0 0.0
        %1939 = vmatpush.msra.mxu0 0.0
        %1940 = vmatpush.msra.mxu0 0.0
        %1941 = vmatpush.msra.mxu0 0.0
        %1942 = vmatpush.msra.mxu0 0.0
        %1943 = vmatpush.msra.mxu0 0.0
        %1944 = vmatpush.msra.mxu0 0.0
        %1945 = vmatpush.msra.mxu0 0.0
        %1946 = vmatpush.msra.mxu0 0.0
        %1947 = vmatpush.msra.mxu0 0.0
        %1948 = vmatpush.msra.mxu0 %v1544
        %1949 = vmatpush.msra.mxu0 %v1542
        %1950 = vmatmul.f32.gmra.mxu0 %v1343
        %v1951 = vpop.f32.mrf.mxu0
        %v1952 = vadd.f32 0.0, %v1951
        %1953 = vmatmul.f32.gmra.mxu0 %v1345
        %v1954 = vpop.f32.mrf.mxu0
        %v1955 = vadd.f32 0.0, %v1954
        %1956 = vdwg.mxu0
        %v1957 = vadd.f32 %v1883, %v1929
        %v1958 = vadd.f32 %v1906, %v1952
        %v1959 = vadd.f32 %v1886, %v1932
        %v1960 = vadd.f32 %v1909, %v1955
        %v1961 = vadd.f32 %v1957, %v1399
        %v1962 = vadd.f32 %v1958, %v1399
        %v1963 = vadd.f32 %v1959, %v1403
        %v1964 = vadd.f32 %v1960, %v1403
        %v1965 = vmax.f32 %v1961, 0.0
        %v1966 = vmax.f32 %v1962, 0.0
        %v1967 = vmax.f32 %v1963, 0.0
        %v1968 = vmax.f32 %v1964, 0.0
        %1969 = vmatpush.msra.mxu0 0.0
        %1970 = vmatpush.msra.mxu0 0.0
        %1971 = vmatpush.msra.mxu0 0.0
        %1972 = vmatpush.msra.mxu0 0.0
        %1973 = vmatpush.msra.mxu0 0.0
        %1974 = vmatpush.msra.mxu0 0.0
        %1975 = vmatpush.msra.mxu0 0.0
        %1976 = vmatpush.msra.mxu0 0.0
        %1977 = vmatpush.msra.mxu0 0.0
        %1978 = vmatpush.msra.mxu0 0.0
        %1979 = vmatpush.msra.mxu0 0.0
        %1980 = vmatpush.msra.mxu0 0.0
        %1981 = vmatpush.msra.mxu0 0.0
        %1982 = vmatpush.msra.mxu0 0.0
        %1983 = vmatpush.msra.mxu0 %v1967
        %1984 = vmatpush.msra.mxu0 %v1965
        %1985 = vmatmul.f32.gmra.mxu0 %v1425
        %v1986 = vpop.f32.mrf.mxu0
        %v1987 = vadd.f32 %v1415, %v1986
        %1988 = vmatmul.f32.gmra.mxu0 %v1427
        %v1989 = vpop.f32.mrf.mxu0
        %v1990 = vadd.f32 %v1419, %v1989
        %1991 = vdwg.mxu0
        %1992 = vmatpush.msra.mxu0 0.0
        %1993 = vmatpush.msra.mxu0 0.0
        %1994 = vmatpush.msra.mxu0 0.0
        %1995 = vmatpush.msra.mxu0 0.0
        %1996 = vmatpush.msra.mxu0 0.0
        %1997 = vmatpush.msra.mxu0 0.0
        %1998 = vmatpush.msra.mxu0 0.0
        %1999 = vmatpush.msra.mxu0 0.0
        %2000 = vmatpush.msra.mxu0 0.0
        %2001 = vmatpush.msra.mxu0 0.0
        %2002 = vmatpush.msra.mxu0 0.0
        %2003 = vmatpush.msra.mxu0 0.0
        %2004 = vmatpush.msra.mxu0 0.0
        %2005 = vmatpush.msra.mxu0 0.0
        %2006 = vmatpush.msra.mxu0 %v1968
        %2007 = vmatpush.msra.mxu0 %v1966
        %2008 = vmatmul.f32.gmra.mxu0 %v1425
        %v2009 = vpop.f32.mrf.mxu0
        %v2010 = vadd.f32 %v1415, %v2009
        %2011 = vmatmul.f32.gmra.mxu0 %v1427
        %v2012 = vpop.f32.mrf.mxu0
        %v2013 = vadd.f32 %v1419, %v2012
        %2014 = vdwg.mxu0
        %v2015 = vmax.f32 %v1987, 0.0
        %v2016 = vmax.f32 %v2010, 0.0
        %v2017 = vmax.f32 %v1990, 0.0
        %v2018 = vmax.f32 %v2013, 0.0
        %2019 = vmatpush.msra.mxu0 0.0
        %2020 = vmatpush.msra.mxu0 0.0
        %2021 = vmatpush.msra.mxu0 0.0
        %2022 = vmatpush.msra.mxu0 0.0
        %2023 = vmatpush.msra.mxu0 0.0
        %2024 = vmatpush.msra.mxu0 0.0
        %2025 = vmatpush.msra.mxu0 0.0
        %2026 = vmatpush.msra.mxu0 0.0
        %2027 = vmatpush.msra.mxu0 0.0
        %2028 = vmatpush.msra.mxu0 0.0
        %2029 = vmatpush.msra.mxu0 0.0
        %2030 = vmatpush.msra.mxu0 0.0
        %2031 = vmatpush.msra.mxu0 0.0
        %2032 = vmatpush.msra.mxu0 0.0
        %2033 = vmatpush.msra.mxu0 %v2017
        %2034 = vmatpush.msra.mxu0 %v2015
        %2035 = vmatmul.f32.gmra.mxu0 %v1491
        %v2036 = vpop.f32.mrf.mxu0
        %v2037 = vadd.f32 %v1481, %v2036
        %2038 = vmatmul.f32.gmra.mxu0 %v1493
        %v2039 = vpop.f32.mrf.mxu0
        %v2040 = vadd.f32 %v1485, %v2039
        %2041 = vdwg.mxu0
        %2042 = vmatpush.msra.mxu0 0.0
        %2043 = vmatpush.msra.mxu0 0.0
        %2044 = vmatpush.msra.mxu0 0.0
        %2045 = vmatpush.msra.mxu0 0.0
        %2046 = vmatpush.msra.mxu0 0.0
        %2047 = vmatpush.msra.mxu0 0.0
        %2048 = vmatpush.msra.mxu0 0.0
        %2049 = vmatpush.msra.mxu0 0.0
        %2050 = vmatpush.msra.mxu0 0.0
        %2051 = vmatpush.msra.mxu0 0.0
        %2052 = vmatpush.msra.mxu0 0.0
        %2053 = vmatpush.msra.mxu0 0.0
        %2054 = vmatpush.msra.mxu0 0.0
        %2055 = vmatpush.msra.mxu0 0.0
        %2056 = vmatpush.msra.mxu0 %v2018
        %2057 = vmatpush.msra.mxu0 %v2016
        %2058 = vmatmul.f32.gmra.mxu0 %v1491
        %v2059 = vpop.f32.mrf.mxu0
        %v2060 = vadd.f32 %v1481, %v2059
        %2061 = vmatmul.f32.gmra.mxu0 %v1493
        %v2062 = vpop.f32.mrf.mxu0
        %v2063 = vadd.f32 %v1485, %v2062
        %2064 = vdwg.mxu0
        %v2065 = vmax.f32 %v2037, 0.0
        %v2066 = vmax.f32 %v2060, 0.0
        %v2067 = vmax.f32 %v2040, 0.0
        %v2068 = vmax.f32 %v2063, 0.0
        %2069 = vmatpush.msra.mxu0 %v961
        %2070 = vmatpush.msra.mxu0 %v960
        %2071 = vmatpush.msra.mxu0 %v959
        %2072 = vmatpush.msra.mxu0 %v958
        %2073 = vmatpush.msra.mxu0 %v957
        %2074 = vmatpush.msra.mxu0 %v956
        %2075 = vmatpush.msra.mxu0 %v955
        %2076 = vmatpush.msra.mxu0 %v954
        %2077 = vmatpush.msra.mxu0 %v953
        %2078 = vmatpush.msra.mxu0 %v952
        %2079 = vmatpush.msra.mxu0 %v951
        %2080 = vmatpush.msra.mxu0 %v950
        %2081 = vmatpush.msra.mxu0 %v949
        %2082 = vmatpush.msra.mxu0 %v948
        %2083 = vmatpush.msra.mxu0 %v947
        %2084 = vmatpush.msra.mxu0 %v946
        %2085 = vmatmul.f32.gmra.mxu0 %v2065
        %v2086 = vpop.f32.mrf.mxu0
        %v2087 = vadd.f32 0.0, %v2086
        %2088 = vmatmul.f32.gmra.mxu0 %v2067
        %v2089 = vpop.f32.mrf.mxu0
        %v2090 = vadd.f32 0.0, %v2089
        %2091 = vdwg.mxu0
        %2092 = vmatpush.msra.mxu0 %v977
        %2093 = vmatpush.msra.mxu0 %v976
        %2094 = vmatpush.msra.mxu0 %v975
        %2095 = vmatpush.msra.mxu0 %v974
        %2096 = vmatpush.msra.mxu0 %v973
        %2097 = vmatpush.msra.mxu0 %v972
        %2098 = vmatpush.msra.mxu0 %v971
        %2099 = vmatpush.msra.mxu0 %v970
        %2100 = vmatpush.msra.mxu0 %v969
        %2101 = vmatpush.msra.mxu0 %v968
        %2102 = vmatpush.msra.mxu0 %v967
        %2103 = vmatpush.msra.mxu0 %v966
        %2104 = vmatpush.msra.mxu0 %v965
        %2105 = vmatpush.msra.mxu0 %v964
        %2106 = vmatpush.msra.mxu0 %v963
        %2107 = vmatpush.msra.mxu0 %v962
        %2108 = vmatmul.f32.gmra.mxu0 %v2066
        %v2109 = vpop.f32.mrf.mxu0
        %v2110 = vadd.f32 %v2087, %v2109
        %2111 = vmatmul.f32.gmra.mxu0 %v2068
        %v2112 = vpop.f32.mrf.mxu0
        %v2113 = vadd.f32 %v2090, %v2112
        %2114 = vdwg.mxu0
        %2115 = vmatpush.msra.mxu0 0.0
        %2116 = vmatpush.msra.mxu0 0.0
        %2117 = vmatpush.msra.mxu0 0.0
        %2118 = vmatpush.msra.mxu0 0.0
        %2119 = vmatpush.msra.mxu0 0.0
        %2120 = vmatpush.msra.mxu0 0.0
        %2121 = vmatpush.msra.mxu0 0.0
        %2122 = vmatpush.msra.mxu0 0.0
        %2123 = vmatpush.msra.mxu0 0.0
        %2124 = vmatpush.msra.mxu0 0.0
        %2125 = vmatpush.msra.mxu0 0.0
        %2126 = vmatpush.msra.mxu0 0.0
        %2127 = vmatpush.msra.mxu0 0.0
        %2128 = vmatpush.msra.mxu0 0.0
        %2129 = vmatpush.msra.mxu0 %v2113
        %2130 = vmatpush.msra.mxu0 %v2110
        %2131 = vmatmul.f32.gmra.mxu0 %v1595
        %v2132 = vpop.f32.mrf.mxu0
        %v2133 = vadd.f32 0.0, %v2132
        %2134 = vmatmul.f32.gmra.mxu0 %v1597
        %v2135 = vpop.f32.mrf.mxu0
        %v2136 = vadd.f32 0.0, %v2135
        %2137 = vdwg.mxu0
        %2138 = vmatpush.msra.mxu0 0.0
        %2139 = vmatpush.msra.mxu0 0.0
        %2140 = vmatpush.msra.mxu0 0.0
        %2141 = vmatpush.msra.mxu0 0.0
        %2142 = vmatpush.msra.mxu0 0.0
        %2143 = vmatpush.msra.mxu0 0.0
        %2144 = vmatpush.msra.mxu0 0.0
        %2145 = vmatpush.msra.mxu0 0.0
        %2146 = vmatpush.msra.mxu0 0.0
        %2147 = vmatpush.msra.mxu0 0.0
        %2148 = vmatpush.msra.mxu0 0.0
        %2149 = vmatpush.msra.mxu0 0.0
        %2150 = vmatpush.msra.mxu0 0.0
        %2151 = vmatpush.msra.mxu0 0.0
        %2152 = vmatpush.msra.mxu0 %v1744
        %2153 = vmatpush.msra.mxu0 %v1743
        %2154 = vmatmul.f32.gmra.mxu0 %v1626
        %v2155 = vpop.f32.mrf.mxu0
        %v2156 = vadd.f32 %v2133, %v2155
        %2157 = vmatmul.f32.gmra.mxu0 %v1628
        %v2158 = vpop.f32.mrf.mxu0
        %v2159 = vadd.f32 %v2136, %v2158
        %2160 = vdwg.mxu0
        %v2161 = vadd.f32 %v2156, %v1655
        %v2162 = vadd.f32 %v2159, %v1659
        %v2163 = vmax.f32 %v2161, 0.0
        %v2164 = vmax.f32 %v2162, 0.0
        %2165 = vmatpush.msra.mxu0 0.0
        %2166 = vmatpush.msra.mxu0 0.0
        %2167 = vmatpush.msra.mxu0 0.0
        %2168 = vmatpush.msra.mxu0 0.0
        %2169 = vmatpush.msra.mxu0 0.0
        %2170 = vmatpush.msra.mxu0 0.0
        %2171 = vmatpush.msra.mxu0 0.0
        %2172 = vmatpush.msra.mxu0 0.0
        %2173 = vmatpush.msra.mxu0 0.0
        %2174 = vmatpush.msra.mxu0 0.0
        %2175 = vmatpush.msra.mxu0 0.0
        %2176 = vmatpush.msra.mxu0 0.0
        %2177 = vmatpush.msra.mxu0 0.0
        %2178 = vmatpush.msra.mxu0 0.0
        %2179 = vmatpush.msra.mxu0 %v2164
        %2180 = vmatpush.msra.mxu0 %v2163
        %2181 = vmatmul.f32.gmra.mxu0 %v1677
        %v2182 = vpop.f32.mrf.mxu0
        %v2183 = vadd.f32 %v1667, %v2182
        %2184 = vmatmul.f32.gmra.mxu0 %v1679
        %v2185 = vpop.f32.mrf.mxu0
        %v2186 = vadd.f32 %v1671, %v2185
        %2187 = vdwg.mxu0
        %v2188 = vmax.f32 %v2183, 0.0
        %v2189 = vmax.f32 %v2186, 0.0
        %2190 = vmatpush.msra.mxu0 0.0
        %2191 = vmatpush.msra.mxu0 0.0
        %2192 = vmatpush.msra.mxu0 0.0
        %2193 = vmatpush.msra.mxu0 0.0
        %2194 = vmatpush.msra.mxu0 0.0
        %2195 = vmatpush.msra.mxu0 0.0
        %2196 = vmatpush.msra.mxu0 0.0
        %2197 = vmatpush.msra.mxu0 0.0
        %2198 = vmatpush.msra.mxu0 0.0
        %2199 = vmatpush.msra.mxu0 0.0
        %2200 = vmatpush.msra.mxu0 0.0
        %2201 = vmatpush.msra.mxu0 0.0
        %2202 = vmatpush.msra.mxu0 0.0
        %2203 = vmatpush.msra.mxu0 0.0
        %2204 = vmatpush.msra.mxu0 %v2189
        %2205 = vmatpush.msra.mxu0 %v2188
        %2206 = vmatmul.f32.gmra.mxu0 %v1715
        %v2207 = vpop.f32.mrf.mxu0
        %v2208 = vadd.f32 %v1708, %v2207
        %2209 = vmatmul.f32.gmra.mxu0 %v1718
        %v2210 = vpop.f32.mrf.mxu0
        %v2211 = vadd.f32 %v1712, %v2210
        %2212 = vdwg.mxu0
        %v2213 = vmax.f32 %v2208, 0.0
        %v2214 = vmax.f32 %v2211, 0.0
        %v2215 = vmul.f32 %v2213, %v1746
        %v2216 = vmul.f32 %v2214, %v1746
        %2217 = vmatpush.msra.mxu0 %v1059
        %2218 = vmatpush.msra.mxu0 %v1058
        %2219 = vmatpush.msra.mxu0 %v1057
        %2220 = vmatpush.msra.mxu0 %v1056
        %2221 = vmatpush.msra.mxu0 %v1055
        %2222 = vmatpush.msra.mxu0 %v1054
        %2223 = vmatpush.msra.mxu0 %v1053
        %2224 = vmatpush.msra.mxu0 %v1052
        %2225 = vmatpush.msra.mxu0 %v1051
        %2226 = vmatpush.msra.mxu0 %v1050
        %2227 = vmatpush.msra.mxu0 %v1049
        %2228 = vmatpush.msra.mxu0 %v1048
        %2229 = vmatpush.msra.mxu0 %v1047
        %2230 = vmatpush.msra.mxu0 %v1046
        %2231 = vmatpush.msra.mxu0 %v1045
        %2232 = vmatpush.msra.mxu0 %v1044
        %2233 = vmatmul.f32.gmra.mxu0 %v2215
        %v2234 = vpop.f32.mrf.mxu0
        %v2235 = vadd.f32 0.0, %v2234
        %2236 = vmatmul.f32.gmra.mxu0 %v2216
        %v2237 = vpop.f32.mrf.mxu0
        %v2238 = vadd.f32 0.0, %v2237
        %2239 = vdwg.mxu0
        %2248 = vrot.lane.b32.xlu0 %v528, 112
        %v2249 = vpop.permute.xlu0 %2248
        %2250 = vrot.lane.b32.xlu0 %v529, 112
        %v2251 = vpop.permute.xlu0 %2250
        %2252 = vrot.lane.b32.xlu0 %v530, 112
        %v2253 = vpop.permute.xlu0 %2252
        %2254 = vrot.lane.b32.xlu0 %v531, 112
        %v2255 = vpop.permute.xlu0 %2254
        %2256 = vrot.lane.b32.xlu0 %v532, 112
        %v2257 = vpop.permute.xlu0 %2256
        %2258 = vrot.lane.b32.xlu0 %v533, 112
        %v2259 = vpop.permute.xlu0 %2258
        %2260 = vrot.lane.b32.xlu0 %v534, 112
        %v2261 = vpop.permute.xlu0 %2260
        %2262 = vrot.lane.b32.xlu0 %v535, 112
        %v2263 = vpop.permute.xlu0 %2262
        %v2264 = vsel %vm1186, %v2249, 0
        %v2266 = vsel %vm1186, %v2251, 0
        %v2268 = vsel %vm1186, %v2253, 0
        %v2270 = vsel %vm1186, %v2255, 0
        %v2272 = vsel %vm1186, %v2257, 0
        %v2274 = vsel %vm1186, %v2259, 0
        %v2276 = vsel %vm1186, %v2261, 0
        %v2278 = vsel %vm1186, %v2263, 0
        %2280 = vmatpush.msra.mxu0 0.0
        %2281 = vmatpush.msra.mxu0 0.0
        %2282 = vmatpush.msra.mxu0 0.0
        %2283 = vmatpush.msra.mxu0 0.0
        %2284 = vmatpush.msra.mxu0 0.0
        %2285 = vmatpush.msra.mxu0 0.0
        %2286 = vmatpush.msra.mxu0 0.0
        %2287 = vmatpush.msra.mxu0 0.0
        %2288 = vmatpush.msra.mxu0 0.0
        %2289 = vmatpush.msra.mxu0 0.0
        %2290 = vmatpush.msra.mxu0 0.0
        %2291 = vmatpush.msra.mxu0 0.0
        %2292 = vmatpush.msra.mxu0 0.0
        %2293 = vmatpush.msra.mxu0 0.0
        %2294 = vmatpush.msra.mxu0 %v2238
        %2295 = vmatpush.msra.mxu0 %v2235
        %2296 = vmatmul.f32.gmra.mxu0 %v2264
        %v2297 = vpop.f32.mrf.mxu0
        %v2298 = vadd.f32 0.0, %v2297
        %2299 = vmatmul.f32.gmra.mxu0 %v2266
        %v2300 = vpop.f32.mrf.mxu0
        %v2301 = vadd.f32 0.0, %v2300
        %2302 = vmatmul.f32.gmra.mxu0 %v2268
        %v2303 = vpop.f32.mrf.mxu0
        %v2304 = vadd.f32 0.0, %v2303
        %2305 = vmatmul.f32.gmra.mxu0 %v2270
        %v2306 = vpop.f32.mrf.mxu0
        %v2307 = vadd.f32 0.0, %v2306
        %2308 = vmatmul.f32.gmra.mxu0 %v2272
        %v2309 = vpop.f32.mrf.mxu0
        %v2310 = vadd.f32 0.0, %v2309
        %2311 = vmatmul.f32.gmra.mxu0 %v2274
        %v2312 = vpop.f32.mrf.mxu0
        %v2313 = vadd.f32 0.0, %v2312
        %2314 = vmatmul.f32.gmra.mxu0 %v2276
        %v2315 = vpop.f32.mrf.mxu0
        %v2316 = vadd.f32 0.0, %v2315
        %2317 = vmatmul.f32.gmra.mxu0 %v2278
        %v2318 = vpop.f32.mrf.mxu0
        %v2319 = vadd.f32 0.0, %v2318
        %2320 = vdwg.mxu0
        %v2321 = vsel %vm1186, %v528, 0
        %v2323 = vsel %vm1186, %v529, 0
        %v2325 = vsel %vm1186, %v530, 0
        %v2327 = vsel %vm1186, %v531, 0
        %v2329 = vsel %vm1186, %v532, 0
        %v2331 = vsel %vm1186, %v533, 0
        %v2333 = vsel %vm1186, %v534, 0
        %v2335 = vsel %vm1186, %v535, 0
        %2337 = vmatpush.msra.mxu0 0.0
        %2338 = vmatpush.msra.mxu0 0.0
        %2339 = vmatpush.msra.mxu0 0.0
        %2340 = vmatpush.msra.mxu0 0.0
        %2341 = vmatpush.msra.mxu0 0.0
        %2342 = vmatpush.msra.mxu0 0.0
        %2343 = vmatpush.msra.mxu0 0.0
        %2344 = vmatpush.msra.mxu0 0.0
        %2345 = vmatpush.msra.mxu0 0.0
        %2346 = vmatpush.msra.mxu0 0.0
        %2347 = vmatpush.msra.mxu0 0.0
        %2348 = vmatpush.msra.mxu0 0.0
        %2349 = vmatpush.msra.mxu0 0.0
        %2350 = vmatpush.msra.mxu0 0.0
        %2351 = vmatpush.msra.mxu0 %v1771
        %2352 = vmatpush.msra.mxu0 %v1768
        %2353 = vmatmul.f32.gmra.mxu0 %v2321
        %v2354 = vpop.f32.mrf.mxu0
        %v2355 = vadd.f32 %v2298, %v2354
        %2356 = vmatmul.f32.gmra.mxu0 %v2323
        %v2357 = vpop.f32.mrf.mxu0
        %v2358 = vadd.f32 %v2301, %v2357
        %2359 = vmatmul.f32.gmra.mxu0 %v2325
        %v2360 = vpop.f32.mrf.mxu0
        %v2361 = vadd.f32 %v2304, %v2360
        %2362 = vmatmul.f32.gmra.mxu0 %v2327
        %v2363 = vpop.f32.mrf.mxu0
        %v2364 = vadd.f32 %v2307, %v2363
        %2365 = vmatmul.f32.gmra.mxu0 %v2329
        %v2366 = vpop.f32.mrf.mxu0
        %v2367 = vadd.f32 %v2310, %v2366
        %2368 = vmatmul.f32.gmra.mxu0 %v2331
        %v2369 = vpop.f32.mrf.mxu0
        %v2370 = vadd.f32 %v2313, %v2369
        %2371 = vmatmul.f32.gmra.mxu0 %v2333
        %v2372 = vpop.f32.mrf.mxu0
        %v2373 = vadd.f32 %v2316, %v2372
        %2374 = vmatmul.f32.gmra.mxu0 %v2335
        %v2375 = vpop.f32.mrf.mxu0
        %v2376 = vadd.f32 %v2319, %v2375
        %2377 = vdwg.mxu0
        %2378 = vmatpush.msra.mxu0 0.0
        %2379 = vmatpush.msra.mxu0 0.0
        %2380 = vmatpush.msra.mxu0 0.0
        %2381 = vmatpush.msra.mxu0 0.0
        %2382 = vmatpush.msra.mxu0 0.0
        %2383 = vmatpush.msra.mxu0 0.0
        %2384 = vmatpush.msra.mxu0 0.0
        %2385 = vmatpush.msra.mxu0 0.0
        %2386 = vmatpush.msra.mxu0 0.0
        %2387 = vmatpush.msra.mxu0 0.0
        %2388 = vmatpush.msra.mxu0 0.0
        %2389 = vmatpush.msra.mxu0 0.0
        %2390 = vmatpush.msra.mxu0 0.0
        %2391 = vmatpush.msra.mxu0 0.0
        %2392 = vmatpush.msra.mxu0 %v2214
        %2393 = vmatpush.msra.mxu0 %v2213
        %2394 = vmatmul.f32.gmra.mxu0 %v1188
        %v2395 = vpop.f32.mrf.mxu0
        %v2396 = vadd.f32 0.0, %v2395
        %2397 = vmatmul.f32.gmra.mxu0 %v1191
        %v2398 = vpop.f32.mrf.mxu0
        %v2399 = vadd.f32 0.0, %v2398
        %2400 = vdwg.mxu0
        %2401 = vmatpush.msra.mxu0 0.0
        %2402 = vmatpush.msra.mxu0 0.0
        %2403 = vmatpush.msra.mxu0 0.0
        %2404 = vmatpush.msra.mxu0 0.0
        %2405 = vmatpush.msra.mxu0 0.0
        %2406 = vmatpush.msra.mxu0 0.0
        %2407 = vmatpush.msra.mxu0 0.0
        %2408 = vmatpush.msra.mxu0 0.0
        %2409 = vmatpush.msra.mxu0 0.0
        %2410 = vmatpush.msra.mxu0 0.0
        %2411 = vmatpush.msra.mxu0 0.0
        %2412 = vmatpush.msra.mxu0 0.0
        %2413 = vmatpush.msra.mxu0 0.0
        %2414 = vmatpush.msra.mxu0 0.0
        %2415 = vmatpush.msra.mxu0 %v2214
        %2416 = vmatpush.msra.mxu0 %v2213
        %2417 = vmatmul.f32.gmra.mxu0 %v1220
        %v2418 = vpop.f32.mrf.mxu0
        %v2419 = vadd.f32 0.0, %v2418
        %2420 = vmatmul.f32.gmra.mxu0 %v1222
        %v2421 = vpop.f32.mrf.mxu0
        %v2422 = vadd.f32 0.0, %v2421
        %2423 = vdwg.mxu0
        %2424 = vmatpush.msra.mxu0 %v782
        %2425 = vmatpush.msra.mxu0 %v780
        %2426 = vmatpush.msra.mxu0 %v778
        %2427 = vmatpush.msra.mxu0 %v776
        %2428 = vmatpush.msra.mxu0 %v774
        %2429 = vmatpush.msra.mxu0 %v772
        %2430 = vmatpush.msra.mxu0 %v770
        %2431 = vmatpush.msra.mxu0 %v768
        %2432 = vmatpush.msra.mxu0 %v766
        %2433 = vmatpush.msra.mxu0 %v764
        %2434 = vmatpush.msra.mxu0 %v762
        %2435 = vmatpush.msra.mxu0 %v760
        %2436 = vmatpush.msra.mxu0 %v758
        %2437 = vmatpush.msra.mxu0 %v756
        %2438 = vmatpush.msra.mxu0 %v754
        %2439 = vmatpush.msra.mxu0 %v752
        %2440 = vmatmul.f32.gmra.mxu0 %v2419
        %v2441 = vpop.f32.mrf.mxu0
        %v2442 = vadd.f32 0.0, %v2441
        %2443 = vmatmul.f32.gmra.mxu0 %v2422
        %v2444 = vpop.f32.mrf.mxu0
        %v2445 = vadd.f32 0.0, %v2444
        %2446 = vdwg.mxu0
        %2447 = vmatpush.msra.mxu0 %v783
        %2448 = vmatpush.msra.mxu0 %v781
        %2449 = vmatpush.msra.mxu0 %v779
        %2450 = vmatpush.msra.mxu0 %v777
        %2451 = vmatpush.msra.mxu0 %v775
        %2452 = vmatpush.msra.mxu0 %v773
        %2453 = vmatpush.msra.mxu0 %v771
        %2454 = vmatpush.msra.mxu0 %v769
        %2455 = vmatpush.msra.mxu0 %v767
        %2456 = vmatpush.msra.mxu0 %v765
        %2457 = vmatpush.msra.mxu0 %v763
        %2458 = vmatpush.msra.mxu0 %v761
        %2459 = vmatpush.msra.mxu0 %v759
        %2460 = vmatpush.msra.mxu0 %v757
        %2461 = vmatpush.msra.mxu0 %v755
        %2462 = vmatpush.msra.mxu0 %v753
        %2463 = vmatmul.f32.gmra.mxu0 %v2419
        %v2464 = vpop.f32.mrf.mxu0
        %v2465 = vadd.f32 0.0, %v2464
        %2466 = vmatmul.f32.gmra.mxu0 %v2422
        %v2467 = vpop.f32.mrf.mxu0
        %v2468 = vadd.f32 0.0, %v2467
        %2469 = vdwg.mxu0
        %2470 = vmatpush.msra.mxu0 %v684
        %2471 = vmatpush.msra.mxu0 %v682
        %2472 = vmatpush.msra.mxu0 %v680
        %2473 = vmatpush.msra.mxu0 %v678
        %2474 = vmatpush.msra.mxu0 %v676
        %2475 = vmatpush.msra.mxu0 %v674
        %2476 = vmatpush.msra.mxu0 %v672
        %2477 = vmatpush.msra.mxu0 %v670
        %2478 = vmatpush.msra.mxu0 %v668
        %2479 = vmatpush.msra.mxu0 %v666
        %2480 = vmatpush.msra.mxu0 %v664
        %2481 = vmatpush.msra.mxu0 %v662
        %2482 = vmatpush.msra.mxu0 %v660
        %2483 = vmatpush.msra.mxu0 %v658
        %2484 = vmatpush.msra.mxu0 %v656
        %2485 = vmatpush.msra.mxu0 %v654
        %2486 = vmatmul.f32.gmra.mxu0 %v2396
        %v2487 = vpop.f32.mrf.mxu0
        %v2488 = vadd.f32 %v2442, %v2487
        %2489 = vmatmul.f32.gmra.mxu0 %v2399
        %v2490 = vpop.f32.mrf.mxu0
        %v2491 = vadd.f32 %v2445, %v2490
        %2492 = vdwg.mxu0
        %2493 = vmatpush.msra.mxu0 %v685
        %2494 = vmatpush.msra.mxu0 %v683
        %2495 = vmatpush.msra.mxu0 %v681
        %2496 = vmatpush.msra.mxu0 %v679
        %2497 = vmatpush.msra.mxu0 %v677
        %2498 = vmatpush.msra.mxu0 %v675
        %2499 = vmatpush.msra.mxu0 %v673
        %2500 = vmatpush.msra.mxu0 %v671
        %2501 = vmatpush.msra.mxu0 %v669
        %2502 = vmatpush.msra.mxu0 %v667
        %2503 = vmatpush.msra.mxu0 %v665
        %2504 = vmatpush.msra.mxu0 %v663
        %2505 = vmatpush.msra.mxu0 %v661
        %2506 = vmatpush.msra.mxu0 %v659
        %2507 = vmatpush.msra.mxu0 %v657
        %2508 = vmatpush.msra.mxu0 %v655
        %2509 = vmatmul.f32.gmra.mxu0 %v2396
        %v2510 = vpop.f32.mrf.mxu0
        %v2511 = vadd.f32 %v2465, %v2510
        %2512 = vmatmul.f32.gmra.mxu0 %v2399
        %v2513 = vpop.f32.mrf.mxu0
        %v2514 = vadd.f32 %v2468, %v2513
        %2515 = vdwg.mxu0
        %2516 = vmatpush.msra.mxu0 0.0
        %2517 = vmatpush.msra.mxu0 0.0
        %2518 = vmatpush.msra.mxu0 0.0
        %2519 = vmatpush.msra.mxu0 0.0
        %2520 = vmatpush.msra.mxu0 0.0
        %2521 = vmatpush.msra.mxu0 0.0
        %2522 = vmatpush.msra.mxu0 0.0
        %2523 = vmatpush.msra.mxu0 0.0
        %2524 = vmatpush.msra.mxu0 0.0
        %2525 = vmatpush.msra.mxu0 0.0
        %2526 = vmatpush.msra.mxu0 0.0
        %2527 = vmatpush.msra.mxu0 0.0
        %2528 = vmatpush.msra.mxu0 0.0
        %2529 = vmatpush.msra.mxu0 0.0
        %2530 = vmatpush.msra.mxu0 %v2067
        %2531 = vmatpush.msra.mxu0 %v2065
        %2532 = vmatmul.f32.gmra.mxu0 %v1343
        %v2533 = vpop.f32.mrf.mxu0
        %v2534 = vadd.f32 0.0, %v2533
        %2535 = vmatmul.f32.gmra.mxu0 %v1345
        %v2536 = vpop.f32.mrf.mxu0
        %v2537 = vadd.f32 0.0, %v2536
        %2538 = vdwg.mxu0
        %2539 = vmatpush.msra.mxu0 0.0
        %2540 = vmatpush.msra.mxu0 0.0
        %2541 = vmatpush.msra.mxu0 0.0
        %2542 = vmatpush.msra.mxu0 0.0
        %2543 = vmatpush.msra.mxu0 0.0
        %2544 = vmatpush.msra.mxu0 0.0
        %2545 = vmatpush.msra.mxu0 0.0
        %2546 = vmatpush.msra.mxu0 0.0
        %2547 = vmatpush.msra.mxu0 0.0
        %2548 = vmatpush.msra.mxu0 0.0
        %2549 = vmatpush.msra.mxu0 0.0
        %2550 = vmatpush.msra.mxu0 0.0
        %2551 = vmatpush.msra.mxu0 0.0
        %2552 = vmatpush.msra.mxu0 0.0
        %2553 = vmatpush.msra.mxu0 %v2068
        %2554 = vmatpush.msra.mxu0 %v2066
        %2555 = vmatmul.f32.gmra.mxu0 %v1343
        %v2556 = vpop.f32.mrf.mxu0
        %v2557 = vadd.f32 0.0, %v2556
        %2558 = vmatmul.f32.gmra.mxu0 %v1345
        %v2559 = vpop.f32.mrf.mxu0
        %v2560 = vadd.f32 0.0, %v2559
        %2561 = vdwg.mxu0
        %v2562 = vadd.f32 %v2488, %v2534
        %v2563 = vadd.f32 %v2511, %v2557
        %v2564 = vadd.f32 %v2491, %v2537
        %v2565 = vadd.f32 %v2514, %v2560
        %v2566 = vadd.f32 %v2562, %v1399
        %v2567 = vadd.f32 %v2563, %v1399
        %v2568 = vadd.f32 %v2564, %v1403
        %v2569 = vadd.f32 %v2565, %v1403
        %v2570 = vmax.f32 %v2566, 0.0
        %v2571 = vmax.f32 %v2567, 0.0
        %v2572 = vmax.f32 %v2568, 0.0
        %v2573 = vmax.f32 %v2569, 0.0
        %2574 = vmatpush.msra.mxu0 0.0
        %2575 = vmatpush.msra.mxu0 0.0
        %2576 = vmatpush.msra.mxu0 0.0
        %2577 = vmatpush.msra.mxu0 0.0
        %2578 = vmatpush.msra.mxu0 0.0
        %2579 = vmatpush.msra.mxu0 0.0
        %2580 = vmatpush.msra.mxu0 0.0
        %2581 = vmatpush.msra.mxu0 0.0
        %2582 = vmatpush.msra.mxu0 0.0
        %2583 = vmatpush.msra.mxu0 0.0
        %2584 = vmatpush.msra.mxu0 0.0
        %2585 = vmatpush.msra.mxu0 0.0
        %2586 = vmatpush.msra.mxu0 0.0
        %2587 = vmatpush.msra.mxu0 0.0
        %2588 = vmatpush.msra.mxu0 %v2572
        %2589 = vmatpush.msra.mxu0 %v2570
        %2590 = vmatmul.f32.gmra.mxu0 %v1425
        %v2591 = vpop.f32.mrf.mxu0
        %v2592 = vadd.f32 %v1415, %v2591
        %2593 = vmatmul.f32.gmra.mxu0 %v1427
        %v2594 = vpop.f32.mrf.mxu0
        %v2595 = vadd.f32 %v1419, %v2594
        %2596 = vdwg.mxu0
        %2597 = vmatpush.msra.mxu0 0.0
        %2598 = vmatpush.msra.mxu0 0.0
        %2599 = vmatpush.msra.mxu0 0.0
        %2600 = vmatpush.msra.mxu0 0.0
        %2601 = vmatpush.msra.mxu0 0.0
        %2602 = vmatpush.msra.mxu0 0.0
        %2603 = vmatpush.msra.mxu0 0.0
        %2604 = vmatpush.msra.mxu0 0.0
        %2605 = vmatpush.msra.mxu0 0.0
        %2606 = vmatpush.msra.mxu0 0.0
        %2607 = vmatpush.msra.mxu0 0.0
        %2608 = vmatpush.msra.mxu0 0.0
        %2609 = vmatpush.msra.mxu0 0.0
        %2610 = vmatpush.msra.mxu0 0.0
        %2611 = vmatpush.msra.mxu0 %v2573
        %2612 = vmatpush.msra.mxu0 %v2571
        %2613 = vmatmul.f32.gmra.mxu0 %v1425
        %v2614 = vpop.f32.mrf.mxu0
        %v2615 = vadd.f32 %v1415, %v2614
        %2616 = vmatmul.f32.gmra.mxu0 %v1427
        %v2617 = vpop.f32.mrf.mxu0
        %v2618 = vadd.f32 %v1419, %v2617
        %2619 = vdwg.mxu0
        %v2620 = vmax.f32 %v2592, 0.0
        %v2621 = vmax.f32 %v2615, 0.0
        %v2622 = vmax.f32 %v2595, 0.0
        %v2623 = vmax.f32 %v2618, 0.0
        %2624 = vmatpush.msra.mxu0 0.0
        %2625 = vmatpush.msra.mxu0 0.0
        %2626 = vmatpush.msra.mxu0 0.0
        %2627 = vmatpush.msra.mxu0 0.0
        %2628 = vmatpush.msra.mxu0 0.0
        %2629 = vmatpush.msra.mxu0 0.0
        %2630 = vmatpush.msra.mxu0 0.0
        %2631 = vmatpush.msra.mxu0 0.0
        %2632 = vmatpush.msra.mxu0 0.0
        %2633 = vmatpush.msra.mxu0 0.0
        %2634 = vmatpush.msra.mxu0 0.0
        %2635 = vmatpush.msra.mxu0 0.0
        %2636 = vmatpush.msra.mxu0 0.0
        %2637 = vmatpush.msra.mxu0 0.0
        %2638 = vmatpush.msra.mxu0 %v2622
        %2639 = vmatpush.msra.mxu0 %v2620
        %2640 = vmatmul.f32.gmra.mxu0 %v1491
        %v2641 = vpop.f32.mrf.mxu0
        %v2642 = vadd.f32 %v1481, %v2641
        %2643 = vmatmul.f32.gmra.mxu0 %v1493
        %v2644 = vpop.f32.mrf.mxu0
        %v2645 = vadd.f32 %v1485, %v2644
        %2646 = vdwg.mxu0
        %2647 = vmatpush.msra.mxu0 0.0
        %2648 = vmatpush.msra.mxu0 0.0
        %2649 = vmatpush.msra.mxu0 0.0
        %2650 = vmatpush.msra.mxu0 0.0
        %2651 = vmatpush.msra.mxu0 0.0
        %2652 = vmatpush.msra.mxu0 0.0
        %2653 = vmatpush.msra.mxu0 0.0
        %2654 = vmatpush.msra.mxu0 0.0
        %2655 = vmatpush.msra.mxu0 0.0
        %2656 = vmatpush.msra.mxu0 0.0
        %2657 = vmatpush.msra.mxu0 0.0
        %2658 = vmatpush.msra.mxu0 0.0
        %2659 = vmatpush.msra.mxu0 0.0
        %2660 = vmatpush.msra.mxu0 0.0
        %2661 = vmatpush.msra.mxu0 %v2623
        %2662 = vmatpush.msra.mxu0 %v2621
        %2663 = vmatmul.f32.gmra.mxu0 %v1491
        %v2664 = vpop.f32.mrf.mxu0
        %v2665 = vadd.f32 %v1481, %v2664
        %2666 = vmatmul.f32.gmra.mxu0 %v1493
        %v2667 = vpop.f32.mrf.mxu0
        %v2668 = vadd.f32 %v1485, %v2667
        %2669 = vdwg.mxu0
        %v2670 = vmax.f32 %v2642, 0.0
        %v2671 = vmax.f32 %v2665, 0.0
        %v2672 = vmax.f32 %v2645, 0.0
        %v2673 = vmax.f32 %v2668, 0.0
        %2674 = vmatpush.msra.mxu0 %v961
        %2675 = vmatpush.msra.mxu0 %v960
        %2676 = vmatpush.msra.mxu0 %v959
        %2677 = vmatpush.msra.mxu0 %v958
        %2678 = vmatpush.msra.mxu0 %v957
        %2679 = vmatpush.msra.mxu0 %v956
        %2680 = vmatpush.msra.mxu0 %v955
        %2681 = vmatpush.msra.mxu0 %v954
        %2682 = vmatpush.msra.mxu0 %v953
        %2683 = vmatpush.msra.mxu0 %v952
        %2684 = vmatpush.msra.mxu0 %v951
        %2685 = vmatpush.msra.mxu0 %v950
        %2686 = vmatpush.msra.mxu0 %v949
        %2687 = vmatpush.msra.mxu0 %v948
        %2688 = vmatpush.msra.mxu0 %v947
        %2689 = vmatpush.msra.mxu0 %v946
        %2690 = vmatmul.f32.gmra.mxu0 %v2670
        %v2691 = vpop.f32.mrf.mxu0
        %v2692 = vadd.f32 0.0, %v2691
        %2693 = vmatmul.f32.gmra.mxu0 %v2672
        %v2694 = vpop.f32.mrf.mxu0
        %v2695 = vadd.f32 0.0, %v2694
        %2696 = vdwg.mxu0
        %2697 = vmatpush.msra.mxu0 %v977
        %2698 = vmatpush.msra.mxu0 %v976
        %2699 = vmatpush.msra.mxu0 %v975
        %2700 = vmatpush.msra.mxu0 %v974
        %2701 = vmatpush.msra.mxu0 %v973
        %2702 = vmatpush.msra.mxu0 %v972
        %2703 = vmatpush.msra.mxu0 %v971
        %2704 = vmatpush.msra.mxu0 %v970
        %2705 = vmatpush.msra.mxu0 %v969
        %2706 = vmatpush.msra.mxu0 %v968
        %2707 = vmatpush.msra.mxu0 %v967
        %2708 = vmatpush.msra.mxu0 %v966
        %2709 = vmatpush.msra.mxu0 %v965
        %2710 = vmatpush.msra.mxu0 %v964
        %2711 = vmatpush.msra.mxu0 %v963
        %2712 = vmatpush.msra.mxu0 %v962
        %2713 = vmatmul.f32.gmra.mxu0 %v2671
        %v2714 = vpop.f32.mrf.mxu0
        %v2715 = vadd.f32 %v2692, %v2714
        %2716 = vmatmul.f32.gmra.mxu0 %v2673
        %v2717 = vpop.f32.mrf.mxu0
        %v2718 = vadd.f32 %v2695, %v2717
        %2719 = vdwg.mxu0
        %2720 = vmatpush.msra.mxu0 0.0
        %2721 = vmatpush.msra.mxu0 0.0
        %2722 = vmatpush.msra.mxu0 0.0
        %2723 = vmatpush.msra.mxu0 0.0
        %2724 = vmatpush.msra.mxu0 0.0
        %2725 = vmatpush.msra.mxu0 0.0
        %2726 = vmatpush.msra.mxu0 0.0
        %2727 = vmatpush.msra.mxu0 0.0
        %2728 = vmatpush.msra.mxu0 0.0
        %2729 = vmatpush.msra.mxu0 0.0
        %2730 = vmatpush.msra.mxu0 0.0
        %2731 = vmatpush.msra.mxu0 0.0
        %2732 = vmatpush.msra.mxu0 0.0
        %2733 = vmatpush.msra.mxu0 0.0
        %2734 = vmatpush.msra.mxu0 %v2718
        %2735 = vmatpush.msra.mxu0 %v2715
        %2736 = vmatmul.f32.gmra.mxu0 %v1595
        %v2737 = vpop.f32.mrf.mxu0
        %v2738 = vadd.f32 0.0, %v2737
        %2739 = vmatmul.f32.gmra.mxu0 %v1597
        %v2740 = vpop.f32.mrf.mxu0
        %v2741 = vadd.f32 0.0, %v2740
        %2742 = vdwg.mxu0
        %2743 = vmatpush.msra.mxu0 0.0
        %2744 = vmatpush.msra.mxu0 0.0
        %2745 = vmatpush.msra.mxu0 0.0
        %2746 = vmatpush.msra.mxu0 0.0
        %2747 = vmatpush.msra.mxu0 0.0
        %2748 = vmatpush.msra.mxu0 0.0
        %2749 = vmatpush.msra.mxu0 0.0
        %2750 = vmatpush.msra.mxu0 0.0
        %2751 = vmatpush.msra.mxu0 0.0
        %2752 = vmatpush.msra.mxu0 0.0
        %2753 = vmatpush.msra.mxu0 0.0
        %2754 = vmatpush.msra.mxu0 0.0
        %2755 = vmatpush.msra.mxu0 0.0
        %2756 = vmatpush.msra.mxu0 0.0
        %2757 = vmatpush.msra.mxu0 %v2214
        %2758 = vmatpush.msra.mxu0 %v2213
        %2759 = vmatmul.f32.gmra.mxu0 %v1626
        %v2760 = vpop.f32.mrf.mxu0
        %v2761 = vadd.f32 %v2738, %v2760
        %2762 = vmatmul.f32.gmra.mxu0 %v1628
        %v2763 = vpop.f32.mrf.mxu0
        %v2764 = vadd.f32 %v2741, %v2763
        %2765 = vdwg.mxu0
        %v2766 = vadd.f32 %v2761, %v1655
        %v2767 = vadd.f32 %v2764, %v1659
        %v2768 = vmax.f32 %v2766, 0.0
        %v2769 = vmax.f32 %v2767, 0.0
        %2770 = vmatpush.msra.mxu0 0.0
        %2771 = vmatpush.msra.mxu0 0.0
        %2772 = vmatpush.msra.mxu0 0.0
        %2773 = vmatpush.msra.mxu0 0.0
        %2774 = vmatpush.msra.mxu0 0.0
        %2775 = vmatpush.msra.mxu0 0.0
        %2776 = vmatpush.msra.mxu0 0.0
        %2777 = vmatpush.msra.mxu0 0.0
        %2778 = vmatpush.msra.mxu0 0.0
        %2779 = vmatpush.msra.mxu0 0.0
        %2780 = vmatpush.msra.mxu0 0.0
        %2781 = vmatpush.msra.mxu0 0.0
        %2782 = vmatpush.msra.mxu0 0.0
        %2783 = vmatpush.msra.mxu0 0.0
        %2784 = vmatpush.msra.mxu0 %v2769
        %2785 = vmatpush.msra.mxu0 %v2768
        %2786 = vmatmul.f32.gmra.mxu0 %v1677
        %v2787 = vpop.f32.mrf.mxu0
        %v2788 = vadd.f32 %v1667, %v2787
        %2789 = vmatmul.f32.gmra.mxu0 %v1679
        %v2790 = vpop.f32.mrf.mxu0
        %v2791 = vadd.f32 %v1671, %v2790
        %2792 = vdwg.mxu0
        %v2793 = vmax.f32 %v2788, 0.0
        %v2794 = vmax.f32 %v2791, 0.0
        %2795 = vmatpush.msra.mxu0 0.0
        %2796 = vmatpush.msra.mxu0 0.0
        %2797 = vmatpush.msra.mxu0 0.0
        %2798 = vmatpush.msra.mxu0 0.0
        %2799 = vmatpush.msra.mxu0 0.0
        %2800 = vmatpush.msra.mxu0 0.0
        %2801 = vmatpush.msra.mxu0 0.0
        %2802 = vmatpush.msra.mxu0 0.0
        %2803 = vmatpush.msra.mxu0 0.0
        %2804 = vmatpush.msra.mxu0 0.0
        %2805 = vmatpush.msra.mxu0 0.0
        %2806 = vmatpush.msra.mxu0 0.0
        %2807 = vmatpush.msra.mxu0 0.0
        %2808 = vmatpush.msra.mxu0 0.0
        %2809 = vmatpush.msra.mxu0 %v2794
        %2810 = vmatpush.msra.mxu0 %v2793
        %2811 = vmatmul.f32.gmra.mxu0 %v1715
        %v2812 = vpop.f32.mrf.mxu0
        %v2813 = vadd.f32 %v1708, %v2812
        %2814 = vmatmul.f32.gmra.mxu0 %v1718
        %v2815 = vpop.f32.mrf.mxu0
        %v2816 = vadd.f32 %v1712, %v2815
        %2817 = vdwg.mxu0
        %v2818 = vmax.f32 %v2813, 0.0
        %v2819 = vmax.f32 %v2816, 0.0
        %v2820 = vmul.f32 %v2818, %v1746
        %v2821 = vmul.f32 %v2819, %v1746
        %2822 = vmatpush.msra.mxu0 %v1059
        %2823 = vmatpush.msra.mxu0 %v1058
        %2824 = vmatpush.msra.mxu0 %v1057
        %2825 = vmatpush.msra.mxu0 %v1056
        %2826 = vmatpush.msra.mxu0 %v1055
        %2827 = vmatpush.msra.mxu0 %v1054
        %2828 = vmatpush.msra.mxu0 %v1053
        %2829 = vmatpush.msra.mxu0 %v1052
        %2830 = vmatpush.msra.mxu0 %v1051
        %2831 = vmatpush.msra.mxu0 %v1050
        %2832 = vmatpush.msra.mxu0 %v1049
        %2833 = vmatpush.msra.mxu0 %v1048
        %2834 = vmatpush.msra.mxu0 %v1047
        %2835 = vmatpush.msra.mxu0 %v1046
        %2836 = vmatpush.msra.mxu0 %v1045
        %2837 = vmatpush.msra.mxu0 %v1044
        %2838 = vmatmul.f32.gmra.mxu0 %v2820
        %v2839 = vpop.f32.mrf.mxu0
        %v2840 = vadd.f32 0.0, %v2839
        %2841 = vmatmul.f32.gmra.mxu0 %v2821
        %v2842 = vpop.f32.mrf.mxu0
        %v2843 = vadd.f32 0.0, %v2842
        %2844 = vdwg.mxu0
        %2845 = vrot.lane.b32.xlu0 %v528, 96
        %v2846 = vpop.permute.xlu0 %2845
        %2847 = vrot.lane.b32.xlu0 %v529, 96
        %v2848 = vpop.permute.xlu0 %2847
        %2849 = vrot.lane.b32.xlu0 %v530, 96
        %v2850 = vpop.permute.xlu0 %2849
        %2851 = vrot.lane.b32.xlu0 %v531, 96
        %v2852 = vpop.permute.xlu0 %2851
        %2853 = vrot.lane.b32.xlu0 %v532, 96
        %v2854 = vpop.permute.xlu0 %2853
        %2855 = vrot.lane.b32.xlu0 %v533, 96
        %v2856 = vpop.permute.xlu0 %2855
        %2857 = vrot.lane.b32.xlu0 %v534, 96
        %v2858 = vpop.permute.xlu0 %2857
        %2859 = vrot.lane.b32.xlu0 %v535, 96
        %v2860 = vpop.permute.xlu0 %2859
        %v2861 = vsel %vm1186, %v2846, 0
        %v2863 = vsel %vm1186, %v2848, 0
        %v2865 = vsel %vm1186, %v2850, 0
        %v2867 = vsel %vm1186, %v2852, 0
        %v2869 = vsel %vm1186, %v2854, 0
        %v2871 = vsel %vm1186, %v2856, 0
        %v2873 = vsel %vm1186, %v2858, 0
        %v2875 = vsel %vm1186, %v2860, 0
        %2877 = vmatpush.msra.mxu0 0.0
        %2878 = vmatpush.msra.mxu0 0.0
        %2879 = vmatpush.msra.mxu0 0.0
        %2880 = vmatpush.msra.mxu0 0.0
        %2881 = vmatpush.msra.mxu0 0.0
        %2882 = vmatpush.msra.mxu0 0.0
        %2883 = vmatpush.msra.mxu0 0.0
        %2884 = vmatpush.msra.mxu0 0.0
        %2885 = vmatpush.msra.mxu0 0.0
        %2886 = vmatpush.msra.mxu0 0.0
        %2887 = vmatpush.msra.mxu0 0.0
        %2888 = vmatpush.msra.mxu0 0.0
        %2889 = vmatpush.msra.mxu0 0.0
        %2890 = vmatpush.msra.mxu0 0.0
        %2891 = vmatpush.msra.mxu0 %v2843
        %2892 = vmatpush.msra.mxu0 %v2840
        %2893 = vmatmul.f32.gmra.mxu0 %v2861
        %v2894 = vpop.f32.mrf.mxu0
        %v2895 = vadd.f32 0.0, %v2894
        %2896 = vmatmul.f32.gmra.mxu0 %v2863
        %v2897 = vpop.f32.mrf.mxu0
        %v2898 = vadd.f32 0.0, %v2897
        %2899 = vmatmul.f32.gmra.mxu0 %v2865
        %v2900 = vpop.f32.mrf.mxu0
        %v2901 = vadd.f32 0.0, %v2900
        %2902 = vmatmul.f32.gmra.mxu0 %v2867
        %v2903 = vpop.f32.mrf.mxu0
        %v2904 = vadd.f32 0.0, %v2903
        %2905 = vmatmul.f32.gmra.mxu0 %v2869
        %v2906 = vpop.f32.mrf.mxu0
        %v2907 = vadd.f32 0.0, %v2906
        %2908 = vmatmul.f32.gmra.mxu0 %v2871
        %v2909 = vpop.f32.mrf.mxu0
        %v2910 = vadd.f32 0.0, %v2909
        %2911 = vmatmul.f32.gmra.mxu0 %v2873
        %v2912 = vpop.f32.mrf.mxu0
        %v2913 = vadd.f32 0.0, %v2912
        %2914 = vmatmul.f32.gmra.mxu0 %v2875
        %v2915 = vpop.f32.mrf.mxu0
        %v2916 = vadd.f32 0.0, %v2915
        %2917 = vdwg.mxu0
        %v2918 = vadd.f32 %v2355, %v2895
        %v2919 = vadd.f32 %v2358, %v2898
        %v2920 = vadd.f32 %v2361, %v2901
        %v2921 = vadd.f32 %v2364, %v2904
        %v2922 = vadd.f32 %v2367, %v2907
        %v2923 = vadd.f32 %v2370, %v2910
        %v2924 = vadd.f32 %v2373, %v2913
        %v2925 = vadd.f32 %v2376, %v2916
        %2926 = vxpose.xlu0.b32.start [1/16] %v2918, 128
        %2927 = vxpose.xlu0.b32.cont [2/16] %v2919, 128
        %2928 = vxpose.xlu0.b32.cont [3/16] %v2920, 128
        %2929 = vxpose.xlu0.b32.cont [4/16] %v2921, 128
        %2930 = vxpose.xlu0.b32.cont [5/16] %v2922, 128
        %2931 = vxpose.xlu0.b32.cont [6/16] %v2923, 128
        %2932 = vxpose.xlu0.b32.cont [7/16] %v2924, 128
        %2933 = vxpose.xlu0.b32.cont [8/16] %v2925, 128
        %2934 = vxpose.xlu0.b32.cont [9/16] 0.0, 128
        %2935 = vxpose.xlu0.b32.cont [10/16] 0.0, 128
        %2936 = vxpose.xlu0.b32.cont [11/16] 0.0, 128
        %2937 = vxpose.xlu0.b32.cont [12/16] 0.0, 128
        %2938 = vxpose.xlu0.b32.cont [13/16] 0.0, 128
        %2939 = vxpose.xlu0.b32.cont [14/16] 0.0, 128
        %2940 = vxpose.xlu0.b32.cont [15/16] 0.0, 128
        %2941 = vxpose.xlu0.b32.end [16/16] 0.0, 128
        %v2942 = vpop.trf.xlu0
        %v2943 = vpop.trf.xlu0
        %v2944 = vpop.trf.xlu0
        %v2945 = vpop.trf.xlu0
        %v2946 = vpop.trf.xlu0
        %v2947 = vpop.trf.xlu0
        %v2948 = vpop.trf.xlu0
        %v2949 = vpop.trf.xlu0
        %v2950 = vpop.trf.xlu0
        %v2951 = vpop.trf.xlu0
        %v2952 = vpop.trf.xlu0
        %v2953 = vpop.trf.xlu0
        %v2954 = vpop.trf.xlu0
        %v2955 = vpop.trf.xlu0
        %v2956 = vpop.trf.xlu0
        %v2957 = vpop.trf.xlu0
        %v2959 = vperm.slane %v536, 0
        %v2961 = vadd.f32 %v2942, %v2959
        %vm2962 = vcmask 523264
        %2963 = vst.msk [vmem:[%s519] sm:$0xff] %vm2962, %v2961
        %p2964 = scmp.lt.s32.totalorder %s22, 3
        %s2965 = scalar_select %p2964, %s22, 3
        %s2966 = smul.addr %s2965, 8
        %s2967 = scalar_lea.vmem %s11, %s2966
        // Predicated region
        $region103: #{vae_encoder_forward.1} parent=97 // pred_check
          %p2968 = pneg %p301
        $region104: #{vae_encoder_forward.1} parent=97 // pred_check_branch
          %2970 = sbr.rel (%p2968) target = $region106
        $region105: #{vae_encoder_forward.1} parent=97 // pred_region
          _
        $region106: #{vae_encoder_forward.1} parent=97 // pred_fallthru
          _
      $region98: #{vae_encoder_forward.1} parent=5 // pred_fallthru
        _
      %p2971 = scmp.le.s32.totalorder 2, %s17
      // Predicated region
      $region107: #{vae_encoder_forward.1} parent=5 // pred_check
        %p2972 = pneg %p2971
      $region108: #{vae_encoder_forward.1} parent=5 // pred_check_branch
        %2974 = sbr.rel (%p2972) target = $region110
      $region109: #{vae_encoder_forward.1} parent=5 // pred_region
        %s2975 = ssub.s32 %s17, 2
        // Predicated region
        $region111: #{vae_encoder_forward.1} parent=109 // pred_check
          %p2976 = pneg %p307
        $region112: #{vae_encoder_forward.1} parent=109 // pred_check_branch
          %2978 = sbr.rel (%p2976) target = $region114
        $region113: #{vae_encoder_forward.1} parent=109 // pred_region
          %p2979 = scmp.lt.s32.totalorder %s23, 3
          %s2980 = scalar_select %p2979, %s23, 3
          %s2981 = smul.addr %s2980, 8
          %s2982 = scalar_lea.vmem %s11, %s2981
        $region114: #{vae_encoder_forward.1} parent=109 // pred_fallthru
          _
      $region110: #{vae_encoder_forward.1} parent=5 // pred_fallthru
        _
    $region6: #{vae_encoder_forward.1} parent=1 // loop_footer
      %s21 = sadd.s32 1, %s17
    $region7: #{vae_encoder_forward.1} parent=1 // loop_footer_branch
      %16 = sbr.rel target = $region3
    $region8: #{vae_encoder_forward.1} parent=1 // loop_exit
      _

</llo_original>
